<compile_context>
chip_gen: v6e
topology: v6e:2x2x1
jax: 0.10.0
libtpu: 0.0.40
codegen_flags: <defaults>
</compile_context>

<pallas_src>
import functools
import math

import jax
import jax.numpy as jnp
from jax import lax
from jax.experimental import pallas as pl
from jax.experimental.pallas import tpu as pltpu

# ----------------------------- configuration --------------------------------
VOCAB_SIZE = 50
EMB_DIM = 32
FEAT_DIM = 36          # last 4 channels are the bounding box (x1, y1, x2, y2)
HID_DIM = 32
OUT_DIM = 16
N_KERNELS = 8
NEIGHBOURHOOD = 16
K_OBJ = 36             # number of image objects (GraphLearner K=36)
BATCH = 2
MAX_QLEN = 8
COMBINED_DIM = 512     # GraphLearner combined_feature_dim


# ============================ Pallas kernels =================================

def _adjacency_kernel(x_ref, w1_ref, b1_ref, w2_ref, b2_ref, adj_ref):
    """GraphLearner: two Linear+ReLU layers (bf16 MXU, f32 accumulate), then h h^T."""
    x = x_ref[0]                                                    # (K, D) bf16
    h = jnp.dot(x, w1_ref[...], preferred_element_type=jnp.float32) + b1_ref[...]
    h = jnp.maximum(h, 0.0)
    h = jnp.dot(h.astype(jnp.bfloat16), w2_ref[...],
                preferred_element_type=jnp.float32) + b2_ref[...]
    h = jnp.maximum(h, 0.0).astype(jnp.bfloat16)                    # (K, 512)
    # adj = h @ h^T without materialising the transpose (contract axis 1 of both).
    adj = lax.dot_general(h, h, (((1,), (1,)), ((), ())),
                          preferred_element_type=jnp.float32)       # (K, K)
    adj_ref[0] = adj


def adjacency_pallas(x_bf16, w1_bf16, b1, w2_bf16, b2):
    B, K, D = x_bf16.shape
    H1 = w1_bf16.shape[1]
    return pl.pallas_call(
        _adjacency_kernel,
        out_shape=jax.ShapeDtypeStruct((B, K, K), jnp.float32),
        grid=(B,),
        in_specs=[
            pl.BlockSpec((1, K, D), lambda b: (b, 0, 0)),
            pl.BlockSpec((D, H1), lambda b: (0, 0)),
            pl.BlockSpec((1, H1), lambda b: (0, 0)),
            pl.BlockSpec((H1, H1), lambda b: (0, 0)),
            pl.BlockSpec((1, H1), lambda b: (0, 0)),
        ],
        out_specs=pl.BlockSpec((1, K, K), lambda b: (b, 0, 0)),
        compiler_params=pltpu.CompilerParams(dimension_semantics=("parallel",)),
    )(x_bf16, w1_bf16, b1.reshape(1, H1), w2_bf16, b2.reshape(1, H1))


def _graph_conv_core(featsT, rho, theta, gauss, wT, e2, s2):
    """Shared graph-convolution math for one batch element.

    featsT : (Din, K*NB)  transposed neighbourhood features (lane dim = K*NB)
    rho    : (1, K*NB)    neighbourhood rho
    theta  : (1, K*NB)    neighbourhood theta
    gauss  : (M, 4)       [mu_rho, mu_theta, 1/(eps+prec_rho^2), 1/(eps+prec_theta^2)]
    wT     : (Dout, Din)  concatenated per-kernel weights (row m*opk+o = Wc[m,:,o])
    e2     : (Dout, M)    0/1 kernel-weight expansion matrix
    s2     : (K*NB, K)    0/1 neighbourhood-sum matrix
    returns outT : (Dout, K)
    """
    # project every neighbour feature through all M kernel linears at once (MXU).
    projT = jnp.dot(wT, featsT, preferred_element_type=jnp.float32)     # (Dout, KN)

    # Gaussian kernel weights, lane-dense (M, K*NB).
    mu_rho, mu_theta = gauss[:, 0:1], gauss[:, 1:2]                      # (M, 1)
    inv_var_rho, inv_var_theta = gauss[:, 2:3], gauss[:, 3:4]            # (M, 1)
    d_rho = rho - mu_rho                                                 # (M, KN)
    w_rho = jnp.exp(-0.5 * d_rho * d_rho * inv_var_rho)
    first = jnp.abs(theta - mu_theta)
    second = jnp.abs(2.0 * math.pi - first)
    ang = jnp.minimum(first, second)
    w_theta = jnp.exp(-0.5 * ang * ang * inv_var_theta)
    w = w_rho * w_theta                                                  # (M, KN)
    # normalise across the M kernels (sublane reduce) -- epsilon keeps it finite.
    inv_sum = pl.reciprocal(jnp.sum(w, axis=0, keepdims=True) + 1e-20, approx=True)
    wn = w * inv_sum                                                     # (M, KN)

    # expand kernel weights to output columns and combine (all MXU / VPU dense).
    wexpT = jnp.dot(e2, wn, preferred_element_type=jnp.float32)          # (Dout, KN)
    outT = jnp.dot(wexpT * projT, s2, preferred_element_type=jnp.float32)  # (Dout, K)
    return outT


def _gc1_kernel(featsT_ref, rho_ref, theta_ref, gauss_ref, wT_ref, e2_ref, s2_ref,
                out_ref):
    outT = _graph_conv_core(featsT_ref[0], rho_ref[0], theta_ref[0],
                            gauss_ref[...], wT_ref[...], e2_ref[...], s2_ref[...])
    out_ref[0] = jnp.maximum(outT, 0.0)        # fused ReLU (dropout = identity in eval)


def _gc2_head_kernel(featsT_ref, rho_ref, theta_ref, qenc_ref, gauss_ref, wT_ref,
                     e2_ref, s2_ref, w1_ref, b1_ref, w2_ref, b2_ref, out_ref):
    """graph conv 2 + fused output head (relu, max over K, gate, two linears)."""
    outT = _graph_conv_core(featsT_ref[0], rho_ref[0], theta_ref[0],
                            gauss_ref[...], wT_ref[...], e2_ref[...], s2_ref[...])
    hg = jnp.maximum(outT, 0.0)                                  # (H, K)
    hmax = jnp.max(hg, axis=1, keepdims=True)                    # (H, 1) max over objects
    q = jnp.maximum(qenc_ref[0], 0.0)                            # (H, 1)
    h = q * hmax                                                 # (H, 1)
    h1 = jnp.dot(w1_ref[...], h, preferred_element_type=jnp.float32) + b1_ref[...]
    h1 = jnp.maximum(h1, 0.0)                                    # (O, 1)
    logits = jnp.dot(w2_ref[...], h1, preferred_element_type=jnp.float32) + b2_ref[...]
    out_ref[0] = logits                                          # (O, 1)


# --------------------------- graph-conv wrappers -----------------------------

def _gc_static_inputs(gc_params):
    """Pack per-layer constants for the dense graph-conv formulation."""
    wc = gc_params["conv_w"]                        # (M, Din, opk)
    M, Din, opk = wc.shape
    Dout = M * opk
    # row m*opk+o of wT is Wc[m, :, o]  (matches concat order of the reference).
    wT = jnp.transpose(wc, (0, 2, 1)).reshape(Dout, Din)
    e2 = jnp.repeat(jnp.eye(M, dtype=jnp.float32), opk, axis=0)   # (Dout, M)
    inv_var_rho = 1.0 / (1e-14 + gc_params["prec_rho"] ** 2)
    inv_var_theta = 1.0 / (1e-14 + gc_params["prec_theta"] ** 2)
    gauss = jnp.stack([gc_params["mean_rho"], gc_params["mean_theta"],
                       inv_var_rho, inv_var_theta], axis=1)       # (M, 4)
    return wT, e2, gauss, M, Dout


def _gc_data_inputs(neigh_feat, neigh_pseudo):
    """Lane-dense per-call inputs (lane dim = K*NB = 576)."""
    B, K, NB, Din = neigh_feat.shape
    KN = K * NB
    featsT = jnp.transpose(neigh_feat, (0, 3, 1, 2)).reshape(B, Din, KN)
    rho = neigh_pseudo[..., 0].reshape(B, 1, KN)
    theta = neigh_pseudo[..., 1].reshape(B, 1, KN)
    s2 = jnp.repeat(jnp.eye(K, dtype=jnp.float32), NB, axis=0)    # (KN, K)
    return featsT, rho, theta, s2, B, K, NB, Din, KN


def graph_conv1_pallas(neigh_feat, neigh_pseudo, gc_params):
    featsT, rho, theta, s2, B, K, NB, Din, KN = _gc_data_inputs(neigh_feat, neigh_pseudo)
    wT, e2, gauss, M, Dout = _gc_static_inputs(gc_params)
    outT = pl.pallas_call(
        _gc1_kernel,
        out_shape=jax.ShapeDtypeStruct((B, Dout, K), jnp.float32),
        grid=(B,),
        in_specs=[
            pl.BlockSpec((1, Din, KN), lambda b: (b, 0, 0)),
            pl.BlockSpec((1, 1, KN), lambda b: (b, 0, 0)),
            pl.BlockSpec((1, 1, KN), lambda b: (b, 0, 0)),
            pl.BlockSpec((M, 4), lambda b: (0, 0)),
            pl.BlockSpec((Dout, Din), lambda b: (0, 0)),
            pl.BlockSpec((Dout, M), lambda b: (0, 0)),
            pl.BlockSpec((KN, K), lambda b: (0, 0)),
        ],
        out_specs=pl.BlockSpec((1, Dout, K), lambda b: (b, 0, 0)),
        compiler_params=pltpu.CompilerParams(dimension_semantics=("parallel",)),
    )(featsT, rho, theta, gauss, wT, e2, s2)
    return jnp.transpose(outT, (0, 2, 1))          # (B, K, Dout), ReLU already applied


def graph_conv2_head_pallas(neigh_feat, neigh_pseudo, gc_params, qenc, w1, b1, w2, b2):
    featsT, rho, theta, s2, B, K, NB, Din, KN = _gc_data_inputs(neigh_feat, neigh_pseudo)
    wT, e2, gauss, M, Dout = _gc_static_inputs(gc_params)
    H = qenc.shape[-1]
    O = w1.shape[0]
    logits = pl.pallas_call(
        _gc2_head_kernel,
        out_shape=jax.ShapeDtypeStruct((B, O, 1), jnp.float32),
        grid=(B,),
        in_specs=[
            pl.BlockSpec((1, Din, KN), lambda b: (b, 0, 0)),
            pl.BlockSpec((1, 1, KN), lambda b: (b, 0, 0)),
            pl.BlockSpec((1, 1, KN), lambda b: (b, 0, 0)),
            pl.BlockSpec((1, H, 1), lambda b: (b, 0, 0)),
            pl.BlockSpec((M, 4), lambda b: (0, 0)),
            pl.BlockSpec((Dout, Din), lambda b: (0, 0)),
            pl.BlockSpec((Dout, M), lambda b: (0, 0)),
            pl.BlockSpec((KN, K), lambda b: (0, 0)),
            pl.BlockSpec((O, H), lambda b: (0, 0)),
            pl.BlockSpec((O, 1), lambda b: (0, 0)),
            pl.BlockSpec((O, O), lambda b: (0, 0)),
            pl.BlockSpec((O, 1), lambda b: (0, 0)),
        ],
        out_specs=pl.BlockSpec((1, O, 1), lambda b: (b, 0, 0)),
        compiler_params=pltpu.CompilerParams(dimension_semantics=("parallel",)),
    )(featsT, rho, theta, qenc[:, :, None], gauss, wT, e2, s2,
      w1, b1.reshape(-1, 1), w2, b2.reshape(-1, 1))
    return logits[:, :, 0]


# ============================ JAX glue ======================================
# TODO(synk): embedding lookup, packed-sequence GRU recurrence and top-k +
# gather neighbourhood selection are irregular / sequential ops kept in plain
# JAX (no clean Pallas path at these tiny sizes).

def compute_pseudo(bb_centre):
    """bb_centre (B,K,2) -> pseudo (B,K,K,2) with (rho, theta=atan2(dx,dy))."""
    diff = bb_centre[:, :, None, :] - bb_centre[:, None, :, :]
    rho = jnp.sqrt(diff[..., 0] ** 2 + diff[..., 1] ** 2)
    theta = jnp.arctan2(diff[..., 0], diff[..., 1])
    return jnp.stack([rho, theta], axis=-1)


def gru_final_hidden(emb, qlen, p):
    """Packed-sequence GRU: returns hidden state at step qlen[b]-1 for each b."""
    B, T, _ = emb.shape
    H = p["w_hh"].shape[1]

    def step(h, xt_t):
        xt, t = xt_t
        gi = xt @ p["w_ih"].T + p["b_ih"]
        gh = h @ p["w_hh"].T + p["b_hh"]
        i_r, i_z, i_n = jnp.split(gi, 3, axis=-1)
        h_r, h_z, h_n = jnp.split(gh, 3, axis=-1)
        r = jax.nn.sigmoid(i_r + h_r)
        z = jax.nn.sigmoid(i_z + h_z)
        n = jnp.tanh(i_n + r * h_n)
        h_new = (1.0 - z) * n + z * h
        mask = (t < qlen)[:, None]
        return jnp.where(mask, h_new, h), None

    h0 = jnp.zeros((B, H), jnp.float32)
    hT, _ = lax.scan(step, h0, (jnp.swapaxes(emb, 0, 1), jnp.arange(T)))
    return hT


def gather_neighbourhood(features, pseudo, adjacency, nb_size, weight):
    """top-k neighbourhood selection (torch.topk + gather + softmax weighting)."""
    top_vals, top_ind = lax.top_k(adjacency, nb_size)              # (B,K,NB)
    top_w = jax.nn.softmax(top_vals, axis=-1)
    neigh_feat = jax.vmap(lambda f, idx: f[idx])(features, top_ind)            # (B,K,NB,C)
    neigh_pseudo = jax.vmap(
        lambda p, idx: jnp.take_along_axis(p, idx[:, :, None], axis=1)
    )(pseudo, top_ind)                                                          # (B,K,NB,2)
    if weight:
        neigh_feat = top_w[..., None] * neigh_feat
    return neigh_feat, neigh_pseudo


def model_forward(params, question, image, qlen):
    B, K, _ = image.shape

    # bounding-box geometry -> pseudo coordinates
    bb = image[:, :, -4:]
    bb_size = bb[:, :, 2:] - bb[:, :, :2]
    bb_centre = bb[:, :, :2] + 0.5 * bb_size
    pseudo = compute_pseudo(bb_centre)                              # (B,K,K,2)

    # question encoding (embedding + GRU over packed sequence)
    emb = params["wembed"][question]                                # (B,T,E)
    qenc = gru_final_hidden(emb, qlen, params["gru"])               # (B,H)

    # adjacency (GraphLearner) -- Pallas, bf16 matmuls / f32 accumulate
    qrep = jnp.broadcast_to(qenc[:, None, :], (B, K, qenc.shape[-1]))
    x = jnp.concatenate([image, qrep], axis=-1).astype(jnp.bfloat16)   # (B,K,feat+H)
    adjacency = adjacency_pallas(
        x,
        params["adj_w1"].astype(jnp.bfloat16), params["adj_b1"],
        params["adj_w2"].astype(jnp.bfloat16), params["adj_b2"])

    # graph conv 1 (weighted neighbourhood) -- Pallas, ReLU fused in kernel
    nf1, np1 = gather_neighbourhood(image, pseudo, adjacency, NEIGHBOURHOOD, weight=True)
    hg1 = graph_conv1_pallas(nf1, np1, params["gc1"])               # (B,K,2*HID)

    # graph conv 2 (unweighted neighbourhood) + fused output head -- Pallas
    nf2, np2 = gather_neighbourhood(hg1, pseudo, adjacency, NEIGHBOURHOOD, weight=False)
    logits = graph_conv2_head_pallas(nf2, np2, params["gc2"], qenc,
                                     params["out1_w"], params["out1_b"],
                                     params["out2_w"], params["out2_b"])
    return logits, adjacency


# ============================ parameter init ================================

def _weight_norm(v):
    """nn.utils.weight_norm(dim=0) effective weight for a (out,in) matrix, g=||v||."""
    norm = jnp.sqrt(jnp.sum(v * v, axis=1, keepdims=True)) + 1e-12
    g = norm                                     # default init: g = ||v||  => W_eff = v
    return g * v / norm


def init_params(key):
    ks = jax.random.split(key, 20)
    D_in_adj = FEAT_DIM + HID_DIM
    p = {}
    p["wembed"] = 0.1 * jax.random.normal(ks[0], (VOCAB_SIZE, EMB_DIM), jnp.float32)
    p["gru"] = {
        "w_ih": 0.1 * jax.random.normal(ks[1], (3 * HID_DIM, EMB_DIM), jnp.float32),
        "w_hh": 0.1 * jax.random.normal(ks[2], (3 * HID_DIM, HID_DIM), jnp.float32),
        "b_ih": 0.1 * jax.random.normal(ks[3], (3 * HID_DIM,), jnp.float32),
        "b_hh": 0.1 * jax.random.normal(ks[4], (3 * HID_DIM,), jnp.float32),
    }
    # GraphLearner (weights stored (in, out) for the kernel)
    p["adj_w1"] = 0.05 * jax.random.normal(ks[5], (D_in_adj, COMBINED_DIM), jnp.float32)
    p["adj_b1"] = 0.05 * jax.random.normal(ks[6], (COMBINED_DIM,), jnp.float32)
    p["adj_w2"] = 0.05 * jax.random.normal(ks[7], (COMBINED_DIM, COMBINED_DIM), jnp.float32)
    p["adj_b2"] = 0.05 * jax.random.normal(ks[8], (COMBINED_DIM,), jnp.float32)

    def init_gc(key, in_dim, out_dim):
        k = jax.random.split(key, 5)
        out_per = out_dim // N_KERNELS
        return {
            "conv_w": 0.1 * jax.random.normal(k[0], (N_KERNELS, in_dim, out_per), jnp.float32),
            "mean_rho": jax.random.uniform(k[1], (N_KERNELS,), jnp.float32, 0.0, 1.0),
            "mean_theta": jax.random.uniform(k[2], (N_KERNELS,), jnp.float32, -math.pi, math.pi),
            "prec_rho": jax.random.uniform(k[3], (N_KERNELS,), jnp.float32, 0.5, 1.5),
            "prec_theta": jax.random.uniform(k[4], (N_KERNELS,), jnp.float32, 0.5, 1.5),
        }

    p["gc1"] = init_gc(ks[9], FEAT_DIM, 2 * HID_DIM)
    p["gc2"] = init_gc(ks[10], 2 * HID_DIM, HID_DIM)

    v1 = 0.1 * jax.random.normal(ks[11], (OUT_DIM, HID_DIM), jnp.float32)
    v2 = 0.1 * jax.random.normal(ks[12], (OUT_DIM, OUT_DIM), jnp.float32)
    p["out1_w"] = _weight_norm(v1)                        # (OUT_DIM, HID_DIM)  torch orient
    p["out1_b"] = 0.1 * jax.random.normal(ks[13], (OUT_DIM,), jnp.float32)
    p["out2_w"] = _weight_norm(v2)                        # (OUT_DIM, OUT_DIM)
    p["out2_b"] = 0.1 * jax.random.normal(ks[14], (OUT_DIM,), jnp.float32)
    return p


# ================================ main ======================================

if __name__ == "__main__":
    key = jax.random.PRNGKey(0)
    k_param, k_q, k_img = jax.random.split(key, 3)

    params = init_params(k_param)

    question = jax.random.randint(k_q, (BATCH, MAX_QLEN), 0, VOCAB_SIZE, jnp.int32)
    image = jax.random.uniform(k_img, (BATCH, K_OBJ, FEAT_DIM), jnp.float32)
    qlen = jnp.array([MAX_QLEN, MAX_QLEN - 3], dtype=jnp.int32)   # sorted descending

    fwd = jax.jit(functools.partial(model_forward, params))
    logits, adjacency = fwd(question, image, qlen)
    jax.block_until_ready((logits, adjacency))

    assert logits.shape == (BATCH, OUT_DIM)
    assert adjacency.shape == (BATCH, K_OBJ, K_OBJ)
    assert bool(jnp.all(jnp.isfinite(logits)))
    print("KERNEL_OK")
</pallas_src>

<mosaic_0001>
module attributes {stable_mosaic.version = 11 : i64} {
  func.func @_adjacency_kernel(%arg0: i32, %arg1: memref<1x36x68xbf16, #tpu.memory_space<vmem>>, %arg2: memref<68x512xbf16, #tpu.memory_space<vmem>>, %arg3: memref<1x512xf32, #tpu.memory_space<vmem>>, %arg4: memref<512x512xbf16, #tpu.memory_space<vmem>>, %arg5: memref<1x512xf32, #tpu.memory_space<vmem>>, %arg6: memref<1x36x36xf32, #tpu.memory_space<vmem>>) attributes {dimension_semantics = [#tpu.dimension_semantics<parallel>], iteration_bounds = array<i64: 2>, scalar_prefetch = 0 : i64, scratch_operands = 0 : i64, tpu.core_type = #tpu.core_type<tc>, window_params = [{transform_indices = @transform_0, window_bounds = array<i64: 1, 36, 68>}, {pipeline_mode = #tpu.pipeline_mode<synchronous>, transform_indices = @transform_1, window_bounds = array<i64: 68, 512>}, {pipeline_mode = #tpu.pipeline_mode<synchronous>, transform_indices = @transform_2, window_bounds = array<i64: 1, 512>}, {pipeline_mode = #tpu.pipeline_mode<synchronous>, transform_indices = @transform_3, window_bounds = array<i64: 512, 512>}, {pipeline_mode = #tpu.pipeline_mode<synchronous>, transform_indices = @transform_4, window_bounds = array<i64: 1, 512>}, {transform_indices = @transform_5, window_bounds = array<i64: 1, 36, 36>}]} {
    %c0 = arith.constant 0 : index
    %c0_0 = arith.constant 0 : index
    %c0_1 = arith.constant 0 : index
    %0 = vector.load %arg1[%c0, %c0_0, %c0_1] : memref<1x36x68xbf16, #tpu.memory_space<vmem>>, vector<1x36x68xbf16>
    %1 = vector.shape_cast %0 : vector<1x36x68xbf16> to vector<36x68xbf16>
    %c0_2 = arith.constant 0 : index
    %c0_3 = arith.constant 0 : index
    %2 = vector.load %arg2[%c0_2, %c0_3] : memref<68x512xbf16, #tpu.memory_space<vmem>>, vector<68x512xbf16>
    %cst = arith.constant dense<0.000000e+00> : vector<36x512xf32>
    %3 = tpu.matmul %1, %2, %cst {dimension_numbers = #tpu.dot_dimension_numbers<[1], [0], [0], [1], [0, 0, 1, 1], [], []>} : vector<36x68xbf16>, vector<68x512xbf16>, vector<36x512xf32> -> vector<36x512xf32>
    %c0_4 = arith.constant 0 : index
    %c0_5 = arith.constant 0 : index
    %4 = vector.load %arg3[%c0_4, %c0_5] : memref<1x512xf32, #tpu.memory_space<vmem>>, vector<1x512xf32>
    %5 = vector.broadcast %4 : vector<1x512xf32> to vector<36x512xf32>
    %6 = arith.addf %3, %5 : vector<36x512xf32>
    %cst_6 = arith.constant 0.000000e+00 : f32
    %7 = vector.broadcast %cst_6 : f32 to vector<36x512xf32>
    %8 = arith.maximumf %6, %7 : vector<36x512xf32>
    %9 = arith.truncf %8 : vector<36x512xf32> to vector<36x512xbf16>
    %c0_7 = arith.constant 0 : index
    %c0_8 = arith.constant 0 : index
    %10 = vector.load %arg4[%c0_7, %c0_8] : memref<512x512xbf16, #tpu.memory_space<vmem>>, vector<512x512xbf16>
    %cst_9 = arith.constant dense<0.000000e+00> : vector<36x512xf32>
    %11 = tpu.matmul %9, %10, %cst_9 {dimension_numbers = #tpu.dot_dimension_numbers<[1], [0], [0], [1], [0, 0, 1, 1], [], []>} : vector<36x512xbf16>, vector<512x512xbf16>, vector<36x512xf32> -> vector<36x512xf32>
    %c0_10 = arith.constant 0 : index
    %c0_11 = arith.constant 0 : index
    %12 = vector.load %arg5[%c0_10, %c0_11] : memref<1x512xf32, #tpu.memory_space<vmem>>, vector<1x512xf32>
    %13 = vector.broadcast %12 : vector<1x512xf32> to vector<36x512xf32>
    %14 = arith.addf %11, %13 : vector<36x512xf32>
    %cst_12 = arith.constant 0.000000e+00 : f32
    %15 = vector.broadcast %cst_12 : f32 to vector<36x512xf32>
    %16 = arith.maximumf %14, %15 : vector<36x512xf32>
    %17 = arith.truncf %16 : vector<36x512xf32> to vector<36x512xbf16>
    %cst_13 = arith.constant dense<0.000000e+00> : vector<36x36xf32>
    %18 = tpu.matmul %17, %17, %cst_13 {dimension_numbers = #tpu.dot_dimension_numbers<[1], [1], [0], [0], [0, 0, 1, 0], [], []>} : vector<36x512xbf16>, vector<36x512xbf16>, vector<36x36xf32> -> vector<36x36xf32>
    %c0_14 = arith.constant 0 : index
    %c0_15 = arith.constant 0 : index
    %c0_16 = arith.constant 0 : index
    %19 = vector.load %arg6[%c0_14, %c0_15, %c0_16] : memref<1x36x36xf32, #tpu.memory_space<vmem>>, vector<1x36x36xf32>
    %20 = vector.shape_cast %19 : vector<1x36x36xf32> to vector<36x36xf32>
    %21 = vector.shape_cast %18 : vector<36x36xf32> to vector<1x36x36xf32>
    tpu.vector_store %arg6[%c0_14, %c0_15, %c0_16], %21 {strides = array<i32>} : memref<1x36x36xf32, #tpu.memory_space<vmem>>, vector<1x36x36xf32>,
    return
  }
  func.func @transform_0(%arg0: i32) -> (i32, i32, i32) {
    %c0_i32 = arith.constant 0 : i32
    %c0_i32_0 = arith.constant 0 : i32
    %c0_i32_1 = arith.constant 0 : i32
    return %arg0, %c0_i32, %c0_i32_0 : i32, i32, i32
  }
  func.func @transform_1(%arg0: i32) -> (i32, i32) {
    %c0_i32 = arith.constant 0 : i32
    %c0_i32_0 = arith.constant 0 : i32
    %c0_i32_1 = arith.constant 0 : i32
    return %c0_i32, %c0_i32_0 : i32, i32
  }
  func.func @transform_2(%arg0: i32) -> (i32, i32) {
    %c0_i32 = arith.constant 0 : i32
    %c0_i32_0 = arith.constant 0 : i32
    %c0_i32_1 = arith.constant 0 : i32
    return %c0_i32, %c0_i32_0 : i32, i32
  }
  func.func @transform_3(%arg0: i32) -> (i32, i32) {
    %c0_i32 = arith.constant 0 : i32
    %c0_i32_0 = arith.constant 0 : i32
    %c0_i32_1 = arith.constant 0 : i32
    return %c0_i32, %c0_i32_0 : i32, i32
  }
  func.func @transform_4(%arg0: i32) -> (i32, i32) {
    %c0_i32 = arith.constant 0 : i32
    %c0_i32_0 = arith.constant 0 : i32
    %c0_i32_1 = arith.constant 0 : i32
    return %c0_i32, %c0_i32_0 : i32, i32
  }
  func.func @transform_5(%arg0: i32) -> (i32, i32, i32) {
    %c0_i32 = arith.constant 0 : i32
    %c0_i32_0 = arith.constant 0 : i32
    %c0_i32_1 = arith.constant 0 : i32
    return %arg0, %c0_i32, %c0_i32_0 : i32, i32, i32
  }
}

module attributes {stable_mosaic.version = 11 : i64} {
  func.func @_gc1_kernel(%arg0: i32, %arg1: memref<1x36x576xf32, #tpu.memory_space<vmem>>, %arg2: memref<1x1x576xf32, #tpu.memory_space<vmem>>, %arg3: memref<1x1x576xf32, #tpu.memory_space<vmem>>, %arg4: memref<8x4xf32, #tpu.memory_space<vmem>>, %arg5: memref<64x36xf32, #tpu.memory_space<vmem>>, %arg6: memref<64x8xf32, #tpu.memory_space<vmem>>, %arg7: memref<576x36xf32, #tpu.memory_space<vmem>>, %arg8: memref<1x64x36xf32, #tpu.memory_space<vmem>>) attributes {dimension_semantics = [#tpu.dimension_semantics<parallel>], iteration_bounds = array<i64: 2>, scalar_prefetch = 0 : i64, scratch_operands = 0 : i64, tpu.core_type = #tpu.core_type<tc>, window_params = [{transform_indices = @transform_0, window_bounds = array<i64: 1, 36, 576>}, {transform_indices = @transform_1, window_bounds = array<i64: 1, 1, 576>}, {transform_indices = @transform_2, window_bounds = array<i64: 1, 1, 576>}, {pipeline_mode = #tpu.pipeline_mode<synchronous>, transform_indices = @transform_3, window_bounds = array<i64: 8, 4>}, {pipeline_mode = #tpu.pipeline_mode<synchronous>, transform_indices = @transform_4, window_bounds = array<i64: 64, 36>}, {pipeline_mode = #tpu.pipeline_mode<synchronous>, transform_indices = @transform_5, window_bounds = array<i64: 64, 8>}, {pipeline_mode = #tpu.pipeline_mode<synchronous>, transform_indices = @transform_6, window_bounds = array<i64: 576, 36>}, {transform_indices = @transform_7, window_bounds = array<i64: 1, 64, 36>}]} {
    %c0 = arith.constant 0 : index
    %c0_0 = arith.constant 0 : index
    %c0_1 = arith.constant 0 : index
    %0 = vector.load %arg1[%c0, %c0_0, %c0_1] : memref<1x36x576xf32, #tpu.memory_space<vmem>>, vector<1x36x576xf32>
    %1 = vector.shape_cast %0 : vector<1x36x576xf32> to vector<36x576xf32>
    %c0_2 = arith.constant 0 : index
    %c0_3 = arith.constant 0 : index
    %c0_4 = arith.constant 0 : index
    %2 = vector.load %arg2[%c0_2, %c0_3, %c0_4] : memref<1x1x576xf32, #tpu.memory_space<vmem>>, vector<1x1x576xf32>
    %3 = vector.shape_cast %2 : vector<1x1x576xf32> to vector<1x576xf32>
    %c0_5 = arith.constant 0 : index
    %c0_6 = arith.constant 0 : index
    %c0_7 = arith.constant 0 : index
    %4 = vector.load %arg3[%c0_5, %c0_6, %c0_7] : memref<1x1x576xf32, #tpu.memory_space<vmem>>, vector<1x1x576xf32>
    %5 = vector.shape_cast %4 : vector<1x1x576xf32> to vector<1x576xf32>
    %c0_8 = arith.constant 0 : index
    %c0_9 = arith.constant 0 : index
    %6 = vector.load %arg4[%c0_8, %c0_9] : memref<8x4xf32, #tpu.memory_space<vmem>>, vector<8x4xf32>
    %c0_10 = arith.constant 0 : index
    %c0_11 = arith.constant 0 : index
    %7 = vector.load %arg5[%c0_10, %c0_11] : memref<64x36xf32, #tpu.memory_space<vmem>>, vector<64x36xf32>
    %c0_12 = arith.constant 0 : index
    %c0_13 = arith.constant 0 : index
    %8 = vector.load %arg6[%c0_12, %c0_13] : memref<64x8xf32, #tpu.memory_space<vmem>>, vector<64x8xf32>
    %c0_14 = arith.constant 0 : index
    %c0_15 = arith.constant 0 : index
    %9 = vector.load %arg7[%c0_14, %c0_15] : memref<576x36xf32, #tpu.memory_space<vmem>>, vector<576x36xf32>
    %cst = arith.constant dense<0.000000e+00> : vector<64x576xf32>
    %10 = tpu.matmul %7, %1, %cst {dimension_numbers = #tpu.dot_dimension_numbers<[1], [0], [0], [1], [0, 0, 1, 1], [], []>} : vector<64x36xf32>, vector<36x576xf32>, vector<64x576xf32> -> vector<64x576xf32>
    %11 = vector.extract_strided_slice %6 {offsets = [0, 0], sizes = [8, 1], strides = [1, 1]} : vector<8x4xf32> to vector<8x1xf32>
    %12 = vector.extract_strided_slice %6 {offsets = [0, 1], sizes = [8, 1], strides = [1, 1]} : vector<8x4xf32> to vector<8x1xf32>
    %13 = vector.extract_strided_slice %6 {offsets = [0, 2], sizes = [8, 1], strides = [1, 1]} : vector<8x4xf32> to vector<8x1xf32>
    %14 = vector.extract_strided_slice %6 {offsets = [0, 3], sizes = [8, 1], strides = [1, 1]} : vector<8x4xf32> to vector<8x1xf32>
    %15 = vector.broadcast %3 : vector<1x576xf32> to vector<8x576xf32>
    %16 = vector.broadcast %11 : vector<8x1xf32> to vector<8x576xf32>
    %17 = arith.subf %15, %16 : vector<8x576xf32>
    %cst_16 = arith.constant -5.000000e-01 : f32
    %18 = vector.broadcast %cst_16 : f32 to vector<8x576xf32>
    %19 = arith.mulf %18, %17 : vector<8x576xf32>
    %20 = arith.mulf %19, %17 : vector<8x576xf32>
    %21 = vector.broadcast %13 : vector<8x1xf32> to vector<8x576xf32>
    %22 = arith.mulf %20, %21 : vector<8x576xf32>
    %23 = math.exp %22 : vector<8x576xf32>
    %24 = vector.broadcast %5 : vector<1x576xf32> to vector<8x576xf32>
    %25 = vector.broadcast %12 : vector<8x1xf32> to vector<8x576xf32>
    %26 = arith.subf %24, %25 : vector<8x576xf32>
    %27 = math.absf %26 : vector<8x576xf32>
    %cst_17 = arith.constant 6.28318548 : f32
    %28 = vector.broadcast %cst_17 : f32 to vector<8x576xf32>
    %29 = arith.subf %28, %27 : vector<8x576xf32>
    %30 = math.absf %29 : vector<8x576xf32>
    %31 = arith.minimumf %27, %30 : vector<8x576xf32>
    %cst_18 = arith.constant -5.000000e-01 : f32
    %32 = vector.broadcast %cst_18 : f32 to vector<8x576xf32>
    %33 = arith.mulf %32, %31 : vector<8x576xf32>
    %34 = arith.mulf %33, %31 : vector<8x576xf32>
    %35 = vector.broadcast %14 : vector<8x1xf32> to vector<8x576xf32>
    %36 = arith.mulf %34, %35 : vector<8x576xf32>
    %37 = math.exp %36 : vector<8x576xf32>
    %38 = arith.mulf %23, %37 : vector<8x576xf32>
    %cst_19 = arith.constant dense<0.000000e+00> : vector<576xf32>
    %39 = vector.multi_reduction <add>, %38, %cst_19 [0] : vector<8x576xf32> to vector<576xf32>
    %40 = vector.shape_cast %39 : vector<576xf32> to vector<1x576xf32>
    %cst_20 = arith.constant 9.99999968E-21 : f32
    %41 = vector.broadcast %cst_20 : f32 to vector<1x576xf32>
    %42 = arith.addf %40, %41 : vector<1x576xf32>
    %43 = tpu.reciprocal %42 {approx = true} : vector<1x576xf32> -> vector<1x576xf32>
    %44 = vector.broadcast %43 : vector<1x576xf32> to vector<8x576xf32>
    %45 = arith.mulf %38, %44 : vector<8x576xf32>
    %cst_21 = arith.constant dense<0.000000e+00> : vector<64x576xf32>
    %46 = tpu.matmul %8, %45, %cst_21 {dimension_numbers = #tpu.dot_dimension_numbers<[1], [0], [0], [1], [0, 0, 1, 1], [], []>} : vector<64x8xf32>, vector<8x576xf32>, vector<64x576xf32> -> vector<64x576xf32>
    %47 = arith.mulf %46, %10 : vector<64x576xf32>
    %cst_22 = arith.constant dense<0.000000e+00> : vector<64x36xf32>
    %48 = tpu.matmul %47, %9, %cst_22 {dimension_numbers = #tpu.dot_dimension_numbers<[1], [0], [0], [1], [0, 0, 1, 1], [], []>} : vector<64x576xf32>, vector<576x36xf32>, vector<64x36xf32> -> vector<64x36xf32>
    %cst_23 = arith.constant 0.000000e+00 : f32
    %49 = vector.broadcast %cst_23 : f32 to vector<64x36xf32>
    %50 = arith.maximumf %48, %49 : vector<64x36xf32>
    %c0_24 = arith.constant 0 : index
    %c0_25 = arith.constant 0 : index
    %c0_26 = arith.constant 0 : index
    %51 = vector.load %arg8[%c0_24, %c0_25, %c0_26] : memref<1x64x36xf32, #tpu.memory_space<vmem>>, vector<1x64x36xf32>
    %52 = vector.shape_cast %51 : vector<1x64x36xf32> to vector<64x36xf32>
    %53 = vector.shape_cast %50 : vector<64x36xf32> to vector<1x64x36xf32>
    tpu.vector_store %arg8[%c0_24, %c0_25, %c0_26], %53 {strides = array<i32>} : memref<1x64x36xf32, #tpu.memory_space<vmem>>, vector<1x64x36xf32>,
    return
  }
  func.func @transform_0(%arg0: i32) -> (i32, i32, i32) {
    %c0_i32 = arith.constant 0 : i32
    %c0_i32_0 = arith.constant 0 : i32
    %c0_i32_1 = arith.constant 0 : i32
    return %arg0, %c0_i32, %c0_i32_0 : i32, i32, i32
  }
  func.func @transform_1(%arg0: i32) -> (i32, i32, i32) {
    %c0_i32 = arith.constant 0 : i32
    %c0_i32_0 = arith.constant 0 : i32
    %c0_i32_1 = arith.constant 0 : i32
    return %arg0, %c0_i32, %c0_i32_0 : i32, i32, i32
  }
  func.func @transform_2(%arg0: i32) -> (i32, i32, i32) {
    %c0_i32 = arith.constant 0 : i32
    %c0_i32_0 = arith.constant 0 : i32
    %c0_i32_1 = arith.constant 0 : i32
    return %arg0, %c0_i32, %c0_i32_0 : i32, i32, i32
  }
  func.func @transform_3(%arg0: i32) -> (i32, i32) {
    %c0_i32 = arith.constant 0 : i32
    %c0_i32_0 = arith.constant 0 : i32
    %c0_i32_1 = arith.constant 0 : i32
    return %c0_i32, %c0_i32_0 : i32, i32
  }
  func.func @transform_4(%arg0: i32) -> (i32, i32) {
    %c0_i32 = arith.constant 0 : i32
    %c0_i32_0 = arith.constant 0 : i32
    %c0_i32_1 = arith.constant 0 : i32
    return %c0_i32, %c0_i32_0 : i32, i32
  }
  func.func @transform_5(%arg0: i32) -> (i32, i32) {
    %c0_i32 = arith.constant 0 : i32
    %c0_i32_0 = arith.constant 0 : i32
    %c0_i32_1 = arith.constant 0 : i32
    return %c0_i32, %c0_i32_0 : i32, i32
  }
  func.func @transform_6(%arg0: i32) -> (i32, i32) {
    %c0_i32 = arith.constant 0 : i32
    %c0_i32_0 = arith.constant 0 : i32
    %c0_i32_1 = arith.constant 0 : i32
    return %c0_i32, %c0_i32_0 : i32, i32
  }
  func.func @transform_7(%arg0: i32) -> (i32, i32, i32) {
    %c0_i32 = arith.constant 0 : i32
    %c0_i32_0 = arith.constant 0 : i32
    %c0_i32_1 = arith.constant 0 : i32
    return %arg0, %c0_i32, %c0_i32_0 : i32, i32, i32
  }
}

module attributes {stable_mosaic.version = 11 : i64} {
  func.func @_gc2_head_kernel(%arg0: i32, %arg1: memref<1x64x576xf32, #tpu.memory_space<vmem>>, %arg2: memref<1x1x576xf32, #tpu.memory_space<vmem>>, %arg3: memref<1x1x576xf32, #tpu.memory_space<vmem>>, %arg4: memref<1x32x1xf32, #tpu.memory_space<vmem>>, %arg5: memref<8x4xf32, #tpu.memory_space<vmem>>, %arg6: memref<32x64xf32, #tpu.memory_space<vmem>>, %arg7: memref<32x8xf32, #tpu.memory_space<vmem>>, %arg8: memref<576x36xf32, #tpu.memory_space<vmem>>, %arg9: memref<16x32xf32, #tpu.memory_space<vmem>>, %arg10: memref<16x1xf32, #tpu.memory_space<vmem>>, %arg11: memref<16x16xf32, #tpu.memory_space<vmem>>, %arg12: memref<16x1xf32, #tpu.memory_space<vmem>>, %arg13: memref<1x16x1xf32, #tpu.memory_space<vmem>>) attributes {dimension_semantics = [#tpu.dimension_semantics<parallel>], iteration_bounds = array<i64: 2>, scalar_prefetch = 0 : i64, scratch_operands = 0 : i64, tpu.core_type = #tpu.core_type<tc>, window_params = [{transform_indices = @transform_0, window_bounds = array<i64: 1, 64, 576>}, {transform_indices = @transform_1, window_bounds = array<i64: 1, 1, 576>}, {transform_indices = @transform_2, window_bounds = array<i64: 1, 1, 576>}, {transform_indices = @transform_3, window_bounds = array<i64: 1, 32, 1>}, {pipeline_mode = #tpu.pipeline_mode<synchronous>, transform_indices = @transform_4, window_bounds = array<i64: 8, 4>}, {pipeline_mode = #tpu.pipeline_mode<synchronous>, transform_indices = @transform_5, window_bounds = array<i64: 32, 64>}, {pipeline_mode = #tpu.pipeline_mode<synchronous>, transform_indices = @transform_6, window_bounds = array<i64: 32, 8>}, {pipeline_mode = #tpu.pipeline_mode<synchronous>, transform_indices = @transform_7, window_bounds = array<i64: 576, 36>}, {pipeline_mode = #tpu.pipeline_mode<synchronous>, transform_indices = @transform_8, window_bounds = array<i64: 16, 32>}, {pipeline_mode = #tpu.pipeline_mode<synchronous>, transform_indices = @transform_9, window_bounds = array<i64: 16, 1>}, {pipeline_mode = #tpu.pipeline_mode<synchronous>, transform_indices = @transform_10, window_bounds = array<i64: 16, 16>}, {pipeline_mode = #tpu.pipeline_mode<synchronous>, transform_indices = @transform_11, window_bounds = array<i64: 16, 1>}, {transform_indices = @transform_12, window_bounds = array<i64: 1, 16, 1>}]} {
    %c0 = arith.constant 0 : index
    %c0_0 = arith.constant 0 : index
    %c0_1 = arith.constant 0 : index
    %0 = vector.load %arg1[%c0, %c0_0, %c0_1] : memref<1x64x576xf32, #tpu.memory_space<vmem>>, vector<1x64x576xf32>
    %1 = vector.shape_cast %0 : vector<1x64x576xf32> to vector<64x576xf32>
    %c0_2 = arith.constant 0 : index
    %c0_3 = arith.constant 0 : index
    %c0_4 = arith.constant 0 : index
    %2 = vector.load %arg2[%c0_2, %c0_3, %c0_4] : memref<1x1x576xf32, #tpu.memory_space<vmem>>, vector<1x1x576xf32>
    %3 = vector.shape_cast %2 : vector<1x1x576xf32> to vector<1x576xf32>
    %c0_5 = arith.constant 0 : index
    %c0_6 = arith.constant 0 : index
    %c0_7 = arith.constant 0 : index
    %4 = vector.load %arg3[%c0_5, %c0_6, %c0_7] : memref<1x1x576xf32, #tpu.memory_space<vmem>>, vector<1x1x576xf32>
    %5 = vector.shape_cast %4 : vector<1x1x576xf32> to vector<1x576xf32>
    %c0_8 = arith.constant 0 : index
    %c0_9 = arith.constant 0 : index
    %6 = vector.load %arg5[%c0_8, %c0_9] : memref<8x4xf32, #tpu.memory_space<vmem>>, vector<8x4xf32>
    %c0_10 = arith.constant 0 : index
    %c0_11 = arith.constant 0 : index
    %7 = vector.load %arg6[%c0_10, %c0_11] : memref<32x64xf32, #tpu.memory_space<vmem>>, vector<32x64xf32>
    %c0_12 = arith.constant 0 : index
    %c0_13 = arith.constant 0 : index
    %8 = vector.load %arg7[%c0_12, %c0_13] : memref<32x8xf32, #tpu.memory_space<vmem>>, vector<32x8xf32>
    %c0_14 = arith.constant 0 : index
    %c0_15 = arith.constant 0 : index
    %9 = vector.load %arg8[%c0_14, %c0_15] : memref<576x36xf32, #tpu.memory_space<vmem>>, vector<576x36xf32>
    %cst = arith.constant dense<0.000000e+00> : vector<32x576xf32>
    %10 = tpu.matmul %7, %1, %cst {dimension_numbers = #tpu.dot_dimension_numbers<[1], [0], [0], [1], [0, 0, 1, 1], [], []>} : vector<32x64xf32>, vector<64x576xf32>, vector<32x576xf32> -> vector<32x576xf32>
    %11 = vector.extract_strided_slice %6 {offsets = [0, 0], sizes = [8, 1], strides = [1, 1]} : vector<8x4xf32> to vector<8x1xf32>
    %12 = vector.extract_strided_slice %6 {offsets = [0, 1], sizes = [8, 1], strides = [1, 1]} : vector<8x4xf32> to vector<8x1xf32>
    %13 = vector.extract_strided_slice %6 {offsets = [0, 2], sizes = [8, 1], strides = [1, 1]} : vector<8x4xf32> to vector<8x1xf32>
    %14 = vector.extract_strided_slice %6 {offsets = [0, 3], sizes = [8, 1], strides = [1, 1]} : vector<8x4xf32> to vector<8x1xf32>
    %15 = vector.broadcast %3 : vector<1x576xf32> to vector<8x576xf32>
    %16 = vector.broadcast %11 : vector<8x1xf32> to vector<8x576xf32>
    %17 = arith.subf %15, %16 : vector<8x576xf32>
    %cst_16 = arith.constant -5.000000e-01 : f32
    %18 = vector.broadcast %cst_16 : f32 to vector<8x576xf32>
    %19 = arith.mulf %18, %17 : vector<8x576xf32>
    %20 = arith.mulf %19, %17 : vector<8x576xf32>
    %21 = vector.broadcast %13 : vector<8x1xf32> to vector<8x576xf32>
    %22 = arith.mulf %20, %21 : vector<8x576xf32>
    %23 = math.exp %22 : vector<8x576xf32>
    %24 = vector.broadcast %5 : vector<1x576xf32> to vector<8x576xf32>
    %25 = vector.broadcast %12 : vector<8x1xf32> to vector<8x576xf32>
    %26 = arith.subf %24, %25 : vector<8x576xf32>
    %27 = math.absf %26 : vector<8x576xf32>
    %cst_17 = arith.constant 6.28318548 : f32
    %28 = vector.broadcast %cst_17 : f32 to vector<8x576xf32>
    %29 = arith.subf %28, %27 : vector<8x576xf32>
    %30 = math.absf %29 : vector<8x576xf32>
    %31 = arith.minimumf %27, %30 : vector<8x576xf32>
    %cst_18 = arith.constant -5.000000e-01 : f32
    %32 = vector.broadcast %cst_18 : f32 to vector<8x576xf32>
    %33 = arith.mulf %32, %31 : vector<8x576xf32>
    %34 = arith.mulf %33, %31 : vector<8x576xf32>
    %35 = vector.broadcast %14 : vector<8x1xf32> to vector<8x576xf32>
    %36 = arith.mulf %34, %35 : vector<8x576xf32>
    %37 = math.exp %36 : vector<8x576xf32>
    %38 = arith.mulf %23, %37 : vector<8x576xf32>
    %cst_19 = arith.constant dense<0.000000e+00> : vector<576xf32>
    %39 = vector.multi_reduction <add>, %38, %cst_19 [0] : vector<8x576xf32> to vector<576xf32>
    %40 = vector.shape_cast %39 : vector<576xf32> to vector<1x576xf32>
    %cst_20 = arith.constant 9.99999968E-21 : f32
    %41 = vector.broadcast %cst_20 : f32 to vector<1x576xf32>
    %42 = arith.addf %40, %41 : vector<1x576xf32>
    %43 = tpu.reciprocal %42 {approx = true} : vector<1x576xf32> -> vector<1x576xf32>
    %44 = vector.broadcast %43 : vector<1x576xf32> to vector<8x576xf32>
    %45 = arith.mulf %38, %44 : vector<8x576xf32>
    %cst_21 = arith.constant dense<0.000000e+00> : vector<32x576xf32>
    %46 = tpu.matmul %8, %45, %cst_21 {dimension_numbers = #tpu.dot_dimension_numbers<[1], [0], [0], [1], [0, 0, 1, 1], [], []>} : vector<32x8xf32>, vector<8x576xf32>, vector<32x576xf32> -> vector<32x576xf32>
    %47 = arith.mulf %46, %10 : vector<32x576xf32>
    %cst_22 = arith.constant dense<0.000000e+00> : vector<32x36xf32>
    %48 = tpu.matmul %47, %9, %cst_22 {dimension_numbers = #tpu.dot_dimension_numbers<[1], [0], [0], [1], [0, 0, 1, 1], [], []>} : vector<32x576xf32>, vector<576x36xf32>, vector<32x36xf32> -> vector<32x36xf32>
    %cst_23 = arith.constant 0.000000e+00 : f32
    %49 = vector.broadcast %cst_23 : f32 to vector<32x36xf32>
    %50 = arith.maximumf %48, %49 : vector<32x36xf32>
    %cst_24 = arith.constant dense<0xFF800000> : vector<32xf32>
    %51 = vector.multi_reduction <maximumf>, %50, %cst_24 [1] : vector<32x36xf32> to vector<32xf32>
    %52 = vector.shape_cast %51 : vector<32xf32> to vector<32x1xf32>
    %c0_25 = arith.constant 0 : index
    %c0_26 = arith.constant 0 : index
    %c0_27 = arith.constant 0 : index
    %53 = vector.load %arg4[%c0_25, %c0_26, %c0_27] : memref<1x32x1xf32, #tpu.memory_space<vmem>>, vector<1x32x1xf32>
    %54 = vector.shape_cast %53 : vector<1x32x1xf32> to vector<32x1xf32>
    %cst_28 = arith.constant 0.000000e+00 : f32
    %55 = vector.broadcast %cst_28 : f32 to vector<32x1xf32>
    %56 = arith.maximumf %54, %55 : vector<32x1xf32>
    %57 = arith.mulf %56, %52 : vector<32x1xf32>
    %c0_29 = arith.constant 0 : index
    %c0_30 = arith.constant 0 : index
    %58 = vector.load %arg9[%c0_29, %c0_30] : memref<16x32xf32, #tpu.memory_space<vmem>>, vector<16x32xf32>
    %cst_31 = arith.constant dense<0.000000e+00> : vector<16x1xf32>
    %59 = tpu.matmul %58, %57, %cst_31 {dimension_numbers = #tpu.dot_dimension_numbers<[1], [0], [0], [1], [0, 0, 1, 1], [], []>} : vector<16x32xf32>, vector<32x1xf32>, vector<16x1xf32> -> vector<16x1xf32>
    %c0_32 = arith.constant 0 : index
    %c0_33 = arith.constant 0 : index
    %60 = vector.load %arg10[%c0_32, %c0_33] : memref<16x1xf32, #tpu.memory_space<vmem>>, vector<16x1xf32>
    %61 = arith.addf %59, %60 : vector<16x1xf32>
    %cst_34 = arith.constant 0.000000e+00 : f32
    %62 = vector.broadcast %cst_34 : f32 to vector<16x1xf32>
    %63 = arith.maximumf %61, %62 : vector<16x1xf32>
    %c0_35 = arith.constant 0 : index
    %c0_36 = arith.constant 0 : index
    %64 = vector.load %arg11[%c0_35, %c0_36] : memref<16x16xf32, #tpu.memory_space<vmem>>, vector<16x16xf32>
    %cst_37 = arith.constant dense<0.000000e+00> : vector<16x1xf32>
    %65 = tpu.matmul %64, %63, %cst_37 {dimension_numbers = #tpu.dot_dimension_numbers<[1], [0], [0], [1], [0, 0, 1, 1], [], []>} : vector<16x16xf32>, vector<16x1xf32>, vector<16x1xf32> -> vector<16x1xf32>
    %c0_38 = arith.constant 0 : index
    %c0_39 = arith.constant 0 : index
    %66 = vector.load %arg12[%c0_38, %c0_39] : memref<16x1xf32, #tpu.memory_space<vmem>>, vector<16x1xf32>
    %67 = arith.addf %65, %66 : vector<16x1xf32>
    %c0_40 = arith.constant 0 : index
    %c0_41 = arith.constant 0 : index
    %c0_42 = arith.constant 0 : index
    %68 = vector.load %arg13[%c0_40, %c0_41, %c0_42] : memref<1x16x1xf32, #tpu.memory_space<vmem>>, vector<1x16x1xf32>
    %69 = vector.shape_cast %68 : vector<1x16x1xf32> to vector<16x1xf32>
    %70 = vector.shape_cast %67 : vector<16x1xf32> to vector<1x16x1xf32>
    tpu.vector_store %arg13[%c0_40, %c0_41, %c0_42], %70 {strides = array<i32>} : memref<1x16x1xf32, #tpu.memory_space<vmem>>, vector<1x16x1xf32>,
    return
  }
  func.func @transform_0(%arg0: i32) -> (i32, i32, i32) {
    %c0_i32 = arith.constant 0 : i32
    %c0_i32_0 = arith.constant 0 : i32
    %c0_i32_1 = arith.constant 0 : i32
    return %arg0, %c0_i32, %c0_i32_0 : i32, i32, i32
  }
  func.func @transform_1(%arg0: i32) -> (i32, i32, i32) {
    %c0_i32 = arith.constant 0 : i32
    %c0_i32_0 = arith.constant 0 : i32
    %c0_i32_1 = arith.constant 0 : i32
    return %arg0, %c0_i32, %c0_i32_0 : i32, i32, i32
  }
  func.func @transform_2(%arg0: i32) -> (i32, i32, i32) {
    %c0_i32 = arith.constant 0 : i32
    %c0_i32_0 = arith.constant 0 : i32
    %c0_i32_1 = arith.constant 0 : i32
    return %arg0, %c0_i32, %c0_i32_0 : i32, i32, i32
  }
  func.func @transform_3(%arg0: i32) -> (i32, i32, i32) {
    %c0_i32 = arith.constant 0 : i32
    %c0_i32_0 = arith.constant 0 : i32
    %c0_i32_1 = arith.constant 0 : i32
    return %arg0, %c0_i32, %c0_i32_0 : i32, i32, i32
  }
  func.func @transform_4(%arg0: i32) -> (i32, i32) {
    %c0_i32 = arith.constant 0 : i32
    %c0_i32_0 = arith.constant 0 : i32
    %c0_i32_1 = arith.constant 0 : i32
    return %c0_i32, %c0_i32_0 : i32, i32
  }
  func.func @transform_5(%arg0: i32) -> (i32, i32) {
    %c0_i32 = arith.constant 0 : i32
    %c0_i32_0 = arith.constant 0 : i32
    %c0_i32_1 = arith.constant 0 : i32
    return %c0_i32, %c0_i32_0 : i32, i32
  }
  func.func @transform_6(%arg0: i32) -> (i32, i32) {
    %c0_i32 = arith.constant 0 : i32
    %c0_i32_0 = arith.constant 0 : i32
    %c0_i32_1 = arith.constant 0 : i32
    return %c0_i32, %c0_i32_0 : i32, i32
  }
  func.func @transform_7(%arg0: i32) -> (i32, i32) {
    %c0_i32 = arith.constant 0 : i32
    %c0_i32_0 = arith.constant 0 : i32
    %c0_i32_1 = arith.constant 0 : i32
    return %c0_i32, %c0_i32_0 : i32, i32
  }
  func.func @transform_8(%arg0: i32) -> (i32, i32) {
    %c0_i32 = arith.constant 0 : i32
    %c0_i32_0 = arith.constant 0 : i32
    %c0_i32_1 = arith.constant 0 : i32
    return %c0_i32, %c0_i32_0 : i32, i32
  }
  func.func @transform_9(%arg0: i32) -> (i32, i32) {
    %c0_i32 = arith.constant 0 : i32
    %c0_i32_0 = arith.constant 0 : i32
    %c0_i32_1 = arith.constant 0 : i32
    return %c0_i32, %c0_i32_0 : i32, i32
  }
  func.func @transform_10(%arg0: i32) -> (i32, i32) {
    %c0_i32 = arith.constant 0 : i32
    %c0_i32_0 = arith.constant 0 : i32
    %c0_i32_1 = arith.constant 0 : i32
    return %c0_i32, %c0_i32_0 : i32, i32
  }
  func.func @transform_11(%arg0: i32) -> (i32, i32) {
    %c0_i32 = arith.constant 0 : i32
    %c0_i32_0 = arith.constant 0 : i32
    %c0_i32_1 = arith.constant 0 : i32
    return %c0_i32, %c0_i32_0 : i32, i32
  }
  func.func @transform_12(%arg0: i32) -> (i32, i32, i32) {
    %c0_i32 = arith.constant 0 : i32
    %c0_i32_0 = arith.constant 0 : i32
    %c0_i32_1 = arith.constant 0 : i32
    return %arg0, %c0_i32, %c0_i32_0 : i32, i32, i32
  }
}

</mosaic_0001>

<llo_original>
// kernel: custom-call.6
$region0: #{custom-call.6}
  %s0 = inlined_call_operand.vmem [shape: f32[2,32], index: 0, kind: output, shape index: {}]

// kernel: squeeze.2
$region0: #{squeeze.2}
  %s0 = inlined_call_operand.vmem [shape: f32[2,36,16,1], index: 0, kind: input, shape index: {}]
  %s1 = inlined_call_operand.vmem [shape: f32[2,1,576], index: 1, kind: output, shape index: {}]
  $region1: #{squeeze.2} parent=0
    #allocation0 [shape = 'u8[40960]{0}', space=vmem, size = 0xa000, scoped, tag = 'scoped mem for output reshape']
    %v2 = vld [vmem:[%s0] ss:$8 sm:$0xf]
    %v3 = vld [vmem:[%s0] ss:$8 sm:$0xf0]
    %vm4 = vcmask 1047556
    %v5 = vsel %vm4, %v3, %v2
    %vm6 = vcmask 130048
    %7 = vst.msk [vmem:[#allocation0] ss:$8 sm:$0xf] %vm6, %v5
    %8 = vst.msk [vmem:[#allocation0] ss:$8 sm:$0xf0] %vm6, %v5
    %s9 = scalar_lea.vmem %s0, 64
    %s10 = smov 3
    %v11 = vld [vmem:[%s9] ss:$8 sm:%s10]
    %vm12 = vcmask 130048
    %s13 = scalar_lea.vmem [#allocation0], 64
    %14 = vst.msk [vmem:[%s13] ss:$8 sm:$0x3] %vm12, %v11
    %s15 = scalar_lea.vmem %s0, 7
    %v16 = vld [vmem:[%s15] ss:$8 sm:$0xf]
    %s17 = scalar_lea.vmem %s0, 167
    %s18 = smov 48
    %v19 = vld [vmem:[%s17] ss:$-24 sm:%s18]
    %vm20 = vcmask 1045508
    %v21 = vsel %vm20, %v19, %v16
    %s22 = scalar_lea.vmem %s0, 7
    %s23 = smov 192
    %v24 = vld [vmem:[%s22] ss:$8 sm:%s23]
    %vm25 = vcmask 1047558
    %v26 = vsel %vm25, %v24, %v21
    %27 = vrot.lane.b32.xlu0 %v26, 112
    %v28 = vpop.permute.xlu0 %27
    %vm29 = vcmask 1048448
    %30 = vst.msk [vmem:[#allocation0] ss:$8 sm:$0xf] %vm29, %v28
    %s31 = scalar_lea.vmem [#allocation0], 160
    %32 = vst.msk [vmem:[%s31] ss:$-24 sm:$0x30] %vm29, %v28
    %33 = vst.msk [vmem:[#allocation0] ss:$8 sm:$0xc0] %vm29, %v28
    %s34 = scalar_lea.vmem %s0, 6
    %v35 = vld [vmem:[%s34] ss:$8 sm:$0xf]
    %s36 = scalar_lea.vmem %s0, 166
    %s37 = smov 48
    %v38 = vld [vmem:[%s36] ss:$-24 sm:%s37]
    %vm39 = vcmask 1045508
    %v40 = vsel %vm39, %v38, %v35
    %s41 = scalar_lea.vmem %s0, 6
    %s42 = smov 192
    %v43 = vld [vmem:[%s41] ss:$8 sm:%s42]
    %vm44 = vcmask 1047558
    %v45 = vsel %vm44, %v43, %v40
    %46 = vrot.lane.b32.xlu0 %v45, 96
    %v47 = vpop.permute.xlu0 %46
    %vm48 = vcmask 917248
    %49 = vst.msk [vmem:[#allocation0] ss:$8 sm:$0xf] %vm48, %v47
    %s50 = scalar_lea.vmem [#allocation0], 160
    %51 = vst.msk [vmem:[%s50] ss:$-24 sm:$0x30] %vm48, %v47
    %52 = vst.msk [vmem:[#allocation0] ss:$8 sm:$0xc0] %vm48, %v47
    %s53 = scalar_lea.vmem %s0, 5
    %v54 = vld [vmem:[%s53] ss:$8 sm:$0xf]
    %s55 = scalar_lea.vmem %s0, 165
    %s56 = smov 48
    %v57 = vld [vmem:[%s55] ss:$-24 sm:%s56]
    %vm58 = vcmask 1045508
    %v59 = vsel %vm58, %v57, %v54
    %s60 = scalar_lea.vmem %s0, 5
    %s61 = smov 192
    %v62 = vld [vmem:[%s60] ss:$8 sm:%s61]
    %vm63 = vcmask 1047558
    %v64 = vsel %vm63, %v62, %v59
    %65 = vrot.lane.b32.xlu0 %v64, 80
    %v66 = vpop.permute.xlu0 %65
    %vm67 = vcmask 786048
    %68 = vst.msk [vmem:[#allocation0] ss:$8 sm:$0xf] %vm67, %v66
    %s69 = scalar_lea.vmem [#allocation0], 160
    %70 = vst.msk [vmem:[%s69] ss:$-24 sm:$0x30] %vm67, %v66
    %71 = vst.msk [vmem:[#allocation0] ss:$8 sm:$0xc0] %vm67, %v66
    %s72 = scalar_lea.vmem %s0, 4
    %v73 = vld [vmem:[%s72] ss:$8 sm:$0xf]
    %s74 = scalar_lea.vmem %s0, 164
    %s75 = smov 48
    %v76 = vld [vmem:[%s74] ss:$-24 sm:%s75]
    %vm77 = vcmask 1045508
    %v78 = vsel %vm77, %v76, %v73
    %s79 = scalar_lea.vmem %s0, 4
    %s80 = smov 192
    %v81 = vld [vmem:[%s79] ss:$8 sm:%s80]
    %vm82 = vcmask 1047558
    %v83 = vsel %vm82, %v81, %v78
    %84 = vrot.lane.b32.xlu0 %v83, 64
    %v85 = vpop.permute.xlu0 %84
    %vm86 = vcmask 654848
    %87 = vst.msk [vmem:[#allocation0] ss:$8 sm:$0xf] %vm86, %v85
    %s88 = scalar_lea.vmem [#allocation0], 160
    %89 = vst.msk [vmem:[%s88] ss:$-24 sm:$0x30] %vm86, %v85
    %90 = vst.msk [vmem:[#allocation0] ss:$8 sm:$0xc0] %vm86, %v85
    %s91 = scalar_lea.vmem %s0, 3
    %v92 = vld [vmem:[%s91] ss:$8 sm:$0xf]
    %s93 = scalar_lea.vmem %s0, 3
    %v94 = vld [vmem:[%s93] ss:$8 sm:$0xf0]
    %vm95 = vcmask 1047556
    %v96 = vsel %vm95, %v94, %v92
    %97 = vrot.lane.b32.xlu0 %v96, 48
    %v98 = vpop.permute.xlu0 %97
    %vm99 = vcmask 523648
    %100 = vst.msk [vmem:[#allocation0] ss:$8 sm:$0xf] %vm99, %v98
    %101 = vst.msk [vmem:[#allocation0] ss:$8 sm:$0xf0] %vm99, %v98
    %s102 = scalar_lea.vmem %s0, 67
    %s103 = smov 3
    %v104 = vld [vmem:[%s102] ss:$8 sm:%s103]
    %105 = vrot.lane.b32.xlu0 %v104, 48
    %v106 = vpop.permute.xlu0 %105
    %vm107 = vcmask 523648
    %s108 = scalar_lea.vmem [#allocation0], 64
    %109 = vst.msk [vmem:[%s108] ss:$8 sm:$0x3] %vm107, %v106
    %s110 = scalar_lea.vmem %s0, 2
    %v111 = vld [vmem:[%s110] ss:$8 sm:$0xf]
    %s112 = scalar_lea.vmem %s0, 2
    %v113 = vld [vmem:[%s112] ss:$8 sm:$0xf0]
    %vm114 = vcmask 1047556
    %v115 = vsel %vm114, %v113, %v111
    %116 = vrot.lane.b32.xlu0 %v115, 32
    %v117 = vpop.permute.xlu0 %116
    %vm118 = vcmask 392448
    %119 = vst.msk [vmem:[#allocation0] ss:$8 sm:$0xf] %vm118, %v117
    %120 = vst.msk [vmem:[#allocation0] ss:$8 sm:$0xf0] %vm118, %v117
    %s121 = scalar_lea.vmem %s0, 66
    %s122 = smov 3
    %v123 = vld [vmem:[%s121] ss:$8 sm:%s122]
    %124 = vrot.lane.b32.xlu0 %v123, 32
    %v125 = vpop.permute.xlu0 %124
    %vm126 = vcmask 392448
    %s127 = scalar_lea.vmem [#allocation0], 64
    %128 = vst.msk [vmem:[%s127] ss:$8 sm:$0x3] %vm126, %v125
    %s129 = scalar_lea.vmem %s0, 1
    %v130 = vld [vmem:[%s129] ss:$8 sm:$0xf]
    %s131 = scalar_lea.vmem %s0, 1
    %v132 = vld [vmem:[%s131] ss:$8 sm:$0xf0]
    %vm133 = vcmask 1047556
    %v134 = vsel %vm133, %v132, %v130
    %135 = vrot.lane.b32.xlu0 %v134, 16
    %v136 = vpop.permute.xlu0 %135
    %vm137 = vcmask 261248
    %138 = vst.msk [vmem:[#allocation0] ss:$8 sm:$0xf] %vm137, %v136
    %139 = vst.msk [vmem:[#allocation0] ss:$8 sm:$0xf0] %vm137, %v136
    %s140 = scalar_lea.vmem %s0, 65
    %s141 = smov 3
    %v142 = vld [vmem:[%s140] ss:$8 sm:%s141]
    %143 = vrot.lane.b32.xlu0 %v142, 16
    %v144 = vpop.permute.xlu0 %143
    %vm145 = vcmask 261248
    %s146 = scalar_lea.vmem [#allocation0], 64
    %147 = vst.msk [vmem:[%s146] ss:$8 sm:$0x3] %vm145, %v144
    %s149 = sshll.u32 1, 1
    %s150 = ssub.s32 %s149, 1
    %v152 = vld [vmem:[#allocation0] sm:%s150]
    %s153 = sshll.u32 1, 1
    %s154 = ssub.s32 %s153, 1
    %155 = vst [vmem:[%s1] sm:%s154] %v152
    %s156 = scalar_lea.vmem [#allocation0], 8
    %v157 = vld [vmem:[%s156] sm:%s150]
    %s158 = sshll.u32 1, 1
    %s159 = ssub.s32 %s158, 1
    %s160 = scalar_lea.vmem %s1, 1
    %161 = vst [vmem:[%s160] sm:%s159] %v157
    %s162 = scalar_lea.vmem [#allocation0], 16
    %v163 = vld [vmem:[%s162] sm:%s150]
    %s164 = sshll.u32 1, 1
    %s165 = ssub.s32 %s164, 1
    %s166 = smul.addr 1, 2
    %s167 = scalar_lea.vmem %s1, %s166
    %168 = vst [vmem:[%s167] sm:%s165] %v163
    %s169 = scalar_lea.vmem [#allocation0], 24
    %v170 = vld [vmem:[%s169] sm:%s150]
    %s171 = sshll.u32 1, 1
    %s172 = ssub.s32 %s171, 1
    %s173 = smul.addr 1, 3
    %s174 = scalar_lea.vmem %s1, %s173
    %175 = vst [vmem:[%s174] sm:%s172] %v170
    %s176 = scalar_lea.vmem [#allocation0], 32
    %v177 = vld [vmem:[%s176] sm:%s150]
    %s178 = sshll.u32 1, 1
    %s179 = ssub.s32 %s178, 1
    %s180 = smul.addr 1, 4
    %s181 = scalar_lea.vmem %s1, %s180
    %182 = vst [vmem:[%s181] sm:%s179] %v177
    %s183 = scalar_lea.vmem [#allocation0], 40
    %v184 = vld [vmem:[%s183] sm:%s150]
    %s185 = sshll.u32 1, 1
    %s186 = ssub.s32 %s185, 1
    %s187 = smul.addr 1, 5
    %s188 = scalar_lea.vmem %s1, %s187
    %189 = vst [vmem:[%s188] sm:%s186] %v184
    %s190 = scalar_lea.vmem [#allocation0], 48
    %v191 = vld [vmem:[%s190] sm:%s150]
    %s192 = sshll.u32 1, 1
    %s193 = ssub.s32 %s192, 1
    %s194 = smul.addr 1, 6
    %s195 = scalar_lea.vmem %s1, %s194
    %196 = vst [vmem:[%s195] sm:%s193] %v191
    %s197 = scalar_lea.vmem [#allocation0], 56
    %v198 = vld [vmem:[%s197] sm:%s150]
    %s199 = sshll.u32 1, 1
    %s200 = ssub.s32 %s199, 1
    %s201 = smul.addr 1, 7
    %s202 = scalar_lea.vmem %s1, %s201
    %203 = vst [vmem:[%s202] sm:%s200] %v198
    %s204 = scalar_lea.vmem [#allocation0], 64
    %v205 = vld [vmem:[%s204] sm:%s150]
    %s206 = sshll.u32 1, 1
    %s207 = ssub.s32 %s206, 1
    %s208 = smul.addr 1, 8
    %s209 = scalar_lea.vmem %s1, %s208
    %210 = vst [vmem:[%s209] sm:%s207] %v205
    %s211 = scalar_lea.vmem [#allocation0], 72
    %v212 = vld [vmem:[%s211] sm:%s150]
    %s213 = sshll.u32 1, 1
    %s214 = ssub.s32 %s213, 1
    %s215 = smul.addr 1, 9
    %s216 = scalar_lea.vmem %s1, %s215
    %217 = vst [vmem:[%s216] sm:%s214] %v212

// kernel: model_forward.3
$region0: #{model_forward.3}
  #allocation0 [shape = 'u32[]', space=smem, size = 0x4, offset = 0x4, fixed_abs, tag = 'smem constant byte address 0x4 - core index']
  #allocation1 [shape = 'u32[144,128]{1,0:T(1,128)}', space=vmem, size = 0x12000, scoped, tag = 'internal scratch']
  %s0 = inlined_call_operand.vmem [shape: bf16[2,36,68], index: 0, kind: input, shape index: {}]
  %s1 = inlined_call_operand.vmem [shape: bf16[68,512], index: 1, kind: input, shape index: {}]
  %s2 = inlined_call_operand.vmem [shape: f32[1,512], index: 2, kind: input, shape index: {}]
  %s3 = inlined_call_operand.vmem [shape: bf16[512,512], index: 3, kind: input, shape index: {}]
  %s4 = inlined_call_operand.vmem [shape: f32[1,512], index: 4, kind: input, shape index: {}]
  %s5 = inlined_call_operand.vmem [shape: f32[2,36,36], index: 5, kind: output, shape index: {}]
  %s6 = sld [smem:[#allocation0]]
  $region53: #{model_forward.3} parent=0
    _
  %s8 = ssub.s32 1, %s6
  %s9 = scalar_select 0, %s8, %s6
  loop: start=0, step=1, limit=4
  $region2: #{model_forward.3} parent=0 // loop_pre_header
    _
  $region3: #{model_forward.3} parent=0 // loop_header
    %s11 = sphi 0, %s15
    %p12 = scmp.ge.s32.totalorder %s11, 4
    %s21 = sphi 0, %s23
    %s24 = sphi 0, %s21
    %s25 = sphi 0, %s24
    %s41 = sphi 0, %s25
    %s45 = sphi 0, %s45
    %s47 = sphi 0, %s45
    %s48 = sphi 0, %s47
    %s62 = sphi 0, %s48
    %s66 = sphi 0, %s66
    %s68 = sphi 0, %s66
    %s69 = sphi 0, %s68
    %s83 = sphi 0, %s69
    %s87 = sphi 0, %s87
    %s89 = sphi 0, %s87
    %s90 = sphi 0, %s89
    %s104 = sphi 0, %s90
    %s108 = sphi 0, %s108
    %s110 = sphi 0, %s108
    %s111 = sphi 0, %s110
    %s125 = sphi 0, %s111
    %s131 = sphi 0, %s133
    %s134 = sphi 0, %s131
    %s135 = sphi 0, %s134
    %s151 = sphi 0, %s135
  $region4: #{model_forward.3} parent=0 // loop_header_branch
    %14 = sbr.rel (%p12) target = $region8
  $region5: #{model_forward.3} parent=0 // loop_body
    %s16 = ssub.s32 %s11, 1
    %s17 = ssub.s32 %s11, 2
    %s18 = sadd.s32 %s11, 1
    %s19 = ssub.s32 %s11, %s18
    %p20 = scmp.eq.s32.totalorder %s19, 0
    %s22 = sadd.s32 %s21, 1
    %s23 = scalar_select %p20, %s21, %s22
    %p26 = pneg %p20
    %p27 = scmp.eq.s32.totalorder %s11, 1
    %p28 = por %p26, %p27
    %p29 = scmp.ne.s32.totalorder %s21, %s24
    %p30 = scmp.eq.s32.totalorder %s11, 0
    %p31 = por %p29, %p30
    %p32 = scmp.ne.s32.totalorder %s21, %s24
    %p33 = scmp.eq.s32.totalorder %s16, 1
    %p34 = por %p32, %p33
    %p35 = scmp.ne.s32.totalorder %s24, %s25
    %p36 = scmp.eq.s32.totalorder %s16, 0
    %p37 = por %p35, %p36
    %p38 = scmp.ne.s32.totalorder %s24, %s25
    %p39 = scmp.eq.s32.totalorder %s17, 1
    %p40 = por %p38, %p39
    %p42 = scmp.ne.s32.totalorder %s25, %s41
    %p43 = scmp.eq.s32.totalorder %s17, 0
    %p44 = por %p42, %p43
    %s46 = sadd.s32 %s45, 1
    %p49 = scmp.eq.s32.totalorder %s11, 1
    %p50 = scmp.ne.s32.totalorder %s45, %s47
    %p51 = scmp.eq.s32.totalorder %s11, 0
    %p52 = por %p50, %p51
    %p53 = scmp.ne.s32.totalorder %s45, %s47
    %p54 = scmp.eq.s32.totalorder %s16, 1
    %p55 = por %p53, %p54
    %p56 = scmp.ne.s32.totalorder %s47, %s48
    %p57 = scmp.eq.s32.totalorder %s16, 0
    %p58 = por %p56, %p57
    %p59 = scmp.ne.s32.totalorder %s47, %s48
    %p60 = scmp.eq.s32.totalorder %s17, 1
    %p61 = por %p59, %p60
    %p63 = scmp.ne.s32.totalorder %s48, %s62
    %p64 = scmp.eq.s32.totalorder %s17, 0
    %p65 = por %p63, %p64
    %s67 = sadd.s32 %s66, 1
    %p70 = scmp.eq.s32.totalorder %s11, 1
    %p71 = scmp.ne.s32.totalorder %s66, %s68
    %p72 = scmp.eq.s32.totalorder %s11, 0
    %p73 = por %p71, %p72
    %p74 = scmp.ne.s32.totalorder %s66, %s68
    %p75 = scmp.eq.s32.totalorder %s16, 1
    %p76 = por %p74, %p75
    %p77 = scmp.ne.s32.totalorder %s68, %s69
    %p78 = scmp.eq.s32.totalorder %s16, 0
    %p79 = por %p77, %p78
    %p80 = scmp.ne.s32.totalorder %s68, %s69
    %p81 = scmp.eq.s32.totalorder %s17, 1
    %p82 = por %p80, %p81
    %p84 = scmp.ne.s32.totalorder %s69, %s83
    %p85 = scmp.eq.s32.totalorder %s17, 0
    %p86 = por %p84, %p85
    %s88 = sadd.s32 %s87, 1
    %p91 = scmp.eq.s32.totalorder %s11, 1
    %p92 = scmp.ne.s32.totalorder %s87, %s89
    %p93 = scmp.eq.s32.totalorder %s11, 0
    %p94 = por %p92, %p93
    %p95 = scmp.ne.s32.totalorder %s87, %s89
    %p96 = scmp.eq.s32.totalorder %s16, 1
    %p97 = por %p95, %p96
    %p98 = scmp.ne.s32.totalorder %s89, %s90
    %p99 = scmp.eq.s32.totalorder %s16, 0
    %p100 = por %p98, %p99
    %p101 = scmp.ne.s32.totalorder %s89, %s90
    %p102 = scmp.eq.s32.totalorder %s17, 1
    %p103 = por %p101, %p102
    %p105 = scmp.ne.s32.totalorder %s90, %s104
    %p106 = scmp.eq.s32.totalorder %s17, 0
    %p107 = por %p105, %p106
    %s109 = sadd.s32 %s108, 1
    %p112 = scmp.eq.s32.totalorder %s11, 1
    %p113 = scmp.ne.s32.totalorder %s108, %s110
    %p114 = scmp.eq.s32.totalorder %s11, 0
    %p115 = por %p113, %p114
    %p116 = scmp.ne.s32.totalorder %s108, %s110
    %p117 = scmp.eq.s32.totalorder %s16, 1
    %p118 = por %p116, %p117
    %p119 = scmp.ne.s32.totalorder %s110, %s111
    %p120 = scmp.eq.s32.totalorder %s16, 0
    %p121 = por %p119, %p120
    %p122 = scmp.ne.s32.totalorder %s110, %s111
    %p123 = scmp.eq.s32.totalorder %s17, 1
    %p124 = por %p122, %p123
    %p126 = scmp.ne.s32.totalorder %s111, %s125
    %p127 = scmp.eq.s32.totalorder %s17, 0
    %p128 = por %p126, %p127
    %s129 = ssub.s32 %s11, %s18
    %p130 = scmp.eq.s32.totalorder %s129, 0
    %s132 = sadd.s32 %s131, 1
    %s133 = scalar_select %p130, %s131, %s132
    %p136 = pneg %p130
    %p137 = scmp.eq.s32.totalorder %s11, 1
    %p138 = por %p136, %p137
    %p139 = scmp.ne.s32.totalorder %s131, %s134
    %p140 = scmp.eq.s32.totalorder %s11, 0
    %p141 = por %p139, %p140
    %p142 = scmp.ne.s32.totalorder %s131, %s134
    %p143 = scmp.eq.s32.totalorder %s16, 1
    %p144 = por %p142, %p143
    %p145 = scmp.ne.s32.totalorder %s134, %s135
    %p146 = scmp.eq.s32.totalorder %s16, 0
    %p147 = por %p145, %p146
    %p148 = scmp.ne.s32.totalorder %s134, %s135
    %p149 = scmp.eq.s32.totalorder %s17, 1
    %p150 = por %p148, %p149
    %p152 = scmp.ne.s32.totalorder %s135, %s151
    %p153 = scmp.eq.s32.totalorder %s17, 0
    %p154 = por %p152, %p153
    %p155 = scmp.le.s32.totalorder 1, %s11
    %p156 = scmp.lt.s32.totalorder %s11, 3
    %p157 = pnand %p155, %p156
    %p158 = pneg %p157
    // Predicated region
    $region9: #{model_forward.3} parent=5 // pred_check
      _
    $region10: #{model_forward.3} parent=5 // pred_check_branch
      %160 = sbr.rel (%p157) target = $region12
    $region11: #{model_forward.3} parent=5 // pred_region
      %s161 = ssub.s32 %s11, 1
      // Predicated region
      $region13: #{model_forward.3} parent=11 // pred_check
        %p162 = pneg %p58
      $region14: #{model_forward.3} parent=11 // pred_check_branch
        %164 = sbr.rel (%p162) target = $region16
      $region15: #{model_forward.3} parent=11 // pred_region
        _
      $region16: #{model_forward.3} parent=11 // pred_fallthru
        _
      // Predicated region
      $region17: #{model_forward.3} parent=11 // pred_check
        %p165 = pneg %p79
      $region18: #{model_forward.3} parent=11 // pred_check_branch
        %167 = sbr.rel (%p165) target = $region20
      $region19: #{model_forward.3} parent=11 // pred_region
        _
      $region20: #{model_forward.3} parent=11 // pred_fallthru
        _
      // Predicated region
      $region21: #{model_forward.3} parent=11 // pred_check
        %p168 = pneg %p100
      $region22: #{model_forward.3} parent=11 // pred_check_branch
        %170 = sbr.rel (%p168) target = $region24
      $region23: #{model_forward.3} parent=11 // pred_region
        _
      $region24: #{model_forward.3} parent=11 // pred_fallthru
        _
      // Predicated region
      $region25: #{model_forward.3} parent=11 // pred_check
        %p171 = pneg %p121
      $region26: #{model_forward.3} parent=11 // pred_check_branch
        %173 = sbr.rel (%p171) target = $region28
      $region27: #{model_forward.3} parent=11 // pred_region
        _
      $region28: #{model_forward.3} parent=11 // pred_fallthru
        _
    $region12: #{model_forward.3} parent=5 // pred_fallthru
      _
    %p174 = scmp.lt.s32.totalorder %s11, 2
    // Predicated region
    $region29: #{model_forward.3} parent=5 // pred_check
      %p175 = pneg %p174
    $region30: #{model_forward.3} parent=5 // pred_check_branch
      %177 = sbr.rel (%p175) target = $region32
    $region31: #{model_forward.3} parent=5 // pred_region
      // Predicated region
      $region33: #{model_forward.3} parent=31 // pred_check
        %p178 = pneg %p31
      $region34: #{model_forward.3} parent=31 // pred_check_branch
        %180 = sbr.rel (%p178) target = $region36
      $region35: #{model_forward.3} parent=31 // pred_region
        %p181 = scmp.lt.s32.totalorder %s11, 1
        %s182 = scalar_select %p181, %s11, 1
        %s183 = smul.addr %s182, 5
        %s184 = smul.addr %s183, 4
        %s185 = scalar_lea.vmem %s0, %s184
      $region36: #{model_forward.3} parent=31 // pred_fallthru
        _
    $region32: #{model_forward.3} parent=5 // pred_fallthru
      _
    %p186 = scmp.le.s32.totalorder 1, %s11
    %p187 = scmp.lt.s32.totalorder %s11, 3
    %p188 = pnand %p186, %p187
    %p189 = pneg %p188
    // Predicated region
    $region37: #{model_forward.3} parent=5 // pred_check
      _
    $region38: #{model_forward.3} parent=5 // pred_check_branch
      %191 = sbr.rel (%p188) target = $region40
    $region39: #{model_forward.3} parent=5 // pred_region
      %s192 = ssub.s32 %s11, 1
      %p193 = scmp.lt.s32.totalorder %s16, 1
      %s194 = scalar_select %p193, %s16, 1
      %s195 = smul.addr %s194, 5
      %s196 = smul.addr %s195, 4
      %s197 = scalar_lea.vmem %s0, %s196
      %p198 = pneg %p37
      %p199 = pneg %p34
      %p200 = pneg %p58
      %p201 = pneg %p55
      %p202 = pneg %p79
      %p203 = pneg %p76
      %p204 = pneg %p100
      %p205 = pneg %p97
      %p206 = pneg %p121
      %p207 = pneg %p118
      %p208 = pneg %p147
      %p209 = pneg %p144
      %p210 = scmp.lt.s32.totalorder %s16, 1
      %s211 = scalar_select %p210, %s16, 1
      %s212 = smul.addr %s211, 5
      %s213 = smul.addr %s212, 8
      %s214 = scalar_lea.vmem %s5, %s213
      %p215 = scmp.lt.s32.totalorder %s16, 1
      %s216 = scalar_select %p215, %s16, 1
      %s217 = smul.addr %s216, 5
      %s218 = smul.addr %s217, 4
      %s219 = scalar_lea.vmem %s0, %s218
      %p220 = scmp.lt.s32.totalorder %s16, 1
      %s221 = scalar_select %p220, %s16, 1
      %s222 = smul.addr %s221, 5
      %s223 = smul.addr %s222, 8
      %s224 = scalar_lea.vmem %s5, %s223
      %v226 = vld [vmem:[%s219] sm:$0xf]
      %v227 = vld [vmem:[%s219 + $0x4] sm:$0xf]
      %v228 = vld [vmem:[%s219 + $0x8] sm:$0xf]
      %v229 = vld [vmem:[%s219 + $0xc] sm:$0xf]
      %v230 = vld [vmem:[%s219 + $0x10] sm:$0x3]
      %v231 = vld [vmem:[%s1] sm:$0xff]
      %v232 = vld [vmem:[%s1 + $0x8] sm:$0xff]
      %v233 = vld [vmem:[%s1 + $0x10] sm:$0xff]
      %v234 = vld [vmem:[%s1 + $0x18] sm:$0xff]
      %v235 = vld [vmem:[%s1 + $0x20] sm:$0xff]
      %v236 = vld [vmem:[%s1 + $0x28] sm:$0xff]
      %v237 = vld [vmem:[%s1 + $0x30] sm:$0xff]
      %v238 = vld [vmem:[%s1 + $0x38] sm:$0xff]
      %v239 = vld [vmem:[%s1 + $0x40] sm:$0xff]
      %v240 = vld [vmem:[%s1 + $0x48] sm:$0xff]
      %v241 = vld [vmem:[%s1 + $0x50] sm:$0xff]
      %v242 = vld [vmem:[%s1 + $0x58] sm:$0xff]
      %v243 = vld [vmem:[%s1 + $0x60] sm:$0xff]
      %v244 = vld [vmem:[%s1 + $0x68] sm:$0xff]
      %v245 = vld [vmem:[%s1 + $0x70] sm:$0xff]
      %v246 = vld [vmem:[%s1 + $0x78] sm:$0xff]
      %v247 = vld [vmem:[%s1 + $0x80] sm:$0x33]
      %v248 = vld [vmem:[%s1 + $0x88] sm:$0x33]
      %v249 = vld [vmem:[%s2] sm:$0xf]
      %v251 = vlaneseq
      %v252 = vshrl.u32 %v251, 7
      %v253 = vsub.s32 0, %v252
      %v254 = vrot.slane %v249, %v253
      %v255 = vlaneseq
      %v256 = vshrl.u32 %v255, 7
      %v257 = vsub.s32 1, %v256
      %v258 = vrot.slane %v249, %v257
      %v259 = vlaneseq
      %v260 = vshrl.u32 %v259, 7
      %v261 = vsub.s32 2, %v260
      %v262 = vrot.slane %v249, %v261
      %v263 = vlaneseq
      %v264 = vshrl.u32 %v263, 7
      %v265 = vsub.s32 3, %v264
      %v266 = vrot.slane %v249, %v265
      %v276 = vunpack.c.l.b16 %v226
      %v277 = vunpack.c.l.b16 %v227
      %v278 = vunpack.c.l.b16 %v228
      %v279 = vunpack.c.l.b16 %v229
      %v280 = vunpack.c.l.b16 %v230
      %v281 = vpack.c.b16 %v277, %v276
      %v282 = vpack.c.b16 %v279, %v278
      %v283 = vpack.c.b16 %v280, %v280
      %v302 = vunpack.c.l.b16 %v231
      %v303 = vunpack.c.h.b16 %v231
      %v304 = vunpack.c.l.b16 %v232
      %v305 = vunpack.c.h.b16 %v232
      %v306 = vunpack.c.l.b16 %v233
      %v307 = vunpack.c.h.b16 %v233
      %v308 = vunpack.c.l.b16 %v234
      %v309 = vunpack.c.h.b16 %v234
      %v310 = vunpack.c.l.b16 %v235
      %v311 = vunpack.c.h.b16 %v235
      %v312 = vunpack.c.l.b16 %v236
      %v313 = vunpack.c.h.b16 %v236
      %v314 = vunpack.c.l.b16 %v237
      %v315 = vunpack.c.h.b16 %v237
      %v316 = vunpack.c.l.b16 %v238
      %v317 = vunpack.c.h.b16 %v238
      %v318 = vunpack.c.l.b16 %v239
      %v319 = vunpack.c.h.b16 %v239
      %v320 = vunpack.c.l.b16 %v240
      %v321 = vunpack.c.h.b16 %v240
      %v322 = vunpack.c.l.b16 %v241
      %v323 = vunpack.c.h.b16 %v241
      %v324 = vunpack.c.l.b16 %v242
      %v325 = vunpack.c.h.b16 %v242
      %v326 = vunpack.c.l.b16 %v243
      %v327 = vunpack.c.h.b16 %v243
      %v328 = vunpack.c.l.b16 %v244
      %v329 = vunpack.c.h.b16 %v244
      %v330 = vunpack.c.l.b16 %v245
      %v331 = vunpack.c.h.b16 %v245
      %v332 = vunpack.c.l.b16 %v246
      %v333 = vunpack.c.h.b16 %v246
      %v334 = vunpack.c.l.b16 %v247
      %v335 = vunpack.c.h.b16 %v247
      %v336 = vunpack.c.l.b16 %v248
      %v337 = vunpack.c.h.b16 %v248
      %v338 = vpack.c.b16 %v306, %v302
      %v339 = vpack.c.b16 %v307, %v303
      %v340 = vpack.c.b16 %v308, %v304
      %v341 = vpack.c.b16 %v309, %v305
      %v342 = vpack.c.b16 %v314, %v310
      %v343 = vpack.c.b16 %v315, %v311
      %v344 = vpack.c.b16 %v316, %v312
      %v345 = vpack.c.b16 %v317, %v313
      %v346 = vpack.c.b16 %v322, %v318
      %v347 = vpack.c.b16 %v323, %v319
      %v348 = vpack.c.b16 %v324, %v320
      %v349 = vpack.c.b16 %v325, %v321
      %v350 = vpack.c.b16 %v330, %v326
      %v351 = vpack.c.b16 %v331, %v327
      %v352 = vpack.c.b16 %v332, %v328
      %v353 = vpack.c.b16 %v333, %v329
      %v354 = vpack.c.b16 %v334, %v334
      %v355 = vpack.c.b16 %v335, %v335
      %v356 = vpack.c.b16 %v336, %v336
      %v357 = vpack.c.b16 %v337, %v337
      %vm374 = vcmask 556032
      %v376 = vsel %vm374, %v281, 0
      %v379 = vsel %vm374, %v282, 0
      %v382 = vsel %vm374, %v283, 0
      %vm384 = vcmask 1041408
      %v386 = vsel %vm384, %v354, 0
      %v389 = vsel %vm384, %v355, 0
      %v392 = vsel %vm384, %v356, 0
      %v395 = vsel %vm384, %v357, 0
      %397 = vmatprep.subr.bf16.mxu0 0
      %398 = vmatpush1.bf16.msra.mxu0 0
      %399 = vmatprep.subr.bf16.mxu0 0
      %400 = vmatpush1.bf16.msra.mxu0 0
      %401 = vmatprep.subr.bf16.mxu0 0
      %402 = vmatpush1.bf16.msra.mxu0 0
      %403 = vmatprep.subr.bf16.mxu0 %v389
      %404 = vmatpush1.bf16.msra.mxu0 %v386
      %405 = vmatprep.subr.bf16.mxu0 %v351
      %406 = vmatpush1.bf16.msra.mxu0 %v350
      %407 = vmatprep.subr.bf16.mxu0 %v347
      %408 = vmatpush1.bf16.msra.mxu0 %v346
      %409 = vmatprep.subr.bf16.mxu0 %v343
      %410 = vmatpush1.bf16.msra.mxu0 %v342
      %411 = vmatprep.subr.bf16.mxu0 %v339
      %412 = vmatpush1.bf16.msra.mxu0 %v338
      %413 = vmatprep.subr.bf16.mxu0 0
      %414 = vmatpush2.bf16.msra.mxu0 0
      %415 = vmatprep.subr.bf16.mxu0 0
      %416 = vmatpush2.bf16.msra.mxu0 0
      %417 = vmatprep.subr.bf16.mxu0 0
      %418 = vmatpush2.bf16.msra.mxu0 0
      %419 = vmatprep.subr.bf16.mxu0 0
      %420 = vmatpush2.bf16.msra.mxu0 0
      %421 = vmatprep.subr.bf16.mxu0 0
      %422 = vmatpush2.bf16.msra.mxu0 0
      %423 = vmatprep.subr.bf16.mxu0 0
      %424 = vmatpush2.bf16.msra.mxu0 0
      %425 = vmatprep.subr.bf16.mxu0 0
      %426 = vmatpush2.bf16.msra.mxu0 0
      %427 = vmatprep.subr.bf16.mxu0 0
      %428 = vmatpush2.bf16.msra.mxu0 0
      %429 = vmatprep.mubr.bf16.mxu0 0
      %430 = vmatmul.mubr.bf16.gmra.mxu0 %v376
      %v431 = vpop.f32.mrf.mxu0
      %v432 = vadd.f32 %v254, %v431
      %v433 = vpop.f32.mrf.mxu0
      %v434 = vadd.f32 %v258, %v433
      %v435 = vpop.f32.mrf.mxu0
      %v436 = vadd.f32 %v254, %v435
      %v437 = vpop.f32.mrf.mxu0
      %v438 = vadd.f32 %v258, %v437
      %439 = vmatprep.mubr.bf16.mxu0 0
      %440 = vmatmul.mubr.bf16.gmra.mxu0 %v379
      %v441 = vpop.f32.mrf.mxu0
      %v442 = vadd.f32 %v254, %v441
      %v443 = vpop.f32.mrf.mxu0
      %v444 = vadd.f32 %v258, %v443
      %v445 = vpop.f32.mrf.mxu0
      %v446 = vadd.f32 %v254, %v445
      %v447 = vpop.f32.mrf.mxu0
      %v448 = vadd.f32 %v258, %v447
      %449 = vmatprep.mubr.bf16.mxu0 0
      %450 = vmatmul.mubr.bf16.gmra.mxu0 %v382
      %v451 = vpop.f32.mrf.mxu0
      %v452 = vadd.f32 %v254, %v451
      %v453 = vpop.f32.mrf.mxu0
      %v454 = vadd.f32 %v258, %v453
      %v455 = vpop.f32.mrf.mxu0
      %v456 = vpop.f32.mrf.mxu0
      %457 = vdwg.mxu0
      %458 = vmatprep.subr.bf16.mxu0 0
      %459 = vmatpush1.bf16.msra.mxu0 0
      %460 = vmatprep.subr.bf16.mxu0 0
      %461 = vmatpush1.bf16.msra.mxu0 0
      %462 = vmatprep.subr.bf16.mxu0 0
      %463 = vmatpush1.bf16.msra.mxu0 0
      %464 = vmatprep.subr.bf16.mxu0 %v395
      %465 = vmatpush1.bf16.msra.mxu0 %v392
      %466 = vmatprep.subr.bf16.mxu0 %v353
      %467 = vmatpush1.bf16.msra.mxu0 %v352
      %468 = vmatprep.subr.bf16.mxu0 %v349
      %469 = vmatpush1.bf16.msra.mxu0 %v348
      %470 = vmatprep.subr.bf16.mxu0 %v345
      %471 = vmatpush1.bf16.msra.mxu0 %v344
      %472 = vmatprep.subr.bf16.mxu0 %v341
      %473 = vmatpush1.bf16.msra.mxu0 %v340
      %474 = vmatprep.subr.bf16.mxu0 0
      %475 = vmatpush2.bf16.msra.mxu0 0
      %476 = vmatprep.subr.bf16.mxu0 0
      %477 = vmatpush2.bf16.msra.mxu0 0
      %478 = vmatprep.subr.bf16.mxu0 0
      %479 = vmatpush2.bf16.msra.mxu0 0
      %480 = vmatprep.subr.bf16.mxu0 0
      %481 = vmatpush2.bf16.msra.mxu0 0
      %482 = vmatprep.subr.bf16.mxu0 0
      %483 = vmatpush2.bf16.msra.mxu0 0
      %484 = vmatprep.subr.bf16.mxu0 0
      %485 = vmatpush2.bf16.msra.mxu0 0
      %486 = vmatprep.subr.bf16.mxu0 0
      %487 = vmatpush2.bf16.msra.mxu0 0
      %488 = vmatprep.subr.bf16.mxu0 0
      %489 = vmatpush2.bf16.msra.mxu0 0
      %490 = vmatprep.mubr.bf16.mxu0 0
      %491 = vmatmul.mubr.bf16.gmra.mxu0 %v376
      %v492 = vpop.f32.mrf.mxu0
      %v493 = vadd.f32 %v262, %v492
      %v494 = vpop.f32.mrf.mxu0
      %v495 = vadd.f32 %v266, %v494
      %v496 = vpop.f32.mrf.mxu0
      %v497 = vadd.f32 %v262, %v496
      %v498 = vpop.f32.mrf.mxu0
      %v499 = vadd.f32 %v266, %v498
      %500 = vmatprep.mubr.bf16.mxu0 0
      %501 = vmatmul.mubr.bf16.gmra.mxu0 %v379
      %v502 = vpop.f32.mrf.mxu0
      %v503 = vadd.f32 %v262, %v502
      %v504 = vpop.f32.mrf.mxu0
      %v505 = vadd.f32 %v266, %v504
      %v506 = vpop.f32.mrf.mxu0
      %v507 = vadd.f32 %v262, %v506
      %v508 = vpop.f32.mrf.mxu0
      %v509 = vadd.f32 %v266, %v508
      %510 = vmatprep.mubr.bf16.mxu0 0
      %511 = vmatmul.mubr.bf16.gmra.mxu0 %v382
      %v512 = vpop.f32.mrf.mxu0
      %v513 = vadd.f32 %v262, %v512
      %v514 = vpop.f32.mrf.mxu0
      %v515 = vadd.f32 %v266, %v514
      %v516 = vpop.f32.mrf.mxu0
      %v517 = vpop.f32.mrf.mxu0
      %518 = vdwg.mxu0
      %v519 = vmax.f32 %v432, 0.0
      %v520 = vmax.f32 %v434, 0.0
      %v521 = vmax.f32 %v493, 0.0
      %v522 = vmax.f32 %v495, 0.0
      %v523 = vmax.f32 %v436, 0.0
      %v524 = vmax.f32 %v438, 0.0
      %v525 = vmax.f32 %v497, 0.0
      %v526 = vmax.f32 %v499, 0.0
      %v527 = vmax.f32 %v442, 0.0
      %v528 = vmax.f32 %v444, 0.0
      %v529 = vmax.f32 %v503, 0.0
      %v530 = vmax.f32 %v505, 0.0
      %v531 = vmax.f32 %v446, 0.0
      %v532 = vmax.f32 %v448, 0.0
      %v533 = vmax.f32 %v507, 0.0
      %v534 = vmax.f32 %v509, 0.0
      %v535 = vmax.f32 %v452, 0.0
      %v536 = vmax.f32 %v454, 0.0
      %v537 = vmax.f32 %v513, 0.0
      %v538 = vmax.f32 %v515, 0.0
      %v539 = vpack.c.bf16 %v523, %v519
      %v540 = vpack.c.bf16 %v524, %v520
      %v541 = vpack.c.bf16 %v525, %v521
      %v542 = vpack.c.bf16 %v526, %v522
      %v543 = vpack.c.bf16 %v531, %v527
      %v544 = vpack.c.bf16 %v532, %v528
      %v545 = vpack.c.bf16 %v533, %v529
      %v546 = vpack.c.bf16 %v534, %v530
      %v547 = vpack.c.bf16 %v535, %v535
      %v548 = vpack.c.bf16 %v536, %v536
      %v549 = vpack.c.bf16 %v537, %v537
      %v550 = vpack.c.bf16 %v538, %v538
      %v551 = vld [vmem:[%s3] sm:$0xff]
      %v552 = vld [vmem:[%s3 + $0x8] sm:$0xff]
      %v553 = vld [vmem:[%s3 + $0x10] sm:$0xff]
      %v554 = vld [vmem:[%s3 + $0x18] sm:$0xff]
      %v555 = vld [vmem:[%s3 + $0x20] sm:$0xff]
      %v556 = vld [vmem:[%s3 + $0x28] sm:$0xff]
      %v557 = vld [vmem:[%s3 + $0x30] sm:$0xff]
      %v558 = vld [vmem:[%s3 + $0x38] sm:$0xff]
      %v559 = vld [vmem:[%s3 + $0x40] sm:$0xff]
      %v560 = vld [vmem:[%s3 + $0x48] sm:$0xff]
      %v561 = vld [vmem:[%s3 + $0x50] sm:$0xff]
      %v562 = vld [vmem:[%s3 + $0x58] sm:$0xff]
      %v563 = vld [vmem:[%s3 + $0x60] sm:$0xff]
      %v564 = vld [vmem:[%s3 + $0x68] sm:$0xff]
      %v565 = vld [vmem:[%s3 + $0x70] sm:$0xff]
      %v566 = vld [vmem:[%s3 + $0x78] sm:$0xff]
      %v567 = vld [vmem:[%s3 + $0x80] sm:$0xff]
      %v568 = vld [vmem:[%s3 + $0x88] sm:$0xff]
      %v569 = vld [vmem:[%s3 + $0x90] sm:$0xff]
      %v570 = vld [vmem:[%s3 + $0x98] sm:$0xff]
      %v571 = vld [vmem:[%s3 + $0xa0] sm:$0xff]
      %v572 = vld [vmem:[%s3 + $0xa8] sm:$0xff]
      %v573 = vld [vmem:[%s3 + $0xb0] sm:$0xff]
      %v574 = vld [vmem:[%s3 + $0xb8] sm:$0xff]
      %v575 = vld [vmem:[%s3 + $0xc0] sm:$0xff]
      %v576 = vld [vmem:[%s3 + $0xc8] sm:$0xff]
      %v577 = vld [vmem:[%s3 + $0xd0] sm:$0xff]
      %v578 = vld [vmem:[%s3 + $0xd8] sm:$0xff]
      %v579 = vld [vmem:[%s3 + $0xe0] sm:$0xff]
      %v580 = vld [vmem:[%s3 + $0xe8] sm:$0xff]
      %v581 = vld [vmem:[%s3 + $0xf0] sm:$0xff]
      %v582 = vld [vmem:[%s3 + $0xf8] sm:$0xff]
      %v583 = vld [vmem:[%s3 + $0x100] sm:$0xff]
      %v584 = vld [vmem:[%s3 + $0x108] sm:$0xff]
      %v585 = vld [vmem:[%s3 + $0x110] sm:$0xff]
      %v586 = vld [vmem:[%s3 + $0x118] sm:$0xff]
      %v587 = vld [vmem:[%s3 + $0x120] sm:$0xff]
      %v588 = vld [vmem:[%s3 + $0x128] sm:$0xff]
      %v589 = vld [vmem:[%s3 + $0x130] sm:$0xff]
      %v590 = vld [vmem:[%s3 + $0x138] sm:$0xff]
      %v591 = vld [vmem:[%s3 + $0x140] sm:$0xff]
      %v592 = vld [vmem:[%s3 + $0x148] sm:$0xff]
      %v593 = vld [vmem:[%s3 + $0x150] sm:$0xff]
      %v594 = vld [vmem:[%s3 + $0x158] sm:$0xff]
      %v595 = vld [vmem:[%s3 + $0x160] sm:$0xff]
      %v596 = vld [vmem:[%s3 + $0x168] sm:$0xff]
      %v597 = vld [vmem:[%s3 + $0x170] sm:$0xff]
      %v598 = vld [vmem:[%s3 + $0x178] sm:$0xff]
      %v599 = vld [vmem:[%s3 + $0x180] sm:$0xff]
      %v600 = vld [vmem:[%s3 + $0x188] sm:$0xff]
      %v601 = vld [vmem:[%s3 + $0x190] sm:$0xff]
      %v602 = vld [vmem:[%s3 + $0x198] sm:$0xff]
      %v603 = vld [vmem:[%s3 + $0x1a0] sm:$0xff]
      %v604 = vld [vmem:[%s3 + $0x1a8] sm:$0xff]
      %v605 = vld [vmem:[%s3 + $0x1b0] sm:$0xff]
      %v606 = vld [vmem:[%s3 + $0x1b8] sm:$0xff]
      %v607 = vld [vmem:[%s3 + $0x1c0] sm:$0xff]
      %v608 = vld [vmem:[%s3 + $0x1c8] sm:$0xff]
      %v609 = vld [vmem:[%s3 + $0x1d0] sm:$0xff]
      %v610 = vld [vmem:[%s3 + $0x1d8] sm:$0xff]
      %v611 = vld [vmem:[%s3 + $0x1e0] sm:$0xff]
      %v612 = vld [vmem:[%s3 + $0x1e8] sm:$0xff]
      %v613 = vld [vmem:[%s3 + $0x1f0] sm:$0xff]
      %v614 = vld [vmem:[%s3 + $0x1f8] sm:$0xff]
      %v615 = vld [vmem:[%s3 + $0x200] sm:$0xff]
      %v616 = vld [vmem:[%s3 + $0x208] sm:$0xff]
      %v617 = vld [vmem:[%s3 + $0x210] sm:$0xff]
      %v618 = vld [vmem:[%s3 + $0x218] sm:$0xff]
      %v619 = vld [vmem:[%s3 + $0x220] sm:$0xff]
      %v620 = vld [vmem:[%s3 + $0x228] sm:$0xff]
      %v621 = vld [vmem:[%s3 + $0x230] sm:$0xff]
      %v622 = vld [vmem:[%s3 + $0x238] sm:$0xff]
      %v623 = vld [vmem:[%s3 + $0x240] sm:$0xff]
      %v624 = vld [vmem:[%s3 + $0x248] sm:$0xff]
      %v625 = vld [vmem:[%s3 + $0x250] sm:$0xff]
      %v626 = vld [vmem:[%s3 + $0x258] sm:$0xff]
      %v627 = vld [vmem:[%s3 + $0x260] sm:$0xff]
      %v628 = vld [vmem:[%s3 + $0x268] sm:$0xff]
      %v629 = vld [vmem:[%s3 + $0x270] sm:$0xff]
      %v630 = vld [vmem:[%s3 + $0x278] sm:$0xff]
      %v631 = vld [vmem:[%s3 + $0x280] sm:$0xff]
      %v632 = vld [vmem:[%s3 + $0x288] sm:$0xff]
      %v633 = vld [vmem:[%s3 + $0x290] sm:$0xff]
      %v634 = vld [vmem:[%s3 + $0x298] sm:$0xff]
      %v635 = vld [vmem:[%s3 + $0x2a0] sm:$0xff]
      %v636 = vld [vmem:[%s3 + $0x2a8] sm:$0xff]
      %v637 = vld [vmem:[%s3 + $0x2b0] sm:$0xff]
      %v638 = vld [vmem:[%s3 + $0x2b8] sm:$0xff]
      %v639 = vld [vmem:[%s3 + $0x2c0] sm:$0xff]
      %v640 = vld [vmem:[%s3 + $0x2c8] sm:$0xff]
      %v641 = vld [vmem:[%s3 + $0x2d0] sm:$0xff]
      %v642 = vld [vmem:[%s3 + $0x2d8] sm:$0xff]
      %v643 = vld [vmem:[%s3 + $0x2e0] sm:$0xff]
      %v644 = vld [vmem:[%s3 + $0x2e8] sm:$0xff]
      %v645 = vld [vmem:[%s3 + $0x2f0] sm:$0xff]
      %v646 = vld [vmem:[%s3 + $0x2f8] sm:$0xff]
      %v647 = vld [vmem:[%s3 + $0x300] sm:$0xff]
      %v648 = vld [vmem:[%s3 + $0x308] sm:$0xff]
      %v649 = vld [vmem:[%s3 + $0x310] sm:$0xff]
      %v650 = vld [vmem:[%s3 + $0x318] sm:$0xff]
      %v651 = vld [vmem:[%s3 + $0x320] sm:$0xff]
      %v652 = vld [vmem:[%s3 + $0x328] sm:$0xff]
      %v653 = vld [vmem:[%s3 + $0x330] sm:$0xff]
      %v654 = vld [vmem:[%s3 + $0x338] sm:$0xff]
      %v655 = vld [vmem:[%s3 + $0x340] sm:$0xff]
      %v656 = vld [vmem:[%s3 + $0x348] sm:$0xff]
      %v657 = vld [vmem:[%s3 + $0x350] sm:$0xff]
      %v658 = vld [vmem:[%s3 + $0x358] sm:$0xff]
      %v659 = vld [vmem:[%s3 + $0x360] sm:$0xff]
      %v660 = vld [vmem:[%s3 + $0x368] sm:$0xff]
      %v661 = vld [vmem:[%s3 + $0x370] sm:$0xff]
      %v662 = vld [vmem:[%s3 + $0x378] sm:$0xff]
      %v663 = vld [vmem:[%s3 + $0x380] sm:$0xff]
      %v664 = vld [vmem:[%s3 + $0x388] sm:$0xff]
      %v665 = vld [vmem:[%s3 + $0x390] sm:$0xff]
      %v666 = vld [vmem:[%s3 + $0x398] sm:$0xff]
      %v667 = vld [vmem:[%s3 + $0x3a0] sm:$0xff]
      %v668 = vld [vmem:[%s3 + $0x3a8] sm:$0xff]
      %v669 = vld [vmem:[%s3 + $0x3b0] sm:$0xff]
      %v670 = vld [vmem:[%s3 + $0x3b8] sm:$0xff]
      %v671 = vld [vmem:[%s3 + $0x3c0] sm:$0xff]
      %v672 = vld [vmem:[%s3 + $0x3c8] sm:$0xff]
      %v673 = vld [vmem:[%s3 + $0x3d0] sm:$0xff]
      %v674 = vld [vmem:[%s3 + $0x3d8] sm:$0xff]
      %v675 = vld [vmem:[%s3 + $0x3e0] sm:$0xff]
      %v676 = vld [vmem:[%s3 + $0x3e8] sm:$0xff]
      %v677 = vld [vmem:[%s3 + $0x3f0] sm:$0xff]
      %v678 = vld [vmem:[%s3 + $0x3f8] sm:$0xff]
      %v679 = vld [vmem:[%s4] sm:$0xf]
      %v681 = vlaneseq
      %v682 = vshrl.u32 %v681, 7
      %v683 = vsub.s32 0, %v682
      %v684 = vrot.slane %v679, %v683
      %v685 = vlaneseq
      %v686 = vshrl.u32 %v685, 7
      %v687 = vsub.s32 1, %v686
      %v688 = vrot.slane %v679, %v687
      %v689 = vlaneseq
      %v690 = vshrl.u32 %v689, 7
      %v691 = vsub.s32 2, %v690
      %v692 = vrot.slane %v679, %v691
      %v693 = vlaneseq
      %v694 = vshrl.u32 %v693, 7
      %v695 = vsub.s32 3, %v694
      %v696 = vrot.slane %v679, %v695
      %v829 = vunpack.c.l.b16 %v551
      %v830 = vunpack.c.h.b16 %v551
      %v831 = vunpack.c.l.b16 %v552
      %v832 = vunpack.c.h.b16 %v552
      %v833 = vunpack.c.l.b16 %v553
      %v834 = vunpack.c.h.b16 %v553
      %v835 = vunpack.c.l.b16 %v554
      %v836 = vunpack.c.h.b16 %v554
      %v837 = vunpack.c.l.b16 %v555
      %v838 = vunpack.c.h.b16 %v555
      %v839 = vunpack.c.l.b16 %v556
      %v840 = vunpack.c.h.b16 %v556
      %v841 = vunpack.c.l.b16 %v557
      %v842 = vunpack.c.h.b16 %v557
      %v843 = vunpack.c.l.b16 %v558
      %v844 = vunpack.c.h.b16 %v558
      %v845 = vunpack.c.l.b16 %v559
      %v846 = vunpack.c.h.b16 %v559
      %v847 = vunpack.c.l.b16 %v560
      %v848 = vunpack.c.h.b16 %v560
      %v849 = vunpack.c.l.b16 %v561
      %v850 = vunpack.c.h.b16 %v561
      %v851 = vunpack.c.l.b16 %v562
      %v852 = vunpack.c.h.b16 %v562
      %v853 = vunpack.c.l.b16 %v563
      %v854 = vunpack.c.h.b16 %v563
      %v855 = vunpack.c.l.b16 %v564
      %v856 = vunpack.c.h.b16 %v564
      %v857 = vunpack.c.l.b16 %v565
      %v858 = vunpack.c.h.b16 %v565
      %v859 = vunpack.c.l.b16 %v566
      %v860 = vunpack.c.h.b16 %v566
      %v861 = vunpack.c.l.b16 %v567
      %v862 = vunpack.c.h.b16 %v567
      %v863 = vunpack.c.l.b16 %v568
      %v864 = vunpack.c.h.b16 %v568
      %v865 = vunpack.c.l.b16 %v569
      %v866 = vunpack.c.h.b16 %v569
      %v867 = vunpack.c.l.b16 %v570
      %v868 = vunpack.c.h.b16 %v570
      %v869 = vunpack.c.l.b16 %v571
      %v870 = vunpack.c.h.b16 %v571
      %v871 = vunpack.c.l.b16 %v572
      %v872 = vunpack.c.h.b16 %v572
      %v873 = vunpack.c.l.b16 %v573
      %v874 = vunpack.c.h.b16 %v573
      %v875 = vunpack.c.l.b16 %v574
      %v876 = vunpack.c.h.b16 %v574
      %v877 = vunpack.c.l.b16 %v575
      %v878 = vunpack.c.h.b16 %v575
      %v879 = vunpack.c.l.b16 %v576
      %v880 = vunpack.c.h.b16 %v576
      %v881 = vunpack.c.l.b16 %v577
      %v882 = vunpack.c.h.b16 %v577
      %v883 = vunpack.c.l.b16 %v578
      %v884 = vunpack.c.h.b16 %v578
      %v885 = vunpack.c.l.b16 %v579
      %v886 = vunpack.c.h.b16 %v579
      %v887 = vunpack.c.l.b16 %v580
      %v888 = vunpack.c.h.b16 %v580
      %v889 = vunpack.c.l.b16 %v581
      %v890 = vunpack.c.h.b16 %v581
      %v891 = vunpack.c.l.b16 %v582
      %v892 = vunpack.c.h.b16 %v582
      %v893 = vunpack.c.l.b16 %v583
      %v894 = vunpack.c.h.b16 %v583
      %v895 = vunpack.c.l.b16 %v584
      %v896 = vunpack.c.h.b16 %v584
      %v897 = vunpack.c.l.b16 %v585
      %v898 = vunpack.c.h.b16 %v585
      %v899 = vunpack.c.l.b16 %v586
      %v900 = vunpack.c.h.b16 %v586
      %v901 = vunpack.c.l.b16 %v587
      %v902 = vunpack.c.h.b16 %v587
      %v903 = vunpack.c.l.b16 %v588
      %v904 = vunpack.c.h.b16 %v588
      %v905 = vunpack.c.l.b16 %v589
      %v906 = vunpack.c.h.b16 %v589
      %v907 = vunpack.c.l.b16 %v590
      %v908 = vunpack.c.h.b16 %v590
      %v909 = vunpack.c.l.b16 %v591
      %v910 = vunpack.c.h.b16 %v591
      %v911 = vunpack.c.l.b16 %v592
      %v912 = vunpack.c.h.b16 %v592
      %v913 = vunpack.c.l.b16 %v593
      %v914 = vunpack.c.h.b16 %v593
      %v915 = vunpack.c.l.b16 %v594
      %v916 = vunpack.c.h.b16 %v594
      %v917 = vunpack.c.l.b16 %v595
      %v918 = vunpack.c.h.b16 %v595
      %v919 = vunpack.c.l.b16 %v596
      %v920 = vunpack.c.h.b16 %v596
      %v921 = vunpack.c.l.b16 %v597
      %v922 = vunpack.c.h.b16 %v597
      %v923 = vunpack.c.l.b16 %v598
      %v924 = vunpack.c.h.b16 %v598
      %v925 = vunpack.c.l.b16 %v599
      %v926 = vunpack.c.h.b16 %v599
      %v927 = vunpack.c.l.b16 %v600
      %v928 = vunpack.c.h.b16 %v600
      %v929 = vunpack.c.l.b16 %v601
      %v930 = vunpack.c.h.b16 %v601
      %v931 = vunpack.c.l.b16 %v602
      %v932 = vunpack.c.h.b16 %v602
      %v933 = vunpack.c.l.b16 %v603
      %v934 = vunpack.c.h.b16 %v603
      %v935 = vunpack.c.l.b16 %v604
      %v936 = vunpack.c.h.b16 %v604
      %v937 = vunpack.c.l.b16 %v605
      %v938 = vunpack.c.h.b16 %v605
      %v939 = vunpack.c.l.b16 %v606
      %v940 = vunpack.c.h.b16 %v606
      %v941 = vunpack.c.l.b16 %v607
      %v942 = vunpack.c.h.b16 %v607
      %v943 = vunpack.c.l.b16 %v608
      %v944 = vunpack.c.h.b16 %v608
      %v945 = vunpack.c.l.b16 %v609
      %v946 = vunpack.c.h.b16 %v609
      %v947 = vunpack.c.l.b16 %v610
      %v948 = vunpack.c.h.b16 %v610
      %v949 = vunpack.c.l.b16 %v611
      %v950 = vunpack.c.h.b16 %v611
      %v951 = vunpack.c.l.b16 %v612
      %v952 = vunpack.c.h.b16 %v612
      %v953 = vunpack.c.l.b16 %v613
      %v954 = vunpack.c.h.b16 %v613
      %v955 = vunpack.c.l.b16 %v614
      %v956 = vunpack.c.h.b16 %v614
      %v957 = vunpack.c.l.b16 %v615
      %v958 = vunpack.c.h.b16 %v615
      %v959 = vunpack.c.l.b16 %v616
      %v960 = vunpack.c.h.b16 %v616
      %v961 = vunpack.c.l.b16 %v617
      %v962 = vunpack.c.h.b16 %v617
      %v963 = vunpack.c.l.b16 %v618
      %v964 = vunpack.c.h.b16 %v618
      %v965 = vunpack.c.l.b16 %v619
      %v966 = vunpack.c.h.b16 %v619
      %v967 = vunpack.c.l.b16 %v620
      %v968 = vunpack.c.h.b16 %v620
      %v969 = vunpack.c.l.b16 %v621
      %v970 = vunpack.c.h.b16 %v621
      %v971 = vunpack.c.l.b16 %v622
      %v972 = vunpack.c.h.b16 %v622
      %v973 = vunpack.c.l.b16 %v623
      %v974 = vunpack.c.h.b16 %v623
      %v975 = vunpack.c.l.b16 %v624
      %v976 = vunpack.c.h.b16 %v624
      %v977 = vunpack.c.l.b16 %v625
      %v978 = vunpack.c.h.b16 %v625
      %v979 = vunpack.c.l.b16 %v626
      %v980 = vunpack.c.h.b16 %v626
      %v981 = vunpack.c.l.b16 %v627
      %v982 = vunpack.c.h.b16 %v627
      %v983 = vunpack.c.l.b16 %v628
      %v984 = vunpack.c.h.b16 %v628
      %v985 = vunpack.c.l.b16 %v629
      %v986 = vunpack.c.h.b16 %v629
      %v987 = vunpack.c.l.b16 %v630
      %v988 = vunpack.c.h.b16 %v630
      %v989 = vunpack.c.l.b16 %v631
      %v990 = vunpack.c.h.b16 %v631
      %v991 = vunpack.c.l.b16 %v632
      %v992 = vunpack.c.h.b16 %v632
      %v993 = vunpack.c.l.b16 %v633
      %v994 = vunpack.c.h.b16 %v633
      %v995 = vunpack.c.l.b16 %v634
      %v996 = vunpack.c.h.b16 %v634
      %v997 = vunpack.c.l.b16 %v635
      %v998 = vunpack.c.h.b16 %v635
      %v999 = vunpack.c.l.b16 %v636
      %v1000 = vunpack.c.h.b16 %v636
      %v1001 = vunpack.c.l.b16 %v637
      %v1002 = vunpack.c.h.b16 %v637
      %v1003 = vunpack.c.l.b16 %v638
      %v1004 = vunpack.c.h.b16 %v638
      %v1005 = vunpack.c.l.b16 %v639
      %v1006 = vunpack.c.h.b16 %v639
      %v1007 = vunpack.c.l.b16 %v640
      %v1008 = vunpack.c.h.b16 %v640
      %v1009 = vunpack.c.l.b16 %v641
      %v1010 = vunpack.c.h.b16 %v641
      %v1011 = vunpack.c.l.b16 %v642
      %v1012 = vunpack.c.h.b16 %v642
      %v1013 = vunpack.c.l.b16 %v643
      %v1014 = vunpack.c.h.b16 %v643
      %v1015 = vunpack.c.l.b16 %v644
      %v1016 = vunpack.c.h.b16 %v644
      %v1017 = vunpack.c.l.b16 %v645
      %v1018 = vunpack.c.h.b16 %v645
      %v1019 = vunpack.c.l.b16 %v646
      %v1020 = vunpack.c.h.b16 %v646
      %v1021 = vunpack.c.l.b16 %v647
      %v1022 = vunpack.c.h.b16 %v647
      %v1023 = vunpack.c.l.b16 %v648
      %v1024 = vunpack.c.h.b16 %v648
      %v1025 = vunpack.c.l.b16 %v649
      %v1026 = vunpack.c.h.b16 %v649
      %v1027 = vunpack.c.l.b16 %v650
      %v1028 = vunpack.c.h.b16 %v650
      %v1029 = vunpack.c.l.b16 %v651
      %v1030 = vunpack.c.h.b16 %v651
      %v1031 = vunpack.c.l.b16 %v652
      %v1032 = vunpack.c.h.b16 %v652
      %v1033 = vunpack.c.l.b16 %v653
      %v1034 = vunpack.c.h.b16 %v653
      %v1035 = vunpack.c.l.b16 %v654
      %v1036 = vunpack.c.h.b16 %v654
      %v1037 = vunpack.c.l.b16 %v655
      %v1038 = vunpack.c.h.b16 %v655
      %v1039 = vunpack.c.l.b16 %v656
      %v1040 = vunpack.c.h.b16 %v656
      %v1041 = vunpack.c.l.b16 %v657
      %v1042 = vunpack.c.h.b16 %v657
      %v1043 = vunpack.c.l.b16 %v658
      %v1044 = vunpack.c.h.b16 %v658
      %v1045 = vunpack.c.l.b16 %v659
      %v1046 = vunpack.c.h.b16 %v659
      %v1047 = vunpack.c.l.b16 %v660
      %v1048 = vunpack.c.h.b16 %v660
      %v1049 = vunpack.c.l.b16 %v661
      %v1050 = vunpack.c.h.b16 %v661
      %v1051 = vunpack.c.l.b16 %v662
      %v1052 = vunpack.c.h.b16 %v662
      %v1053 = vunpack.c.l.b16 %v663
      %v1054 = vunpack.c.h.b16 %v663
      %v1055 = vunpack.c.l.b16 %v664
      %v1056 = vunpack.c.h.b16 %v664
      %v1057 = vunpack.c.l.b16 %v665
      %v1058 = vunpack.c.h.b16 %v665
      %v1059 = vunpack.c.l.b16 %v666
      %v1060 = vunpack.c.h.b16 %v666
      %v1061 = vunpack.c.l.b16 %v667
      %v1062 = vunpack.c.h.b16 %v667
      %v1063 = vunpack.c.l.b16 %v668
      %v1064 = vunpack.c.h.b16 %v668
      %v1065 = vunpack.c.l.b16 %v669
      %v1066 = vunpack.c.h.b16 %v669
      %v1067 = vunpack.c.l.b16 %v670
      %v1068 = vunpack.c.h.b16 %v670
      %v1069 = vunpack.c.l.b16 %v671
      %v1070 = vunpack.c.h.b16 %v671
      %v1071 = vunpack.c.l.b16 %v672
      %v1072 = vunpack.c.h.b16 %v672
      %v1073 = vunpack.c.l.b16 %v673
      %v1074 = vunpack.c.h.b16 %v673
      %v1075 = vunpack.c.l.b16 %v674
      %v1076 = vunpack.c.h.b16 %v674
      %v1077 = vunpack.c.l.b16 %v675
      %v1078 = vunpack.c.h.b16 %v675
      %v1079 = vunpack.c.l.b16 %v676
      %v1080 = vunpack.c.h.b16 %v676
      %v1081 = vunpack.c.l.b16 %v677
      %v1082 = vunpack.c.h.b16 %v677
      %v1083 = vunpack.c.l.b16 %v678
      %v1084 = vunpack.c.h.b16 %v678
      %v1085 = vpack.c.b16 %v833, %v829
      %v1086 = vpack.c.b16 %v834, %v830
      %v1087 = vpack.c.b16 %v835, %v831
      %v1088 = vpack.c.b16 %v836, %v832
      %v1089 = vpack.c.b16 %v841, %v837
      %v1090 = vpack.c.b16 %v842, %v838
      %v1091 = vpack.c.b16 %v843, %v839
      %v1092 = vpack.c.b16 %v844, %v840
      %v1093 = vpack.c.b16 %v849, %v845
      %v1094 = vpack.c.b16 %v850, %v846
      %v1095 = vpack.c.b16 %v851, %v847
      %v1096 = vpack.c.b16 %v852, %v848
      %v1097 = vpack.c.b16 %v857, %v853
      %v1098 = vpack.c.b16 %v858, %v854
      %v1099 = vpack.c.b16 %v859, %v855
      %v1100 = vpack.c.b16 %v860, %v856
      %v1101 = vpack.c.b16 %v865, %v861
      %v1102 = vpack.c.b16 %v866, %v862
      %v1103 = vpack.c.b16 %v867, %v863
      %v1104 = vpack.c.b16 %v868, %v864
      %v1105 = vpack.c.b16 %v873, %v869
      %v1106 = vpack.c.b16 %v874, %v870
      %v1107 = vpack.c.b16 %v875, %v871
      %v1108 = vpack.c.b16 %v876, %v872
      %v1109 = vpack.c.b16 %v881, %v877
      %v1110 = vpack.c.b16 %v882, %v878
      %v1111 = vpack.c.b16 %v883, %v879
      %v1112 = vpack.c.b16 %v884, %v880
      %v1113 = vpack.c.b16 %v889, %v885
      %v1114 = vpack.c.b16 %v890, %v886
      %v1115 = vpack.c.b16 %v891, %v887
      %v1116 = vpack.c.b16 %v892, %v888
      %v1117 = vpack.c.b16 %v897, %v893
      %v1118 = vpack.c.b16 %v898, %v894
      %v1119 = vpack.c.b16 %v899, %v895
      %v1120 = vpack.c.b16 %v900, %v896
      %v1121 = vpack.c.b16 %v905, %v901
      %v1122 = vpack.c.b16 %v906, %v902
      %v1123 = vpack.c.b16 %v907, %v903
      %v1124 = vpack.c.b16 %v908, %v904
      %v1125 = vpack.c.b16 %v913, %v909
      %v1126 = vpack.c.b16 %v914, %v910
      %v1127 = vpack.c.b16 %v915, %v911
      %v1128 = vpack.c.b16 %v916, %v912
      %v1129 = vpack.c.b16 %v921, %v917
      %v1130 = vpack.c.b16 %v922, %v918
      %v1131 = vpack.c.b16 %v923, %v919
      %v1132 = vpack.c.b16 %v924, %v920
      %v1133 = vpack.c.b16 %v929, %v925
      %v1134 = vpack.c.b16 %v930, %v926
      %v1135 = vpack.c.b16 %v931, %v927
      %v1136 = vpack.c.b16 %v932, %v928
      %v1137 = vpack.c.b16 %v937, %v933
      %v1138 = vpack.c.b16 %v938, %v934
      %v1139 = vpack.c.b16 %v939, %v935
      %v1140 = vpack.c.b16 %v940, %v936
      %v1141 = vpack.c.b16 %v945, %v941
      %v1142 = vpack.c.b16 %v946, %v942
      %v1143 = vpack.c.b16 %v947, %v943
      %v1144 = vpack.c.b16 %v948, %v944
      %v1145 = vpack.c.b16 %v953, %v949
      %v1146 = vpack.c.b16 %v954, %v950
      %v1147 = vpack.c.b16 %v955, %v951
      %v1148 = vpack.c.b16 %v956, %v952
      %v1149 = vpack.c.b16 %v961, %v957
      %v1150 = vpack.c.b16 %v962, %v958
      %v1151 = vpack.c.b16 %v963, %v959
      %v1152 = vpack.c.b16 %v964, %v960
      %v1153 = vpack.c.b16 %v969, %v965
      %v1154 = vpack.c.b16 %v970, %v966
      %v1155 = vpack.c.b16 %v971, %v967
      %v1156 = vpack.c.b16 %v972, %v968
      %v1157 = vpack.c.b16 %v977, %v973
      %v1158 = vpack.c.b16 %v978, %v974
      %v1159 = vpack.c.b16 %v979, %v975
      %v1160 = vpack.c.b16 %v980, %v976
      %v1161 = vpack.c.b16 %v985, %v981
      %v1162 = vpack.c.b16 %v986, %v982
      %v1163 = vpack.c.b16 %v987, %v983
      %v1164 = vpack.c.b16 %v988, %v984
      %v1165 = vpack.c.b16 %v993, %v989
      %v1166 = vpack.c.b16 %v994, %v990
      %v1167 = vpack.c.b16 %v995, %v991
      %v1168 = vpack.c.b16 %v996, %v992
      %v1169 = vpack.c.b16 %v1001, %v997
      %v1170 = vpack.c.b16 %v1002, %v998
      %v1171 = vpack.c.b16 %v1003, %v999
      %v1172 = vpack.c.b16 %v1004, %v1000
      %v1173 = vpack.c.b16 %v1009, %v1005
      %v1174 = vpack.c.b16 %v1010, %v1006
      %v1175 = vpack.c.b16 %v1011, %v1007
      %v1176 = vpack.c.b16 %v1012, %v1008
      %v1177 = vpack.c.b16 %v1017, %v1013
      %v1178 = vpack.c.b16 %v1018, %v1014
      %v1179 = vpack.c.b16 %v1019, %v1015
      %v1180 = vpack.c.b16 %v1020, %v1016
      %v1181 = vpack.c.b16 %v1025, %v1021
      %v1182 = vpack.c.b16 %v1026, %v1022
      %v1183 = vpack.c.b16 %v1027, %v1023
      %v1184 = vpack.c.b16 %v1028, %v1024
      %v1185 = vpack.c.b16 %v1033, %v1029
      %v1186 = vpack.c.b16 %v1034, %v1030
      %v1187 = vpack.c.b16 %v1035, %v1031
      %v1188 = vpack.c.b16 %v1036, %v1032
      %v1189 = vpack.c.b16 %v1041, %v1037
      %v1190 = vpack.c.b16 %v1042, %v1038
      %v1191 = vpack.c.b16 %v1043, %v1039
      %v1192 = vpack.c.b16 %v1044, %v1040
      %v1193 = vpack.c.b16 %v1049, %v1045
      %v1194 = vpack.c.b16 %v1050, %v1046
      %v1195 = vpack.c.b16 %v1051, %v1047
      %v1196 = vpack.c.b16 %v1052, %v1048
      %v1197 = vpack.c.b16 %v1057, %v1053
      %v1198 = vpack.c.b16 %v1058, %v1054
      %v1199 = vpack.c.b16 %v1059, %v1055
      %v1200 = vpack.c.b16 %v1060, %v1056
      %v1201 = vpack.c.b16 %v1065, %v1061
      %v1202 = vpack.c.b16 %v1066, %v1062
      %v1203 = vpack.c.b16 %v1067, %v1063
      %v1204 = vpack.c.b16 %v1068, %v1064
      %v1205 = vpack.c.b16 %v1073, %v1069
      %v1206 = vpack.c.b16 %v1074, %v1070
      %v1207 = vpack.c.b16 %v1075, %v1071
      %v1208 = vpack.c.b16 %v1076, %v1072
      %v1209 = vpack.c.b16 %v1081, %v1077
      %v1210 = vpack.c.b16 %v1082, %v1078
      %v1211 = vpack.c.b16 %v1083, %v1079
      %v1212 = vpack.c.b16 %v1084, %v1080
      %1341 = vmatprep.subr.bf16.mxu0 %v1114
      %1342 = vmatpush1.bf16.msra.mxu0 %v1113
      %1343 = vmatprep.subr.bf16.mxu0 %v1110
      %1344 = vmatpush1.bf16.msra.mxu0 %v1109
      %1345 = vmatprep.subr.bf16.mxu0 %v1106
      %1346 = vmatpush1.bf16.msra.mxu0 %v1105
      %1347 = vmatprep.subr.bf16.mxu0 %v1102
      %1348 = vmatpush1.bf16.msra.mxu0 %v1101
      %1349 = vmatprep.subr.bf16.mxu0 %v1098
      %1350 = vmatpush1.bf16.msra.mxu0 %v1097
      %1351 = vmatprep.subr.bf16.mxu0 %v1094
      %1352 = vmatpush1.bf16.msra.mxu0 %v1093
      %1353 = vmatprep.subr.bf16.mxu0 %v1090
      %1354 = vmatpush1.bf16.msra.mxu0 %v1089
      %1355 = vmatprep.subr.bf16.mxu0 %v1086
      %1356 = vmatpush1.bf16.msra.mxu0 %v1085
      %1357 = vmatprep.subr.bf16.mxu0 %v1146
      %1358 = vmatpush2.bf16.msra.mxu0 %v1145
      %1359 = vmatprep.subr.bf16.mxu0 %v1142
      %1360 = vmatpush2.bf16.msra.mxu0 %v1141
      %1361 = vmatprep.subr.bf16.mxu0 %v1138
      %1362 = vmatpush2.bf16.msra.mxu0 %v1137
      %1363 = vmatprep.subr.bf16.mxu0 %v1134
      %1364 = vmatpush2.bf16.msra.mxu0 %v1133
      %1365 = vmatprep.subr.bf16.mxu0 %v1130
      %1366 = vmatpush2.bf16.msra.mxu0 %v1129
      %1367 = vmatprep.subr.bf16.mxu0 %v1126
      %1368 = vmatpush2.bf16.msra.mxu0 %v1125
      %1369 = vmatprep.subr.bf16.mxu0 %v1122
      %1370 = vmatpush2.bf16.msra.mxu0 %v1121
      %1371 = vmatprep.subr.bf16.mxu0 %v1118
      %1372 = vmatpush2.bf16.msra.mxu0 %v1117
      %1373 = vmatprep.mubr.bf16.mxu0 %v540
      %1374 = vmatmul.mubr.bf16.gmra.mxu0 %v539
      %v1375 = vpop.f32.mrf.mxu0
      %v1376 = vadd.f32 %v684, %v1375
      %v1377 = vpop.f32.mrf.mxu0
      %v1378 = vadd.f32 %v688, %v1377
      %v1379 = vpop.f32.mrf.mxu0
      %v1380 = vadd.f32 %v684, %v1379
      %v1381 = vpop.f32.mrf.mxu0
      %v1382 = vadd.f32 %v688, %v1381
      %1383 = vmatprep.mubr.bf16.mxu0 %v544
      %1384 = vmatmul.mubr.bf16.gmra.mxu0 %v543
      %v1385 = vpop.f32.mrf.mxu0
      %v1386 = vadd.f32 %v684, %v1385
      %v1387 = vpop.f32.mrf.mxu0
      %v1388 = vadd.f32 %v688, %v1387
      %v1389 = vpop.f32.mrf.mxu0
      %v1390 = vadd.f32 %v684, %v1389
      %v1391 = vpop.f32.mrf.mxu0
      %v1392 = vadd.f32 %v688, %v1391
      %1393 = vmatprep.mubr.bf16.mxu0 %v548
      %1394 = vmatmul.mubr.bf16.gmra.mxu0 %v547
      %v1395 = vpop.f32.mrf.mxu0
      %v1396 = vadd.f32 %v684, %v1395
      %v1397 = vpop.f32.mrf.mxu0
      %v1398 = vadd.f32 %v688, %v1397
      %v1399 = vpop.f32.mrf.mxu0
      %v1400 = vpop.f32.mrf.mxu0
      %1401 = vdwg.mxu0
      %1402 = vmatprep.subr.bf16.mxu0 %v1178
      %1403 = vmatpush1.bf16.msra.mxu0 %v1177
      %1404 = vmatprep.subr.bf16.mxu0 %v1174
      %1405 = vmatpush1.bf16.msra.mxu0 %v1173
      %1406 = vmatprep.subr.bf16.mxu0 %v1170
      %1407 = vmatpush1.bf16.msra.mxu0 %v1169
      %1408 = vmatprep.subr.bf16.mxu0 %v1166
      %1409 = vmatpush1.bf16.msra.mxu0 %v1165
      %1410 = vmatprep.subr.bf16.mxu0 %v1162
      %1411 = vmatpush1.bf16.msra.mxu0 %v1161
      %1412 = vmatprep.subr.bf16.mxu0 %v1158
      %1413 = vmatpush1.bf16.msra.mxu0 %v1157
      %1414 = vmatprep.subr.bf16.mxu0 %v1154
      %1415 = vmatpush1.bf16.msra.mxu0 %v1153
      %1416 = vmatprep.subr.bf16.mxu0 %v1150
      %1417 = vmatpush1.bf16.msra.mxu0 %v1149
      %1418 = vmatprep.subr.bf16.mxu0 %v1210
      %1419 = vmatpush2.bf16.msra.mxu0 %v1209
      %1420 = vmatprep.subr.bf16.mxu0 %v1206
      %1421 = vmatpush2.bf16.msra.mxu0 %v1205
      %1422 = vmatprep.subr.bf16.mxu0 %v1202
      %1423 = vmatpush2.bf16.msra.mxu0 %v1201
      %1424 = vmatprep.subr.bf16.mxu0 %v1198
      %1425 = vmatpush2.bf16.msra.mxu0 %v1197
      %1426 = vmatprep.subr.bf16.mxu0 %v1194
      %1427 = vmatpush2.bf16.msra.mxu0 %v1193
      %1428 = vmatprep.subr.bf16.mxu0 %v1190
      %1429 = vmatpush2.bf16.msra.mxu0 %v1189
      %1430 = vmatprep.subr.bf16.mxu0 %v1186
      %1431 = vmatpush2.bf16.msra.mxu0 %v1185
      %1432 = vmatprep.subr.bf16.mxu0 %v1182
      %1433 = vmatpush2.bf16.msra.mxu0 %v1181
      %1434 = vmatprep.mubr.bf16.mxu0 %v542
      %1435 = vmatmul.mubr.bf16.gmra.mxu0 %v541
      %v1436 = vpop.f32.mrf.mxu0
      %v1437 = vadd.f32 %v1376, %v1436
      %v1438 = vpop.f32.mrf.mxu0
      %v1439 = vadd.f32 %v1378, %v1438
      %v1440 = vpop.f32.mrf.mxu0
      %v1441 = vadd.f32 %v1380, %v1440
      %v1442 = vpop.f32.mrf.mxu0
      %v1443 = vadd.f32 %v1382, %v1442
      %1444 = vmatprep.mubr.bf16.mxu0 %v546
      %1445 = vmatmul.mubr.bf16.gmra.mxu0 %v545
      %v1446 = vpop.f32.mrf.mxu0
      %v1447 = vadd.f32 %v1386, %v1446
      %v1448 = vpop.f32.mrf.mxu0
      %v1449 = vadd.f32 %v1388, %v1448
      %v1450 = vpop.f32.mrf.mxu0
      %v1451 = vadd.f32 %v1390, %v1450
      %v1452 = vpop.f32.mrf.mxu0
      %v1453 = vadd.f32 %v1392, %v1452
      %1454 = vmatprep.mubr.bf16.mxu0 %v550
      %1455 = vmatmul.mubr.bf16.gmra.mxu0 %v549
      %v1456 = vpop.f32.mrf.mxu0
      %v1457 = vadd.f32 %v1396, %v1456
      %v1458 = vpop.f32.mrf.mxu0
      %v1459 = vadd.f32 %v1398, %v1458
      %v1460 = vpop.f32.mrf.mxu0
      %v1461 = vpop.f32.mrf.mxu0
      %1462 = vdwg.mxu0
      %1463 = vmatprep.subr.bf16.mxu0 %v1116
      %1464 = vmatpush1.bf16.msra.mxu0 %v1115
      %1465 = vmatprep.subr.bf16.mxu0 %v1112
      %1466 = vmatpush1.bf16.msra.mxu0 %v1111
      %1467 = vmatprep.subr.bf16.mxu0 %v1108
      %1468 = vmatpush1.bf16.msra.mxu0 %v1107
      %1469 = vmatprep.subr.bf16.mxu0 %v1104
      %1470 = vmatpush1.bf16.msra.mxu0 %v1103
      %1471 = vmatprep.subr.bf16.mxu0 %v1100
      %1472 = vmatpush1.bf16.msra.mxu0 %v1099
      %1473 = vmatprep.subr.bf16.mxu0 %v1096
      %1474 = vmatpush1.bf16.msra.mxu0 %v1095
      %1475 = vmatprep.subr.bf16.mxu0 %v1092
      %1476 = vmatpush1.bf16.msra.mxu0 %v1091
      %1477 = vmatprep.subr.bf16.mxu0 %v1088
      %1478 = vmatpush1.bf16.msra.mxu0 %v1087
      %1479 = vmatprep.subr.bf16.mxu0 %v1148
      %1480 = vmatpush2.bf16.msra.mxu0 %v1147
      %1481 = vmatprep.subr.bf16.mxu0 %v1144
      %1482 = vmatpush2.bf16.msra.mxu0 %v1143
      %1483 = vmatprep.subr.bf16.mxu0 %v1140
      %1484 = vmatpush2.bf16.msra.mxu0 %v1139
      %1485 = vmatprep.subr.bf16.mxu0 %v1136
      %1486 = vmatpush2.bf16.msra.mxu0 %v1135
      %1487 = vmatprep.subr.bf16.mxu0 %v1132
      %1488 = vmatpush2.bf16.msra.mxu0 %v1131
      %1489 = vmatprep.subr.bf16.mxu0 %v1128
      %1490 = vmatpush2.bf16.msra.mxu0 %v1127
      %1491 = vmatprep.subr.bf16.mxu0 %v1124
      %1492 = vmatpush2.bf16.msra.mxu0 %v1123
      %1493 = vmatprep.subr.bf16.mxu0 %v1120
      %1494 = vmatpush2.bf16.msra.mxu0 %v1119
      %1495 = vmatprep.mubr.bf16.mxu0 %v540
      %1496 = vmatmul.mubr.bf16.gmra.mxu0 %v539
      %v1497 = vpop.f32.mrf.mxu0
      %v1498 = vadd.f32 %v692, %v1497
      %v1499 = vpop.f32.mrf.mxu0
      %v1500 = vadd.f32 %v696, %v1499
      %v1501 = vpop.f32.mrf.mxu0
      %v1502 = vadd.f32 %v692, %v1501
      %v1503 = vpop.f32.mrf.mxu0
      %v1504 = vadd.f32 %v696, %v1503
      %1505 = vmatprep.mubr.bf16.mxu0 %v544
      %1506 = vmatmul.mubr.bf16.gmra.mxu0 %v543
      %v1507 = vpop.f32.mrf.mxu0
      %v1508 = vadd.f32 %v692, %v1507
      %v1509 = vpop.f32.mrf.mxu0
      %v1510 = vadd.f32 %v696, %v1509
      %v1511 = vpop.f32.mrf.mxu0
      %v1512 = vadd.f32 %v692, %v1511
      %v1513 = vpop.f32.mrf.mxu0
      %v1514 = vadd.f32 %v696, %v1513
      %1515 = vmatprep.mubr.bf16.mxu0 %v548
      %1516 = vmatmul.mubr.bf16.gmra.mxu0 %v547
      %v1517 = vpop.f32.mrf.mxu0
      %v1518 = vadd.f32 %v692, %v1517
      %v1519 = vpop.f32.mrf.mxu0
      %v1520 = vadd.f32 %v696, %v1519
      %v1521 = vpop.f32.mrf.mxu0
      %v1522 = vpop.f32.mrf.mxu0
      %1523 = vdwg.mxu0
      %1524 = vmatprep.subr.bf16.mxu0 %v1180
      %1525 = vmatpush1.bf16.msra.mxu0 %v1179
      %1526 = vmatprep.subr.bf16.mxu0 %v1176
      %1527 = vmatpush1.bf16.msra.mxu0 %v1175
      %1528 = vmatprep.subr.bf16.mxu0 %v1172
      %1529 = vmatpush1.bf16.msra.mxu0 %v1171
      %1530 = vmatprep.subr.bf16.mxu0 %v1168
      %1531 = vmatpush1.bf16.msra.mxu0 %v1167
      %1532 = vmatprep.subr.bf16.mxu0 %v1164
      %1533 = vmatpush1.bf16.msra.mxu0 %v1163
      %1534 = vmatprep.subr.bf16.mxu0 %v1160
      %1535 = vmatpush1.bf16.msra.mxu0 %v1159
      %1536 = vmatprep.subr.bf16.mxu0 %v1156
      %1537 = vmatpush1.bf16.msra.mxu0 %v1155
      %1538 = vmatprep.subr.bf16.mxu0 %v1152
      %1539 = vmatpush1.bf16.msra.mxu0 %v1151
      %1540 = vmatprep.subr.bf16.mxu0 %v1212
      %1541 = vmatpush2.bf16.msra.mxu0 %v1211
      %1542 = vmatprep.subr.bf16.mxu0 %v1208
      %1543 = vmatpush2.bf16.msra.mxu0 %v1207
      %1544 = vmatprep.subr.bf16.mxu0 %v1204
      %1545 = vmatpush2.bf16.msra.mxu0 %v1203
      %1546 = vmatprep.subr.bf16.mxu0 %v1200
      %1547 = vmatpush2.bf16.msra.mxu0 %v1199
      %1548 = vmatprep.subr.bf16.mxu0 %v1196
      %1549 = vmatpush2.bf16.msra.mxu0 %v1195
      %1550 = vmatprep.subr.bf16.mxu0 %v1192
      %1551 = vmatpush2.bf16.msra.mxu0 %v1191
      %1552 = vmatprep.subr.bf16.mxu0 %v1188
      %1553 = vmatpush2.bf16.msra.mxu0 %v1187
      %1554 = vmatprep.subr.bf16.mxu0 %v1184
      %1555 = vmatpush2.bf16.msra.mxu0 %v1183
      %1556 = vmatprep.mubr.bf16.mxu0 %v542
      %1557 = vmatmul.mubr.bf16.gmra.mxu0 %v541
      %v1558 = vpop.f32.mrf.mxu0
      %v1559 = vadd.f32 %v1498, %v1558
      %v1560 = vpop.f32.mrf.mxu0
      %v1561 = vadd.f32 %v1500, %v1560
      %v1562 = vpop.f32.mrf.mxu0
      %v1563 = vadd.f32 %v1502, %v1562
      %v1564 = vpop.f32.mrf.mxu0
      %v1565 = vadd.f32 %v1504, %v1564
      %1566 = vmatprep.mubr.bf16.mxu0 %v546
      %1567 = vmatmul.mubr.bf16.gmra.mxu0 %v545
      %v1568 = vpop.f32.mrf.mxu0
      %v1569 = vadd.f32 %v1508, %v1568
      %v1570 = vpop.f32.mrf.mxu0
      %v1571 = vadd.f32 %v1510, %v1570
      %v1572 = vpop.f32.mrf.mxu0
      %v1573 = vadd.f32 %v1512, %v1572
      %v1574 = vpop.f32.mrf.mxu0
      %v1575 = vadd.f32 %v1514, %v1574
      %1576 = vmatprep.mubr.bf16.mxu0 %v550
      %1577 = vmatmul.mubr.bf16.gmra.mxu0 %v549
      %v1578 = vpop.f32.mrf.mxu0
      %v1579 = vadd.f32 %v1518, %v1578
      %v1580 = vpop.f32.mrf.mxu0
      %v1581 = vadd.f32 %v1520, %v1580
      %v1582 = vpop.f32.mrf.mxu0
      %v1583 = vpop.f32.mrf.mxu0
      %1584 = vdwg.mxu0
      %v1585 = vmax.f32 %v1437, 0.0
      %v1586 = vmax.f32 %v1439, 0.0
      %v1587 = vmax.f32 %v1559, 0.0
      %v1588 = vmax.f32 %v1561, 0.0
      %v1589 = vmax.f32 %v1441, 0.0
      %v1590 = vmax.f32 %v1443, 0.0
      %v1591 = vmax.f32 %v1563, 0.0
      %v1592 = vmax.f32 %v1565, 0.0
      %v1593 = vmax.f32 %v1447, 0.0
      %v1594 = vmax.f32 %v1449, 0.0
      %v1595 = vmax.f32 %v1569, 0.0
      %v1596 = vmax.f32 %v1571, 0.0
      %v1597 = vmax.f32 %v1451, 0.0
      %v1598 = vmax.f32 %v1453, 0.0
      %v1599 = vmax.f32 %v1573, 0.0
      %v1600 = vmax.f32 %v1575, 0.0
      %v1601 = vmax.f32 %v1457, 0.0
      %v1602 = vmax.f32 %v1459, 0.0
      %v1603 = vmax.f32 %v1579, 0.0
      %v1604 = vmax.f32 %v1581, 0.0
      %v1605 = vpack.c.bf16 %v1589, %v1585
      %v1606 = vpack.c.bf16 %v1590, %v1586
      %v1607 = vpack.c.bf16 %v1591, %v1587
      %v1608 = vpack.c.bf16 %v1592, %v1588
      %v1609 = vpack.c.bf16 %v1597, %v1593
      %v1610 = vpack.c.bf16 %v1598, %v1594
      %v1611 = vpack.c.bf16 %v1599, %v1595
      %v1612 = vpack.c.bf16 %v1600, %v1596
      %v1613 = vpack.c.bf16 %v1601, %v1601
      %v1614 = vpack.c.bf16 %v1602, %v1602
      %v1615 = vpack.c.bf16 %v1603, %v1603
      %v1616 = vpack.c.bf16 %v1604, %v1604
      %1617 = vmatprep.subr.bf16.mxu0 0
      %1618 = vmatpush1.bf16.xpose.msra.mxu0 0
      %1619 = vmatprep.subr.bf16.mxu0 0
      %1620 = vmatpush1.bf16.xpose.msra.mxu0 0
      %1621 = vmatprep.subr.bf16.mxu0 0
      %1622 = vmatpush1.bf16.xpose.msra.mxu0 0
      %1623 = vmatprep.subr.bf16.mxu0 0
      %1624 = vmatpush1.bf16.xpose.msra.mxu0 0
      %1625 = vmatprep.subr.bf16.mxu0 0
      %1626 = vmatpush1.bf16.xpose.msra.mxu0 0
      %1627 = vmatprep.subr.bf16.mxu0 %v1614
      %1628 = vmatpush1.bf16.xpose.msra.mxu0 %v1613
      %1629 = vmatprep.subr.bf16.mxu0 %v1610
      %1630 = vmatpush1.bf16.xpose.msra.mxu0 %v1609
      %1631 = vmatprep.subr.bf16.mxu0 %v1606
      %1632 = vmatpush1.bf16.xpose.msra.mxu0 %v1605
      %1633 = vmatprep.subr.bf16.mxu0 0
      %1634 = vmatpush2.bf16.xpose.msra.mxu0 0
      %1635 = vmatprep.subr.bf16.mxu0 0
      %1636 = vmatpush2.bf16.xpose.msra.mxu0 0
      %1637 = vmatprep.subr.bf16.mxu0 0
      %1638 = vmatpush2.bf16.xpose.msra.mxu0 0
      %1639 = vmatprep.subr.bf16.mxu0 0
      %1640 = vmatpush2.bf16.xpose.msra.mxu0 0
      %1641 = vmatprep.subr.bf16.mxu0 0
      %1642 = vmatpush2.bf16.xpose.msra.mxu0 0
      %1643 = vmatprep.subr.bf16.mxu0 0
      %1644 = vmatpush2.bf16.xpose.msra.mxu0 0
      %1645 = vmatprep.subr.bf16.mxu0 0
      %1646 = vmatpush2.bf16.xpose.msra.mxu0 0
      %1647 = vmatprep.subr.bf16.mxu0 0
      %1648 = vmatpush2.bf16.xpose.msra.mxu0 0
      %1649 = vmatprep.mubr.bf16.mxu0 %v1606
      %1650 = vmatmul.mubr.bf16.gmra.mxu0 %v1605
      %v1651 = vpop.f32.mrf.mxu0
      %v1652 = vadd.f32 0.0, %v1651
      %v1653 = vpop.f32.mrf.mxu0
      %v1654 = vpop.f32.mrf.mxu0
      %v1655 = vadd.f32 0.0, %v1654
      %v1656 = vpop.f32.mrf.mxu0
      %1657 = vmatprep.mubr.bf16.mxu0 %v1610
      %1658 = vmatmul.mubr.bf16.gmra.mxu0 %v1609
      %v1659 = vpop.f32.mrf.mxu0
      %v1660 = vadd.f32 0.0, %v1659
      %v1661 = vpop.f32.mrf.mxu0
      %v1662 = vpop.f32.mrf.mxu0
      %v1663 = vadd.f32 0.0, %v1662
      %v1664 = vpop.f32.mrf.mxu0
      %1665 = vmatprep.mubr.bf16.mxu0 %v1614
      %1666 = vmatmul.mubr.bf16.gmra.mxu0 %v1613
      %v1667 = vpop.f32.mrf.mxu0
      %v1668 = vadd.f32 0.0, %v1667
      %v1669 = vpop.f32.mrf.mxu0
      %v1670 = vpop.f32.mrf.mxu0
      %v1671 = vpop.f32.mrf.mxu0
      %1672 = vdwg.mxu0
      %1673 = vmatprep.subr.bf16.mxu0 0
      %1674 = vmatpush1.bf16.xpose.msra.mxu0 0
      %1675 = vmatprep.subr.bf16.mxu0 0
      %1676 = vmatpush1.bf16.xpose.msra.mxu0 0
      %1677 = vmatprep.subr.bf16.mxu0 0
      %1678 = vmatpush1.bf16.xpose.msra.mxu0 0
      %1679 = vmatprep.subr.bf16.mxu0 0
      %1680 = vmatpush1.bf16.xpose.msra.mxu0 0
      %1681 = vmatprep.subr.bf16.mxu0 0
      %1682 = vmatpush1.bf16.xpose.msra.mxu0 0
      %1683 = vmatprep.subr.bf16.mxu0 %v1616
      %1684 = vmatpush1.bf16.xpose.msra.mxu0 %v1615
      %1685 = vmatprep.subr.bf16.mxu0 %v1612
      %1686 = vmatpush1.bf16.xpose.msra.mxu0 %v1611
      %1687 = vmatprep.subr.bf16.mxu0 %v1608
      %1688 = vmatpush1.bf16.xpose.msra.mxu0 %v1607
      %1689 = vmatprep.subr.bf16.mxu0 0
      %1690 = vmatpush2.bf16.xpose.msra.mxu0 0
      %1691 = vmatprep.subr.bf16.mxu0 0
      %1692 = vmatpush2.bf16.xpose.msra.mxu0 0
      %1693 = vmatprep.subr.bf16.mxu0 0
      %1694 = vmatpush2.bf16.xpose.msra.mxu0 0
      %1695 = vmatprep.subr.bf16.mxu0 0
      %1696 = vmatpush2.bf16.xpose.msra.mxu0 0
      %1697 = vmatprep.subr.bf16.mxu0 0
      %1698 = vmatpush2.bf16.xpose.msra.mxu0 0
      %1699 = vmatprep.subr.bf16.mxu0 0
      %1700 = vmatpush2.bf16.xpose.msra.mxu0 0
      %1701 = vmatprep.subr.bf16.mxu0 0
      %1702 = vmatpush2.bf16.xpose.msra.mxu0 0
      %1703 = vmatprep.subr.bf16.mxu0 0
      %1704 = vmatpush2.bf16.xpose.msra.mxu0 0
      %1705 = vmatprep.mubr.bf16.mxu0 %v1608
      %1706 = vmatmul.mubr.bf16.gmra.mxu0 %v1607
      %v1707 = vpop.f32.mrf.mxu0
      %v1708 = vadd.f32 %v1652, %v1707
      %v1709 = vpop.f32.mrf.mxu0
      %v1710 = vpop.f32.mrf.mxu0
      %v1711 = vadd.f32 %v1655, %v1710
      %v1712 = vpop.f32.mrf.mxu0
      %1713 = vmatprep.mubr.bf16.mxu0 %v1612
      %1714 = vmatmul.mubr.bf16.gmra.mxu0 %v1611
      %v1715 = vpop.f32.mrf.mxu0
      %v1716 = vadd.f32 %v1660, %v1715
      %v1717 = vpop.f32.mrf.mxu0
      %v1718 = vpop.f32.mrf.mxu0
      %v1719 = vadd.f32 %v1663, %v1718
      %v1720 = vpop.f32.mrf.mxu0
      %1721 = vmatprep.mubr.bf16.mxu0 %v1616
      %1722 = vmatmul.mubr.bf16.gmra.mxu0 %v1615
      %v1723 = vpop.f32.mrf.mxu0
      %v1724 = vadd.f32 %v1668, %v1723
      %v1725 = vpop.f32.mrf.mxu0
      %v1726 = vpop.f32.mrf.mxu0
      %v1727 = vpop.f32.mrf.mxu0
      %1728 = vdwg.mxu0
      %vm1729 = vcmask 293888
      %1730 = vst.msk [vmem:[%s224] sm:$0xff] %vm1729, %v1708
      %1731 = vst.msk [vmem:[%s224 + $0x8] sm:$0xff] %vm1729, %v1711
      %1732 = vst.msk [vmem:[%s224 + $0x10] sm:$0xff] %vm1729, %v1716
      %1733 = vst.msk [vmem:[%s224 + $0x18] sm:$0xff] %vm1729, %v1719
      %vm1734 = vcmask 289792
      %1735 = vst.msk [vmem:[%s224 + $0x20] sm:$0xf] %vm1734, %v1724
      %p1736 = scmp.lt.s32.totalorder %s16, 1
      %s1737 = scalar_select %p1736, %s16, 1
      %s1738 = smul.addr %s1737, 5
      %s1739 = smul.addr %s1738, 8
      %s1740 = scalar_lea.vmem %s5, %s1739
      // Predicated region
      $region41: #{model_forward.3} parent=39 // pred_check
        %p1741 = pneg %p144
      $region42: #{model_forward.3} parent=39 // pred_check_branch
        %1743 = sbr.rel (%p1741) target = $region44
      $region43: #{model_forward.3} parent=39 // pred_region
        _
      $region44: #{model_forward.3} parent=39 // pred_fallthru
        _
    $region40: #{model_forward.3} parent=5 // pred_fallthru
      _
    %p1744 = scmp.le.s32.totalorder 2, %s11
    // Predicated region
    $region45: #{model_forward.3} parent=5 // pred_check
      %p1745 = pneg %p1744
    $region46: #{model_forward.3} parent=5 // pred_check_branch
      %1747 = sbr.rel (%p1745) target = $region48
    $region47: #{model_forward.3} parent=5 // pred_region
      %s1748 = ssub.s32 %s11, 2
      // Predicated region
      $region49: #{model_forward.3} parent=47 // pred_check
        %p1749 = pneg %p150
      $region50: #{model_forward.3} parent=47 // pred_check_branch
        %1751 = sbr.rel (%p1749) target = $region52
      $region51: #{model_forward.3} parent=47 // pred_region
        %p1752 = scmp.lt.s32.totalorder %s17, 1
        %s1753 = scalar_select %p1752, %s17, 1
        %s1754 = smul.addr %s1753, 5
        %s1755 = smul.addr %s1754, 8
        %s1756 = scalar_lea.vmem %s5, %s1755
      $region52: #{model_forward.3} parent=47 // pred_fallthru
        _
    $region48: #{model_forward.3} parent=5 // pred_fallthru
      _
  $region6: #{model_forward.3} parent=0 // loop_footer
    %s15 = sadd.s32 1, %s11
  $region7: #{model_forward.3} parent=0 // loop_footer_branch
    %10 = sbr.rel target = $region3
  $region8: #{model_forward.3} parent=0 // loop_exit
    _

// kernel: model_forward.4
$region0: #{model_forward.4}
  #allocation0 [shape = 'u32[]', space=smem, size = 0x4, offset = 0x4, fixed_abs, tag = 'smem constant byte address 0x4 - core index']
  #allocation1 [shape = 'u32[144,128]{1,0:T(1,128)}', space=vmem, size = 0x12000, scoped, tag = 'internal scratch']
  %s0 = inlined_call_operand.vmem [shape: f32[2,36,576], index: 0, kind: input, shape index: {}]
  %s1 = inlined_call_operand.vmem [shape: f32[2,1,576], index: 1, kind: input, shape index: {}]
  %s2 = inlined_call_operand.vmem [shape: f32[2,1,576], index: 2, kind: input, shape index: {}]
  %s3 = inlined_call_operand.vmem [shape: f32[8,4], index: 3, kind: input, shape index: {}]
  %s4 = inlined_call_operand.vmem [shape: f32[64,36], index: 4, kind: input, shape index: {}]
  %s5 = inlined_call_operand.vmem [shape: f32[64,8], index: 5, kind: input, shape index: {}]
  %s6 = inlined_call_operand.vmem [shape: f32[576,36], index: 6, kind: input, shape index: {}]
  %s7 = inlined_call_operand.vmem [shape: f32[2,64,36], index: 7, kind: output, shape index: {}]
  %s8 = sld [smem:[#allocation0]]
  $region61: #{model_forward.4} parent=0
    _
  %s10 = ssub.s32 1, %s8
  %s11 = scalar_select 0, %s10, %s8
  loop: start=0, step=1, limit=4
  $region2: #{model_forward.4} parent=0 // loop_pre_header
    _
  $region3: #{model_forward.4} parent=0 // loop_header
    %s13 = sphi 0, %s17
    %p14 = scmp.ge.s32.totalorder %s13, 4
    %s23 = sphi 0, %s25
    %s26 = sphi 0, %s23
    %s27 = sphi 0, %s26
    %s43 = sphi 0, %s27
    %s49 = sphi 0, %s51
    %s52 = sphi 0, %s49
    %s53 = sphi 0, %s52
    %s69 = sphi 0, %s53
    %s75 = sphi 0, %s77
    %s78 = sphi 0, %s75
    %s79 = sphi 0, %s78
    %s95 = sphi 0, %s79
    %s99 = sphi 0, %s99
    %s101 = sphi 0, %s99
    %s102 = sphi 0, %s101
    %s116 = sphi 0, %s102
    %s120 = sphi 0, %s120
    %s122 = sphi 0, %s120
    %s123 = sphi 0, %s122
    %s137 = sphi 0, %s123
    %s141 = sphi 0, %s141
    %s143 = sphi 0, %s141
    %s144 = sphi 0, %s143
    %s158 = sphi 0, %s144
    %s162 = sphi 0, %s162
    %s164 = sphi 0, %s162
    %s165 = sphi 0, %s164
    %s179 = sphi 0, %s165
    %s185 = sphi 0, %s187
    %s188 = sphi 0, %s185
    %s189 = sphi 0, %s188
    %s205 = sphi 0, %s189
  $region4: #{model_forward.4} parent=0 // loop_header_branch
    %16 = sbr.rel (%p14) target = $region8
  $region5: #{model_forward.4} parent=0 // loop_body
    %s18 = ssub.s32 %s13, 1
    %s19 = ssub.s32 %s13, 2
    %s20 = sadd.s32 %s13, 1
    %s21 = ssub.s32 %s13, %s20
    %p22 = scmp.eq.s32.totalorder %s21, 0
    %s24 = sadd.s32 %s23, 1
    %s25 = scalar_select %p22, %s23, %s24
    %p28 = pneg %p22
    %p29 = scmp.eq.s32.totalorder %s13, 1
    %p30 = por %p28, %p29
    %p31 = scmp.ne.s32.totalorder %s23, %s26
    %p32 = scmp.eq.s32.totalorder %s13, 0
    %p33 = por %p31, %p32
    %p34 = scmp.ne.s32.totalorder %s23, %s26
    %p35 = scmp.eq.s32.totalorder %s18, 1
    %p36 = por %p34, %p35
    %p37 = scmp.ne.s32.totalorder %s26, %s27
    %p38 = scmp.eq.s32.totalorder %s18, 0
    %p39 = por %p37, %p38
    %p40 = scmp.ne.s32.totalorder %s26, %s27
    %p41 = scmp.eq.s32.totalorder %s19, 1
    %p42 = por %p40, %p41
    %p44 = scmp.ne.s32.totalorder %s27, %s43
    %p45 = scmp.eq.s32.totalorder %s19, 0
    %p46 = por %p44, %p45
    %s47 = ssub.s32 %s13, %s20
    %p48 = scmp.eq.s32.totalorder %s47, 0
    %s50 = sadd.s32 %s49, 1
    %s51 = scalar_select %p48, %s49, %s50
    %p54 = pneg %p48
    %p55 = scmp.eq.s32.totalorder %s13, 1
    %p56 = por %p54, %p55
    %p57 = scmp.ne.s32.totalorder %s49, %s52
    %p58 = scmp.eq.s32.totalorder %s13, 0
    %p59 = por %p57, %p58
    %p60 = scmp.ne.s32.totalorder %s49, %s52
    %p61 = scmp.eq.s32.totalorder %s18, 1
    %p62 = por %p60, %p61
    %p63 = scmp.ne.s32.totalorder %s52, %s53
    %p64 = scmp.eq.s32.totalorder %s18, 0
    %p65 = por %p63, %p64
    %p66 = scmp.ne.s32.totalorder %s52, %s53
    %p67 = scmp.eq.s32.totalorder %s19, 1
    %p68 = por %p66, %p67
    %p70 = scmp.ne.s32.totalorder %s53, %s69
    %p71 = scmp.eq.s32.totalorder %s19, 0
    %p72 = por %p70, %p71
    %s73 = ssub.s32 %s13, %s20
    %p74 = scmp.eq.s32.totalorder %s73, 0
    %s76 = sadd.s32 %s75, 1
    %s77 = scalar_select %p74, %s75, %s76
    %p80 = pneg %p74
    %p81 = scmp.eq.s32.totalorder %s13, 1
    %p82 = por %p80, %p81
    %p83 = scmp.ne.s32.totalorder %s75, %s78
    %p84 = scmp.eq.s32.totalorder %s13, 0
    %p85 = por %p83, %p84
    %p86 = scmp.ne.s32.totalorder %s75, %s78
    %p87 = scmp.eq.s32.totalorder %s18, 1
    %p88 = por %p86, %p87
    %p89 = scmp.ne.s32.totalorder %s78, %s79
    %p90 = scmp.eq.s32.totalorder %s18, 0
    %p91 = por %p89, %p90
    %p92 = scmp.ne.s32.totalorder %s78, %s79
    %p93 = scmp.eq.s32.totalorder %s19, 1
    %p94 = por %p92, %p93
    %p96 = scmp.ne.s32.totalorder %s79, %s95
    %p97 = scmp.eq.s32.totalorder %s19, 0
    %p98 = por %p96, %p97
    %s100 = sadd.s32 %s99, 1
    %p103 = scmp.eq.s32.totalorder %s13, 1
    %p104 = scmp.ne.s32.totalorder %s99, %s101
    %p105 = scmp.eq.s32.totalorder %s13, 0
    %p106 = por %p104, %p105
    %p107 = scmp.ne.s32.totalorder %s99, %s101
    %p108 = scmp.eq.s32.totalorder %s18, 1
    %p109 = por %p107, %p108
    %p110 = scmp.ne.s32.totalorder %s101, %s102
    %p111 = scmp.eq.s32.totalorder %s18, 0
    %p112 = por %p110, %p111
    %p113 = scmp.ne.s32.totalorder %s101, %s102
    %p114 = scmp.eq.s32.totalorder %s19, 1
    %p115 = por %p113, %p114
    %p117 = scmp.ne.s32.totalorder %s102, %s116
    %p118 = scmp.eq.s32.totalorder %s19, 0
    %p119 = por %p117, %p118
    %s121 = sadd.s32 %s120, 1
    %p124 = scmp.eq.s32.totalorder %s13, 1
    %p125 = scmp.ne.s32.totalorder %s120, %s122
    %p126 = scmp.eq.s32.totalorder %s13, 0
    %p127 = por %p125, %p126
    %p128 = scmp.ne.s32.totalorder %s120, %s122
    %p129 = scmp.eq.s32.totalorder %s18, 1
    %p130 = por %p128, %p129
    %p131 = scmp.ne.s32.totalorder %s122, %s123
    %p132 = scmp.eq.s32.totalorder %s18, 0
    %p133 = por %p131, %p132
    %p134 = scmp.ne.s32.totalorder %s122, %s123
    %p135 = scmp.eq.s32.totalorder %s19, 1
    %p136 = por %p134, %p135
    %p138 = scmp.ne.s32.totalorder %s123, %s137
    %p139 = scmp.eq.s32.totalorder %s19, 0
    %p140 = por %p138, %p139
    %s142 = sadd.s32 %s141, 1
    %p145 = scmp.eq.s32.totalorder %s13, 1
    %p146 = scmp.ne.s32.totalorder %s141, %s143
    %p147 = scmp.eq.s32.totalorder %s13, 0
    %p148 = por %p146, %p147
    %p149 = scmp.ne.s32.totalorder %s141, %s143
    %p150 = scmp.eq.s32.totalorder %s18, 1
    %p151 = por %p149, %p150
    %p152 = scmp.ne.s32.totalorder %s143, %s144
    %p153 = scmp.eq.s32.totalorder %s18, 0
    %p154 = por %p152, %p153
    %p155 = scmp.ne.s32.totalorder %s143, %s144
    %p156 = scmp.eq.s32.totalorder %s19, 1
    %p157 = por %p155, %p156
    %p159 = scmp.ne.s32.totalorder %s144, %s158
    %p160 = scmp.eq.s32.totalorder %s19, 0
    %p161 = por %p159, %p160
    %s163 = sadd.s32 %s162, 1
    %p166 = scmp.eq.s32.totalorder %s13, 1
    %p167 = scmp.ne.s32.totalorder %s162, %s164
    %p168 = scmp.eq.s32.totalorder %s13, 0
    %p169 = por %p167, %p168
    %p170 = scmp.ne.s32.totalorder %s162, %s164
    %p171 = scmp.eq.s32.totalorder %s18, 1
    %p172 = por %p170, %p171
    %p173 = scmp.ne.s32.totalorder %s164, %s165
    %p174 = scmp.eq.s32.totalorder %s18, 0
    %p175 = por %p173, %p174
    %p176 = scmp.ne.s32.totalorder %s164, %s165
    %p177 = scmp.eq.s32.totalorder %s19, 1
    %p178 = por %p176, %p177
    %p180 = scmp.ne.s32.totalorder %s165, %s179
    %p181 = scmp.eq.s32.totalorder %s19, 0
    %p182 = por %p180, %p181
    %s183 = ssub.s32 %s13, %s20
    %p184 = scmp.eq.s32.totalorder %s183, 0
    %s186 = sadd.s32 %s185, 1
    %s187 = scalar_select %p184, %s185, %s186
    %p190 = pneg %p184
    %p191 = scmp.eq.s32.totalorder %s13, 1
    %p192 = por %p190, %p191
    %p193 = scmp.ne.s32.totalorder %s185, %s188
    %p194 = scmp.eq.s32.totalorder %s13, 0
    %p195 = por %p193, %p194
    %p196 = scmp.ne.s32.totalorder %s185, %s188
    %p197 = scmp.eq.s32.totalorder %s18, 1
    %p198 = por %p196, %p197
    %p199 = scmp.ne.s32.totalorder %s188, %s189
    %p200 = scmp.eq.s32.totalorder %s18, 0
    %p201 = por %p199, %p200
    %p202 = scmp.ne.s32.totalorder %s188, %s189
    %p203 = scmp.eq.s32.totalorder %s19, 1
    %p204 = por %p202, %p203
    %p206 = scmp.ne.s32.totalorder %s189, %s205
    %p207 = scmp.eq.s32.totalorder %s19, 0
    %p208 = por %p206, %p207
    %p209 = scmp.le.s32.totalorder 1, %s13
    %p210 = scmp.lt.s32.totalorder %s13, 3
    %p211 = pnand %p209, %p210
    %p212 = pneg %p211
    // Predicated region
    $region9: #{model_forward.4} parent=5 // pred_check
      _
    $region10: #{model_forward.4} parent=5 // pred_check_branch
      %214 = sbr.rel (%p211) target = $region12
    $region11: #{model_forward.4} parent=5 // pred_region
      %s215 = ssub.s32 %s13, 1
      // Predicated region
      $region13: #{model_forward.4} parent=11 // pred_check
        %p216 = pneg %p112
      $region14: #{model_forward.4} parent=11 // pred_check_branch
        %218 = sbr.rel (%p216) target = $region16
      $region15: #{model_forward.4} parent=11 // pred_region
        _
      $region16: #{model_forward.4} parent=11 // pred_fallthru
        _
      // Predicated region
      $region17: #{model_forward.4} parent=11 // pred_check
        %p219 = pneg %p133
      $region18: #{model_forward.4} parent=11 // pred_check_branch
        %221 = sbr.rel (%p219) target = $region20
      $region19: #{model_forward.4} parent=11 // pred_region
        _
      $region20: #{model_forward.4} parent=11 // pred_fallthru
        _
      // Predicated region
      $region21: #{model_forward.4} parent=11 // pred_check
        %p222 = pneg %p154
      $region22: #{model_forward.4} parent=11 // pred_check_branch
        %224 = sbr.rel (%p222) target = $region24
      $region23: #{model_forward.4} parent=11 // pred_region
        _
      $region24: #{model_forward.4} parent=11 // pred_fallthru
        _
      // Predicated region
      $region25: #{model_forward.4} parent=11 // pred_check
        %p225 = pneg %p175
      $region26: #{model_forward.4} parent=11 // pred_check_branch
        %227 = sbr.rel (%p225) target = $region28
      $region27: #{model_forward.4} parent=11 // pred_region
        _
      $region28: #{model_forward.4} parent=11 // pred_fallthru
        _
    $region12: #{model_forward.4} parent=5 // pred_fallthru
      _
    %p228 = scmp.lt.s32.totalorder %s13, 2
    // Predicated region
    $region29: #{model_forward.4} parent=5 // pred_check
      %p229 = pneg %p228
    $region30: #{model_forward.4} parent=5 // pred_check_branch
      %231 = sbr.rel (%p229) target = $region32
    $region31: #{model_forward.4} parent=5 // pred_region
      // Predicated region
      $region33: #{model_forward.4} parent=31 // pred_check
        %p232 = pneg %p33
      $region34: #{model_forward.4} parent=31 // pred_check_branch
        %234 = sbr.rel (%p232) target = $region36
      $region35: #{model_forward.4} parent=31 // pred_region
        %p235 = scmp.lt.s32.totalorder %s13, 1
        %s236 = scalar_select %p235, %s13, 1
        %s237 = smul.addr %s236, 25
        %s238 = smul.addr %s237, 8
        %s239 = scalar_lea.vmem %s0, %s238
      $region36: #{model_forward.4} parent=31 // pred_fallthru
        _
      // Predicated region
      $region37: #{model_forward.4} parent=31 // pred_check
        %p240 = pneg %p59
      $region38: #{model_forward.4} parent=31 // pred_check_branch
        %242 = sbr.rel (%p240) target = $region40
      $region39: #{model_forward.4} parent=31 // pred_region
        %p243 = scmp.lt.s32.totalorder %s13, 1
        %s244 = scalar_select %p243, %s13, 1
        %s245 = smul.addr %s244, 5
        %s246 = scalar_lea.vmem %s1, %s245
      $region40: #{model_forward.4} parent=31 // pred_fallthru
        _
      // Predicated region
      $region41: #{model_forward.4} parent=31 // pred_check
        %p247 = pneg %p85
      $region42: #{model_forward.4} parent=31 // pred_check_branch
        %249 = sbr.rel (%p247) target = $region44
      $region43: #{model_forward.4} parent=31 // pred_region
        %p250 = scmp.lt.s32.totalorder %s13, 1
        %s251 = scalar_select %p250, %s13, 1
        %s252 = smul.addr %s251, 5
        %s253 = scalar_lea.vmem %s2, %s252
      $region44: #{model_forward.4} parent=31 // pred_fallthru
        _
    $region32: #{model_forward.4} parent=5 // pred_fallthru
      _
    %p254 = scmp.le.s32.totalorder 1, %s13
    %p255 = scmp.lt.s32.totalorder %s13, 3
    %p256 = pnand %p254, %p255
    %p257 = pneg %p256
    // Predicated region
    $region45: #{model_forward.4} parent=5 // pred_check
      _
    $region46: #{model_forward.4} parent=5 // pred_check_branch
      %259 = sbr.rel (%p256) target = $region48
    $region47: #{model_forward.4} parent=5 // pred_region
      %s260 = ssub.s32 %s13, 1
      %p261 = scmp.lt.s32.totalorder %s18, 1
      %s262 = scalar_select %p261, %s18, 1
      %s263 = smul.addr %s262, 25
      %s264 = smul.addr %s263, 8
      %s265 = scalar_lea.vmem %s0, %s264
      %p266 = pneg %p39
      %p267 = pneg %p36
      %p268 = scmp.lt.s32.totalorder %s18, 1
      %s269 = scalar_select %p268, %s18, 1
      %s270 = smul.addr %s269, 5
      %s271 = scalar_lea.vmem %s1, %s270
      %p272 = pneg %p65
      %p273 = pneg %p62
      %p274 = scmp.lt.s32.totalorder %s18, 1
      %s275 = scalar_select %p274, %s18, 1
      %s276 = smul.addr %s275, 5
      %s277 = scalar_lea.vmem %s2, %s276
      %p278 = pneg %p91
      %p279 = pneg %p88
      %p280 = pneg %p112
      %p281 = pneg %p109
      %p282 = pneg %p133
      %p283 = pneg %p130
      %p284 = pneg %p154
      %p285 = pneg %p151
      %p286 = pneg %p175
      %p287 = pneg %p172
      %p288 = pneg %p201
      %p289 = pneg %p198
      %p290 = scmp.lt.s32.totalorder %s18, 1
      %s291 = scalar_select %p290, %s18, 1
      %s292 = smul.addr %s291, 8
      %s293 = smul.addr %s292, 8
      %s294 = scalar_lea.vmem %s7, %s293
      %p295 = scmp.lt.s32.totalorder %s18, 1
      %s296 = scalar_select %p295, %s18, 1
      %s297 = smul.addr %s296, 25
      %s298 = smul.addr %s297, 8
      %s299 = scalar_lea.vmem %s0, %s298
      %p300 = scmp.lt.s32.totalorder %s18, 1
      %s301 = scalar_select %p300, %s18, 1
      %s302 = smul.addr %s301, 5
      %s303 = scalar_lea.vmem %s1, %s302
      %p304 = scmp.lt.s32.totalorder %s18, 1
      %s305 = scalar_select %p304, %s18, 1
      %s306 = smul.addr %s305, 5
      %s307 = scalar_lea.vmem %s2, %s306
      %p308 = scmp.lt.s32.totalorder %s18, 1
      %s309 = scalar_select %p308, %s18, 1
      %s310 = smul.addr %s309, 8
      %s311 = smul.addr %s310, 8
      %s312 = scalar_lea.vmem %s7, %s311
      %v313 = vld [vmem:[%s299] sm:$0xff]
      %v314 = vld [vmem:[%s299 + $0x8] sm:$0xff]
      %v315 = vld [vmem:[%s299 + $0x10] sm:$0xff]
      %v316 = vld [vmem:[%s299 + $0x18] sm:$0xff]
      %v317 = vld [vmem:[%s299 + $0x20] sm:$0xff]
      %v318 = vld [vmem:[%s299 + $0x28] sm:$0xff]
      %v319 = vld [vmem:[%s299 + $0x30] sm:$0xff]
      %v320 = vld [vmem:[%s299 + $0x38] sm:$0xff]
      %v321 = vld [vmem:[%s299 + $0x40] sm:$0xff]
      %v322 = vld [vmem:[%s299 + $0x48] sm:$0xff]
      %v323 = vld [vmem:[%s299 + $0x50] sm:$0xff]
      %v324 = vld [vmem:[%s299 + $0x58] sm:$0xff]
      %v325 = vld [vmem:[%s299 + $0x60] sm:$0xff]
      %v326 = vld [vmem:[%s299 + $0x68] sm:$0xff]
      %v327 = vld [vmem:[%s299 + $0x70] sm:$0xff]
      %v328 = vld [vmem:[%s299 + $0x78] sm:$0xff]
      %v329 = vld [vmem:[%s299 + $0x80] sm:$0xff]
      %v330 = vld [vmem:[%s299 + $0x88] sm:$0xff]
      %v331 = vld [vmem:[%s299 + $0x90] sm:$0xff]
      %v332 = vld [vmem:[%s299 + $0x98] sm:$0xff]
      %v333 = vld [vmem:[%s299 + $0xa0] sm:$0xf]
      %v334 = vld [vmem:[%s299 + $0xa8] sm:$0xf]
      %v335 = vld [vmem:[%s299 + $0xb0] sm:$0xf]
      %v336 = vld [vmem:[%s299 + $0xb8] sm:$0xf]
      %v337 = vld [vmem:[%s299 + $0xc0] sm:$0xf]
      %v338 = vld [vmem:[%s303] sm:$0x1f]
      %v339 = vld [vmem:[%s307] sm:$0x1f]
      %v340 = vld [vmem:[%s3] sm:$0xff]
      %v341 = vld [vmem:[%s4] sm:$0xff]
      %v342 = vld [vmem:[%s4 + $0x8] sm:$0xff]
      %v343 = vld [vmem:[%s4 + $0x10] sm:$0xff]
      %v344 = vld [vmem:[%s4 + $0x18] sm:$0xff]
      %v345 = vld [vmem:[%s4 + $0x20] sm:$0xff]
      %v346 = vld [vmem:[%s4 + $0x28] sm:$0xff]
      %v347 = vld [vmem:[%s4 + $0x30] sm:$0xff]
      %v348 = vld [vmem:[%s4 + $0x38] sm:$0xff]
      %v349 = vld [vmem:[%s5] sm:$0xff]
      %v350 = vld [vmem:[%s5 + $0x8] sm:$0xff]
      %v351 = vld [vmem:[%s5 + $0x10] sm:$0xff]
      %v352 = vld [vmem:[%s5 + $0x18] sm:$0xff]
      %v353 = vld [vmem:[%s5 + $0x20] sm:$0xff]
      %v354 = vld [vmem:[%s5 + $0x28] sm:$0xff]
      %v355 = vld [vmem:[%s5 + $0x30] sm:$0xff]
      %v356 = vld [vmem:[%s5 + $0x38] sm:$0xff]
      %v357 = vld [vmem:[%s6] sm:$0xff]
      %v358 = vld [vmem:[%s6 + $0x8] sm:$0xff]
      %v359 = vld [vmem:[%s6 + $0x10] sm:$0xff]
      %v360 = vld [vmem:[%s6 + $0x18] sm:$0xff]
      %v361 = vld [vmem:[%s6 + $0x20] sm:$0xff]
      %v362 = vld [vmem:[%s6 + $0x28] sm:$0xff]
      %v363 = vld [vmem:[%s6 + $0x30] sm:$0xff]
      %v364 = vld [vmem:[%s6 + $0x38] sm:$0xff]
      %v365 = vld [vmem:[%s6 + $0x40] sm:$0xff]
      %v366 = vld [vmem:[%s6 + $0x48] sm:$0xff]
      %v367 = vld [vmem:[%s6 + $0x50] sm:$0xff]
      %v368 = vld [vmem:[%s6 + $0x58] sm:$0xff]
      %v369 = vld [vmem:[%s6 + $0x60] sm:$0xff]
      %v370 = vld [vmem:[%s6 + $0x68] sm:$0xff]
      %v371 = vld [vmem:[%s6 + $0x70] sm:$0xff]
      %v372 = vld [vmem:[%s6 + $0x78] sm:$0xff]
      %v373 = vld [vmem:[%s6 + $0x80] sm:$0xff]
      %v374 = vld [vmem:[%s6 + $0x88] sm:$0xff]
      %v375 = vld [vmem:[%s6 + $0x90] sm:$0xff]
      %v376 = vld [vmem:[%s6 + $0x98] sm:$0xff]
      %v377 = vld [vmem:[%s6 + $0xa0] sm:$0xff]
      %v378 = vld [vmem:[%s6 + $0xa8] sm:$0xff]
      %v379 = vld [vmem:[%s6 + $0xb0] sm:$0xff]
      %v380 = vld [vmem:[%s6 + $0xb8] sm:$0xff]
      %v381 = vld [vmem:[%s6 + $0xc0] sm:$0xff]
      %v382 = vld [vmem:[%s6 + $0xc8] sm:$0xff]
      %v383 = vld [vmem:[%s6 + $0xd0] sm:$0xff]
      %v384 = vld [vmem:[%s6 + $0xd8] sm:$0xff]
      %v385 = vld [vmem:[%s6 + $0xe0] sm:$0xff]
      %v386 = vld [vmem:[%s6 + $0xe8] sm:$0xff]
      %v387 = vld [vmem:[%s6 + $0xf0] sm:$0xff]
      %v388 = vld [vmem:[%s6 + $0xf8] sm:$0xff]
      %v389 = vld [vmem:[%s6 + $0x100] sm:$0xff]
      %v390 = vld [vmem:[%s6 + $0x108] sm:$0xff]
      %v391 = vld [vmem:[%s6 + $0x110] sm:$0xff]
      %v392 = vld [vmem:[%s6 + $0x118] sm:$0xff]
      %v393 = vld [vmem:[%s6 + $0x120] sm:$0xff]
      %v394 = vld [vmem:[%s6 + $0x128] sm:$0xff]
      %v395 = vld [vmem:[%s6 + $0x130] sm:$0xff]
      %v396 = vld [vmem:[%s6 + $0x138] sm:$0xff]
      %v397 = vld [vmem:[%s6 + $0x140] sm:$0xff]
      %v398 = vld [vmem:[%s6 + $0x148] sm:$0xff]
      %v399 = vld [vmem:[%s6 + $0x150] sm:$0xff]
      %v400 = vld [vmem:[%s6 + $0x158] sm:$0xff]
      %v401 = vld [vmem:[%s6 + $0x160] sm:$0xff]
      %v402 = vld [vmem:[%s6 + $0x168] sm:$0xff]
      %v403 = vld [vmem:[%s6 + $0x170] sm:$0xff]
      %v404 = vld [vmem:[%s6 + $0x178] sm:$0xff]
      %v405 = vld [vmem:[%s6 + $0x180] sm:$0xff]
      %v406 = vld [vmem:[%s6 + $0x188] sm:$0xff]
      %v407 = vld [vmem:[%s6 + $0x190] sm:$0xff]
      %v408 = vld [vmem:[%s6 + $0x198] sm:$0xff]
      %v409 = vld [vmem:[%s6 + $0x1a0] sm:$0xff]
      %v410 = vld [vmem:[%s6 + $0x1a8] sm:$0xff]
      %v411 = vld [vmem:[%s6 + $0x1b0] sm:$0xff]
      %v412 = vld [vmem:[%s6 + $0x1b8] sm:$0xff]
      %v413 = vld [vmem:[%s6 + $0x1c0] sm:$0xff]
      %v414 = vld [vmem:[%s6 + $0x1c8] sm:$0xff]
      %v415 = vld [vmem:[%s6 + $0x1d0] sm:$0xff]
      %v416 = vld [vmem:[%s6 + $0x1d8] sm:$0xff]
      %v417 = vld [vmem:[%s6 + $0x1e0] sm:$0xff]
      %v418 = vld [vmem:[%s6 + $0x1e8] sm:$0xff]
      %v419 = vld [vmem:[%s6 + $0x1f0] sm:$0xff]
      %v420 = vld [vmem:[%s6 + $0x1f8] sm:$0xff]
      %v421 = vld [vmem:[%s6 + $0x200] sm:$0xff]
      %v422 = vld [vmem:[%s6 + $0x208] sm:$0xff]
      %v423 = vld [vmem:[%s6 + $0x210] sm:$0xff]
      %v424 = vld [vmem:[%s6 + $0x218] sm:$0xff]
      %v425 = vld [vmem:[%s6 + $0x220] sm:$0xff]
      %v426 = vld [vmem:[%s6 + $0x228] sm:$0xff]
      %v427 = vld [vmem:[%s6 + $0x230] sm:$0xff]
      %v428 = vld [vmem:[%s6 + $0x238] sm:$0xff]
      %vm429 = vcmask 293888
      %v431 = vsel %vm429, %v341, 0
      %v434 = vsel %vm429, %v342, 0
      %v437 = vsel %vm429, %v343, 0
      %v440 = vsel %vm429, %v344, 0
      %v443 = vsel %vm429, %v345, 0
      %v446 = vsel %vm429, %v346, 0
      %v449 = vsel %vm429, %v347, 0
      %v452 = vsel %vm429, %v348, 0
      %vm454 = vcmask 1043456
      %v456 = vsel %vm454, %v333, 0
      %v459 = vsel %vm454, %v334, 0
      %v462 = vsel %vm454, %v335, 0
      %v465 = vsel %vm454, %v336, 0
      %v468 = vsel %vm454, %v337, 0
      %470 = vmatprep.subr.mxu0 0.0
      %471 = vmatpush1.msra.mxu0 0.0
      %472 = vmatprep.subr.mxu0 0.0
      %473 = vmatpush1.msra.mxu0 0.0
      %474 = vmatprep.subr.mxu0 0.0
      %475 = vmatpush1.msra.mxu0 0.0
      %476 = vmatprep.subr.mxu0 0.0
      %477 = vmatpush1.msra.mxu0 0.0
      %478 = vmatprep.subr.mxu0 0.0
      %479 = vmatpush1.msra.mxu0 0.0
      %480 = vmatprep.subr.mxu0 0.0
      %481 = vmatpush1.msra.mxu0 0.0
      %482 = vmatprep.subr.mxu0 0.0
      %483 = vmatpush1.msra.mxu0 0.0
      %484 = vmatprep.subr.mxu0 0.0
      %485 = vmatpush1.msra.mxu0 0.0
      %486 = vmatprep.subr.mxu0 0.0
      %487 = vmatpush1.msra.mxu0 0.0
      %488 = vmatprep.subr.mxu0 0.0
      %489 = vmatpush1.msra.mxu0 0.0
      %490 = vmatprep.subr.mxu0 0.0
      %491 = vmatpush1.msra.mxu0 0.0
      %492 = vmatprep.subr.mxu0 %v459
      %493 = vmatpush1.msra.mxu0 %v456
      %494 = vmatprep.subr.mxu0 %v329
      %495 = vmatpush1.msra.mxu0 %v328
      %496 = vmatprep.subr.mxu0 %v324
      %497 = vmatpush1.msra.mxu0 %v323
      %498 = vmatprep.subr.mxu0 %v319
      %499 = vmatpush1.msra.mxu0 %v318
      %500 = vmatprep.subr.mxu0 %v314
      %501 = vmatpush1.msra.mxu0 %v313
      %502 = vmatprep.subr.mxu0 0.0
      %503 = vmatpush2.msra.mxu0 0.0
      %504 = vmatprep.subr.mxu0 0.0
      %505 = vmatpush2.msra.mxu0 0.0
      %506 = vmatprep.subr.mxu0 0.0
      %507 = vmatpush2.msra.mxu0 0.0
      %508 = vmatprep.subr.mxu0 0.0
      %509 = vmatpush2.msra.mxu0 0.0
      %510 = vmatprep.subr.mxu0 0.0
      %511 = vmatpush2.msra.mxu0 0.0
      %512 = vmatprep.subr.mxu0 0.0
      %513 = vmatpush2.msra.mxu0 0.0
      %514 = vmatprep.subr.mxu0 0.0
      %515 = vmatpush2.msra.mxu0 0.0
      %516 = vmatprep.subr.mxu0 0.0
      %517 = vmatpush2.msra.mxu0 0.0
      %518 = vmatprep.subr.mxu0 0.0
      %519 = vmatpush2.msra.mxu0 0.0
      %520 = vmatprep.subr.mxu0 0.0
      %521 = vmatpush2.msra.mxu0 0.0
      %522 = vmatprep.subr.mxu0 0.0
      %523 = vmatpush2.msra.mxu0 0.0
      %524 = vmatprep.subr.mxu0 0.0
      %525 = vmatpush2.msra.mxu0 0.0
      %526 = vmatprep.subr.mxu0 0.0
      %527 = vmatpush2.msra.mxu0 0.0
      %528 = vmatprep.subr.mxu0 0.0
      %529 = vmatpush2.msra.mxu0 0.0
      %530 = vmatprep.subr.mxu0 0.0
      %531 = vmatpush2.msra.mxu0 0.0
      %532 = vmatprep.subr.mxu0 0.0
      %533 = vmatpush2.msra.mxu0 0.0
      %534 = vmatprep.mubr.f32.mxu0 0.0
      %535 = vmatmul.mubr.f32.gmra.mxu0 %v431
      %v536 = vpop.f32.mrf.mxu0
      %v537 = vadd.f32 0.0, %v536
      %v538 = vpop.f32.mrf.mxu0
      %v539 = vadd.f32 0.0, %v538
      %540 = vmatprep.mubr.f32.mxu0 0.0
      %541 = vmatmul.mubr.f32.gmra.mxu0 %v434
      %v542 = vpop.f32.mrf.mxu0
      %v543 = vadd.f32 0.0, %v542
      %v544 = vpop.f32.mrf.mxu0
      %v545 = vadd.f32 0.0, %v544
      %546 = vmatprep.mubr.f32.mxu0 0.0
      %547 = vmatmul.mubr.f32.gmra.mxu0 %v437
      %v548 = vpop.f32.mrf.mxu0
      %v549 = vadd.f32 0.0, %v548
      %v550 = vpop.f32.mrf.mxu0
      %v551 = vadd.f32 0.0, %v550
      %552 = vmatprep.mubr.f32.mxu0 0.0
      %553 = vmatmul.mubr.f32.gmra.mxu0 %v440
      %v554 = vpop.f32.mrf.mxu0
      %v555 = vadd.f32 0.0, %v554
      %v556 = vpop.f32.mrf.mxu0
      %v557 = vadd.f32 0.0, %v556
      %558 = vmatprep.mubr.f32.mxu0 0.0
      %559 = vmatmul.mubr.f32.gmra.mxu0 %v443
      %v560 = vpop.f32.mrf.mxu0
      %v561 = vadd.f32 0.0, %v560
      %v562 = vpop.f32.mrf.mxu0
      %v563 = vadd.f32 0.0, %v562
      %564 = vmatprep.mubr.f32.mxu0 0.0
      %565 = vmatmul.mubr.f32.gmra.mxu0 %v446
      %v566 = vpop.f32.mrf.mxu0
      %v567 = vadd.f32 0.0, %v566
      %v568 = vpop.f32.mrf.mxu0
      %v569 = vadd.f32 0.0, %v568
      %570 = vmatprep.mubr.f32.mxu0 0.0
      %571 = vmatmul.mubr.f32.gmra.mxu0 %v449
      %v572 = vpop.f32.mrf.mxu0
      %v573 = vadd.f32 0.0, %v572
      %v574 = vpop.f32.mrf.mxu0
      %v575 = vadd.f32 0.0, %v574
      %576 = vmatprep.mubr.f32.mxu0 0.0
      %577 = vmatmul.mubr.f32.gmra.mxu0 %v452
      %v578 = vpop.f32.mrf.mxu0
      %v579 = vadd.f32 0.0, %v578
      %v580 = vpop.f32.mrf.mxu0
      %v581 = vadd.f32 0.0, %v580
      %582 = vdwg.mxu0
      %583 = vmatprep.subr.mxu0 0.0
      %584 = vmatpush1.msra.mxu0 0.0
      %585 = vmatprep.subr.mxu0 0.0
      %586 = vmatpush1.msra.mxu0 0.0
      %587 = vmatprep.subr.mxu0 0.0
      %588 = vmatpush1.msra.mxu0 0.0
      %589 = vmatprep.subr.mxu0 0.0
      %590 = vmatpush1.msra.mxu0 0.0
      %591 = vmatprep.subr.mxu0 0.0
      %592 = vmatpush1.msra.mxu0 0.0
      %593 = vmatprep.subr.mxu0 0.0
      %594 = vmatpush1.msra.mxu0 0.0
      %595 = vmatprep.subr.mxu0 0.0
      %596 = vmatpush1.msra.mxu0 0.0
      %597 = vmatprep.subr.mxu0 0.0
      %598 = vmatpush1.msra.mxu0 0.0
      %599 = vmatprep.subr.mxu0 0.0
      %600 = vmatpush1.msra.mxu0 0.0
      %601 = vmatprep.subr.mxu0 0.0
      %602 = vmatpush1.msra.mxu0 0.0
      %603 = vmatprep.subr.mxu0 0.0
      %604 = vmatpush1.msra.mxu0 0.0
      %605 = vmatprep.subr.mxu0 %v465
      %606 = vmatpush1.msra.mxu0 %v462
      %607 = vmatprep.subr.mxu0 %v331
      %608 = vmatpush1.msra.mxu0 %v330
      %609 = vmatprep.subr.mxu0 %v326
      %610 = vmatpush1.msra.mxu0 %v325
      %611 = vmatprep.subr.mxu0 %v321
      %612 = vmatpush1.msra.mxu0 %v320
      %613 = vmatprep.subr.mxu0 %v316
      %614 = vmatpush1.msra.mxu0 %v315
      %615 = vmatprep.subr.mxu0 0.0
      %616 = vmatpush2.msra.mxu0 0.0
      %617 = vmatprep.subr.mxu0 0.0
      %618 = vmatpush2.msra.mxu0 0.0
      %619 = vmatprep.subr.mxu0 0.0
      %620 = vmatpush2.msra.mxu0 0.0
      %621 = vmatprep.subr.mxu0 0.0
      %622 = vmatpush2.msra.mxu0 0.0
      %623 = vmatprep.subr.mxu0 0.0
      %624 = vmatpush2.msra.mxu0 0.0
      %625 = vmatprep.subr.mxu0 0.0
      %626 = vmatpush2.msra.mxu0 0.0
      %627 = vmatprep.subr.mxu0 0.0
      %628 = vmatpush2.msra.mxu0 0.0
      %629 = vmatprep.subr.mxu0 0.0
      %630 = vmatpush2.msra.mxu0 0.0
      %631 = vmatprep.subr.mxu0 0.0
      %632 = vmatpush2.msra.mxu0 0.0
      %633 = vmatprep.subr.mxu0 0.0
      %634 = vmatpush2.msra.mxu0 0.0
      %635 = vmatprep.subr.mxu0 0.0
      %636 = vmatpush2.msra.mxu0 0.0
      %637 = vmatprep.subr.mxu0 0.0
      %638 = vmatpush2.msra.mxu0 0.0
      %639 = vmatprep.subr.mxu0 0.0
      %640 = vmatpush2.msra.mxu0 0.0
      %641 = vmatprep.subr.mxu0 0.0
      %642 = vmatpush2.msra.mxu0 0.0
      %643 = vmatprep.subr.mxu0 0.0
      %644 = vmatpush2.msra.mxu0 0.0
      %645 = vmatprep.subr.mxu0 0.0
      %646 = vmatpush2.msra.mxu0 0.0
      %647 = vmatprep.mubr.f32.mxu0 0.0
      %648 = vmatmul.mubr.f32.gmra.mxu0 %v431
      %v649 = vpop.f32.mrf.mxu0
      %v650 = vadd.f32 0.0, %v649
      %v651 = vpop.f32.mrf.mxu0
      %v652 = vadd.f32 0.0, %v651
      %653 = vmatprep.mubr.f32.mxu0 0.0
      %654 = vmatmul.mubr.f32.gmra.mxu0 %v434
      %v655 = vpop.f32.mrf.mxu0
      %v656 = vadd.f32 0.0, %v655
      %v657 = vpop.f32.mrf.mxu0
      %v658 = vadd.f32 0.0, %v657
      %659 = vmatprep.mubr.f32.mxu0 0.0
      %660 = vmatmul.mubr.f32.gmra.mxu0 %v437
      %v661 = vpop.f32.mrf.mxu0
      %v662 = vadd.f32 0.0, %v661
      %v663 = vpop.f32.mrf.mxu0
      %v664 = vadd.f32 0.0, %v663
      %665 = vmatprep.mubr.f32.mxu0 0.0
      %666 = vmatmul.mubr.f32.gmra.mxu0 %v440
      %v667 = vpop.f32.mrf.mxu0
      %v668 = vadd.f32 0.0, %v667
      %v669 = vpop.f32.mrf.mxu0
      %v670 = vadd.f32 0.0, %v669
      %671 = vmatprep.mubr.f32.mxu0 0.0
      %672 = vmatmul.mubr.f32.gmra.mxu0 %v443
      %v673 = vpop.f32.mrf.mxu0
      %v674 = vadd.f32 0.0, %v673
      %v675 = vpop.f32.mrf.mxu0
      %v676 = vadd.f32 0.0, %v675
      %677 = vmatprep.mubr.f32.mxu0 0.0
      %678 = vmatmul.mubr.f32.gmra.mxu0 %v446
      %v679 = vpop.f32.mrf.mxu0
      %v680 = vadd.f32 0.0, %v679
      %v681 = vpop.f32.mrf.mxu0
      %v682 = vadd.f32 0.0, %v681
      %683 = vmatprep.mubr.f32.mxu0 0.0
      %684 = vmatmul.mubr.f32.gmra.mxu0 %v449
      %v685 = vpop.f32.mrf.mxu0
      %v686 = vadd.f32 0.0, %v685
      %v687 = vpop.f32.mrf.mxu0
      %v688 = vadd.f32 0.0, %v687
      %689 = vmatprep.mubr.f32.mxu0 0.0
      %690 = vmatmul.mubr.f32.gmra.mxu0 %v452
      %v691 = vpop.f32.mrf.mxu0
      %v692 = vadd.f32 0.0, %v691
      %v693 = vpop.f32.mrf.mxu0
      %v694 = vadd.f32 0.0, %v693
      %695 = vdwg.mxu0
      %696 = vmatprep.subr.mxu0 0.0
      %697 = vmatpush1.msra.mxu0 0.0
      %698 = vmatprep.subr.mxu0 0.0
      %699 = vmatpush1.msra.mxu0 0.0
      %700 = vmatprep.subr.mxu0 0.0
      %701 = vmatpush1.msra.mxu0 0.0
      %702 = vmatprep.subr.mxu0 0.0
      %703 = vmatpush1.msra.mxu0 0.0
      %704 = vmatprep.subr.mxu0 0.0
      %705 = vmatpush1.msra.mxu0 0.0
      %706 = vmatprep.subr.mxu0 0.0
      %707 = vmatpush1.msra.mxu0 0.0
      %708 = vmatprep.subr.mxu0 0.0
      %709 = vmatpush1.msra.mxu0 0.0
      %710 = vmatprep.subr.mxu0 0.0
      %711 = vmatpush1.msra.mxu0 0.0
      %712 = vmatprep.subr.mxu0 0.0
      %713 = vmatpush1.msra.mxu0 0.0
      %714 = vmatprep.subr.mxu0 0.0
      %715 = vmatpush1.msra.mxu0 0.0
      %716 = vmatprep.subr.mxu0 0.0
      %717 = vmatpush1.msra.mxu0 0.0
      %718 = vmatprep.subr.mxu0 0.0
      %719 = vmatpush1.msra.mxu0 %v468
      %720 = vmatprep.subr.mxu0 0.0
      %721 = vmatpush1.msra.mxu0 %v332
      %722 = vmatprep.subr.mxu0 0.0
      %723 = vmatpush1.msra.mxu0 %v327
      %724 = vmatprep.subr.mxu0 0.0
      %725 = vmatpush1.msra.mxu0 %v322
      %726 = vmatprep.subr.mxu0 0.0
      %727 = vmatpush1.msra.mxu0 %v317
      %728 = vmatprep.subr.mxu0 0.0
      %729 = vmatpush2.msra.mxu0 0.0
      %730 = vmatprep.subr.mxu0 0.0
      %731 = vmatpush2.msra.mxu0 0.0
      %732 = vmatprep.subr.mxu0 0.0
      %733 = vmatpush2.msra.mxu0 0.0
      %734 = vmatprep.subr.mxu0 0.0
      %735 = vmatpush2.msra.mxu0 0.0
      %736 = vmatprep.subr.mxu0 0.0
      %737 = vmatpush2.msra.mxu0 0.0
      %738 = vmatprep.subr.mxu0 0.0
      %739 = vmatpush2.msra.mxu0 0.0
      %740 = vmatprep.subr.mxu0 0.0
      %741 = vmatpush2.msra.mxu0 0.0
      %742 = vmatprep.subr.mxu0 0.0
      %743 = vmatpush2.msra.mxu0 0.0
      %744 = vmatprep.subr.mxu0 0.0
      %745 = vmatpush2.msra.mxu0 0.0
      %746 = vmatprep.subr.mxu0 0.0
      %747 = vmatpush2.msra.mxu0 0.0
      %748 = vmatprep.subr.mxu0 0.0
      %749 = vmatpush2.msra.mxu0 0.0
      %750 = vmatprep.subr.mxu0 0.0
      %751 = vmatpush2.msra.mxu0 0.0
      %752 = vmatprep.subr.mxu0 0.0
      %753 = vmatpush2.msra.mxu0 0.0
      %754 = vmatprep.subr.mxu0 0.0
      %755 = vmatpush2.msra.mxu0 0.0
      %756 = vmatprep.subr.mxu0 0.0
      %757 = vmatpush2.msra.mxu0 0.0
      %758 = vmatprep.subr.mxu0 0.0
      %759 = vmatpush2.msra.mxu0 0.0
      %760 = vmatprep.mubr.f32.mxu0 0.0
      %761 = vmatmul.mubr.f32.gmra.mxu0 %v431
      %v762 = vpop.f32.mrf.mxu0
      %v763 = vadd.f32 0.0, %v762
      %v764 = vpop.f32.mrf.mxu0
      %765 = vmatprep.mubr.f32.mxu0 0.0
      %766 = vmatmul.mubr.f32.gmra.mxu0 %v434
      %v767 = vpop.f32.mrf.mxu0
      %v768 = vadd.f32 0.0, %v767
      %v769 = vpop.f32.mrf.mxu0
      %770 = vmatprep.mubr.f32.mxu0 0.0
      %771 = vmatmul.mubr.f32.gmra.mxu0 %v437
      %v772 = vpop.f32.mrf.mxu0
      %v773 = vadd.f32 0.0, %v772
      %v774 = vpop.f32.mrf.mxu0
      %775 = vmatprep.mubr.f32.mxu0 0.0
      %776 = vmatmul.mubr.f32.gmra.mxu0 %v440
      %v777 = vpop.f32.mrf.mxu0
      %v778 = vadd.f32 0.0, %v777
      %v779 = vpop.f32.mrf.mxu0
      %780 = vmatprep.mubr.f32.mxu0 0.0
      %781 = vmatmul.mubr.f32.gmra.mxu0 %v443
      %v782 = vpop.f32.mrf.mxu0
      %v783 = vadd.f32 0.0, %v782
      %v784 = vpop.f32.mrf.mxu0
      %785 = vmatprep.mubr.f32.mxu0 0.0
      %786 = vmatmul.mubr.f32.gmra.mxu0 %v446
      %v787 = vpop.f32.mrf.mxu0
      %v788 = vadd.f32 0.0, %v787
      %v789 = vpop.f32.mrf.mxu0
      %790 = vmatprep.mubr.f32.mxu0 0.0
      %791 = vmatmul.mubr.f32.gmra.mxu0 %v449
      %v792 = vpop.f32.mrf.mxu0
      %v793 = vadd.f32 0.0, %v792
      %v794 = vpop.f32.mrf.mxu0
      %795 = vmatprep.mubr.f32.mxu0 0.0
      %796 = vmatmul.mubr.f32.gmra.mxu0 %v452
      %v797 = vpop.f32.mrf.mxu0
      %v798 = vadd.f32 0.0, %v797
      %v799 = vpop.f32.mrf.mxu0
      %800 = vdwg.mxu0
      %v802 = vlaneseq
      %v803 = vshrl.u32 %v802, 7
      %v804 = vsub.s32 0, %v803
      %v805 = vrot.slane %v338, %v804
      %v806 = vlaneseq
      %v807 = vshrl.u32 %v806, 7
      %v808 = vsub.s32 1, %v807
      %v809 = vrot.slane %v338, %v808
      %v810 = vlaneseq
      %v811 = vshrl.u32 %v810, 7
      %v812 = vsub.s32 2, %v811
      %v813 = vrot.slane %v338, %v812
      %v814 = vlaneseq
      %v815 = vshrl.u32 %v814, 7
      %v816 = vsub.s32 3, %v815
      %v817 = vrot.slane %v338, %v816
      %v818 = vlaneseq
      %v819 = vshrl.u32 %v818, 7
      %v820 = vsub.s32 4, %v819
      %v821 = vrot.slane %v338, %v820
      %828 = vset.pattern.permute.xlu0 0
      %829 = vperm.xlu0 %828, %v340
      %v830 = vpop.permute.xlu0 %829
      %v832 = vsub.f32 %v805, %v830
      %v833 = vsub.f32 %v809, %v830
      %v834 = vsub.f32 %v813, %v830
      %v835 = vsub.f32 %v817, %v830
      %v836 = vsub.f32 %v821, %v830
      %v837 = vmul.f32 %v832, -0.5
      %v838 = vmul.f32 %v833, -0.5
      %v839 = vmul.f32 %v834, -0.5
      %v840 = vmul.f32 %v835, -0.5
      %v841 = vmul.f32 %v836, -0.5
      %v842 = vmul.f32 %v837, %v832
      %v843 = vmul.f32 %v838, %v833
      %v844 = vmul.f32 %v839, %v834
      %v845 = vmul.f32 %v840, %v835
      %v846 = vmul.f32 %v841, %v836
      %847 = vset.pattern.permute.xlu0 2
      %848 = vperm.xlu0 %847, %v340
      %v849 = vpop.permute.xlu0 %848
      %v851 = vmul.f32 %v842, %v849
      %v852 = vmul.f32 %v843, %v849
      %v853 = vmul.f32 %v844, %v849
      %v854 = vmul.f32 %v845, %v849
      %v855 = vmul.f32 %v846, %v849
      %v856 = vmul.f32 %v851, 1.442695
      %v857 = vpow.pop %v856
      %v858 = vmul.f32 %v852, 1.442695
      %v859 = vpow.pop %v858
      %v860 = vmul.f32 %v853, 1.442695
      %v861 = vpow.pop %v860
      %v862 = vmul.f32 %v854, 1.442695
      %v863 = vpow.pop %v862
      %v864 = vmul.f32 %v855, 1.442695
      %v865 = vpow.pop %v864
      %v867 = vlaneseq
      %v868 = vshrl.u32 %v867, 7
      %v869 = vsub.s32 0, %v868
      %v870 = vrot.slane %v339, %v869
      %v871 = vlaneseq
      %v872 = vshrl.u32 %v871, 7
      %v873 = vsub.s32 1, %v872
      %v874 = vrot.slane %v339, %v873
      %v875 = vlaneseq
      %v876 = vshrl.u32 %v875, 7
      %v877 = vsub.s32 2, %v876
      %v878 = vrot.slane %v339, %v877
      %v879 = vlaneseq
      %v880 = vshrl.u32 %v879, 7
      %v881 = vsub.s32 3, %v880
      %v882 = vrot.slane %v339, %v881
      %v883 = vlaneseq
      %v884 = vshrl.u32 %v883, 7
      %v885 = vsub.s32 4, %v884
      %v886 = vrot.slane %v339, %v885
      %892 = vset.pattern.permute.xlu0 1
      %893 = vperm.xlu0 %892, %v340
      %v894 = vpop.permute.xlu0 %893
      %v896 = vsub.f32 %v870, %v894
      %v897 = vsub.f32 %v874, %v894
      %v898 = vsub.f32 %v878, %v894
      %v899 = vsub.f32 %v882, %v894
      %v900 = vsub.f32 %v886, %v894
      %v901 = vand.u32 2147483647, %v896
      %v902 = vand.u32 2147483647, %v897
      %v903 = vand.u32 2147483647, %v898
      %v904 = vand.u32 2147483647, %v899
      %v905 = vand.u32 2147483647, %v900
      %v906 = vsub.f32 6.2831855, %v901
      %v907 = vsub.f32 6.2831855, %v902
      %v908 = vsub.f32 6.2831855, %v903
      %v909 = vsub.f32 6.2831855, %v904
      %v910 = vsub.f32 6.2831855, %v905
      %v911 = vand.u32 2147483647, %v906
      %v912 = vand.u32 2147483647, %v907
      %v913 = vand.u32 2147483647, %v908
      %v914 = vand.u32 2147483647, %v909
      %v915 = vand.u32 2147483647, %v910
      %v916 = vmin.f32 %v901, %v911
      %v917 = vmin.f32 %v902, %v912
      %v918 = vmin.f32 %v903, %v913
      %v919 = vmin.f32 %v904, %v914
      %v920 = vmin.f32 %v905, %v915
      %v921 = vmul.f32 %v916, -0.5
      %v922 = vmul.f32 %v917, -0.5
      %v923 = vmul.f32 %v918, -0.5
      %v924 = vmul.f32 %v919, -0.5
      %v925 = vmul.f32 %v920, -0.5
      %v926 = vmul.f32 %v921, %v916
      %v927 = vmul.f32 %v922, %v917
      %v928 = vmul.f32 %v923, %v918
      %v929 = vmul.f32 %v924, %v919
      %v930 = vmul.f32 %v925, %v920
      %931 = vset.pattern.permute.xlu0 3
      %932 = vperm.xlu0 %931, %v340
      %v933 = vpop.permute.xlu0 %932
      %v935 = vmul.f32 %v926, %v933
      %v936 = vmul.f32 %v927, %v933
      %v937 = vmul.f32 %v928, %v933
      %v938 = vmul.f32 %v929, %v933
      %v939 = vmul.f32 %v930, %v933
      %v940 = vmul.f32 %v935, 1.442695
      %v941 = vpow.pop %v940
      %v942 = vmul.f32 %v936, 1.442695
      %v943 = vpow.pop %v942
      %v944 = vmul.f32 %v937, 1.442695
      %v945 = vpow.pop %v944
      %v946 = vmul.f32 %v938, 1.442695
      %v947 = vpow.pop %v946
      %v948 = vmul.f32 %v939, 1.442695
      %v949 = vpow.pop %v948
      %v950 = vmul.f32 %v857, %v941
      %v951 = vmul.f32 %v859, %v943
      %v952 = vmul.f32 %v861, %v945
      %v953 = vmul.f32 %v863, %v947
      %v954 = vmul.f32 %v865, %v949
      %v955 = vrot.slane %v950, 4
      %v956 = vadd.f32 %v950, %v955
      %v957 = vrot.slane %v956, 2
      %v958 = vadd.f32 %v956, %v957
      %v959 = vrot.slane %v958, 1
      %v960 = vadd.f32 %v958, %v959
      %v961 = vrot.slane %v951, 4
      %v962 = vadd.f32 %v951, %v961
      %v963 = vrot.slane %v962, 2
      %v964 = vadd.f32 %v962, %v963
      %v965 = vrot.slane %v964, 1
      %v966 = vadd.f32 %v964, %v965
      %v967 = vrot.slane %v952, 4
      %v968 = vadd.f32 %v952, %v967
      %v969 = vrot.slane %v968, 2
      %v970 = vadd.f32 %v968, %v969
      %v971 = vrot.slane %v970, 1
      %v972 = vadd.f32 %v970, %v971
      %v973 = vrot.slane %v953, 4
      %v974 = vadd.f32 %v953, %v973
      %v975 = vrot.slane %v974, 2
      %v976 = vadd.f32 %v974, %v975
      %v977 = vrot.slane %v976, 1
      %v978 = vadd.f32 %v976, %v977
      %vm979 = vcmask 523264
      %v980 = vsel %vm979, %v954, 0.0
      %v981 = vrot.slane %v980, 4
      %v982 = vadd.f32 %v980, %v981
      %v983 = vrot.slane %v982, 2
      %v984 = vadd.f32 %v982, %v983
      %v985 = vrot.slane %v984, 1
      %v986 = vadd.f32 %v984, %v985
      %v987 = vadd.f32 %v960, 1e-20
      %v988 = vadd.f32 %v966, 1e-20
      %v989 = vadd.f32 %v972, 1e-20
      %v990 = vadd.f32 %v978, 1e-20
      %v991 = vadd.f32 %v986, 1e-20
      %v992 = vrcp.pop %v987
      %v993 = vrcp.pop %v988
      %v994 = vrcp.pop %v989
      %v995 = vrcp.pop %v990
      %v996 = vrcp.pop %v991
      %v997 = vmul.f32 %v950, %v992
      %v998 = vmul.f32 %v951, %v993
      %v999 = vmul.f32 %v952, %v994
      %v1000 = vmul.f32 %v953, %v995
      %v1001 = vmul.f32 %v954, %v996
      %vm1002 = vcmask 64512
      %v1004 = vsel %vm1002, %v349, 0
      %v1007 = vsel %vm1002, %v350, 0
      %v1010 = vsel %vm1002, %v351, 0
      %v1013 = vsel %vm1002, %v352, 0
      %v1016 = vsel %vm1002, %v353, 0
      %v1019 = vsel %vm1002, %v354, 0
      %v1022 = vsel %vm1002, %v355, 0
      %v1025 = vsel %vm1002, %v356, 0
      %1027 = vmatprep.subr.mxu0 0.0
      %1028 = vmatpush1.msra.mxu0 0.0
      %1029 = vmatprep.subr.mxu0 0.0
      %1030 = vmatpush1.msra.mxu0 0.0
      %1031 = vmatprep.subr.mxu0 0.0
      %1032 = vmatpush1.msra.mxu0 0.0
      %1033 = vmatprep.subr.mxu0 0.0
      %1034 = vmatpush1.msra.mxu0 0.0
      %1035 = vmatprep.subr.mxu0 0.0
      %1036 = vmatpush1.msra.mxu0 0.0
      %1037 = vmatprep.subr.mxu0 0.0
      %1038 = vmatpush1.msra.mxu0 0.0
      %1039 = vmatprep.subr.mxu0 0.0
      %1040 = vmatpush1.msra.mxu0 0.0
      %1041 = vmatprep.subr.mxu0 0.0
      %1042 = vmatpush1.msra.mxu0 0.0
      %1043 = vmatprep.subr.mxu0 0.0
      %1044 = vmatpush1.msra.mxu0 0.0
      %1045 = vmatprep.subr.mxu0 0.0
      %1046 = vmatpush1.msra.mxu0 0.0
      %1047 = vmatprep.subr.mxu0 0.0
      %1048 = vmatpush1.msra.mxu0 0.0
      %1049 = vmatprep.subr.mxu0 0.0
      %1050 = vmatpush1.msra.mxu0 0.0
      %1051 = vmatprep.subr.mxu0 0.0
      %1052 = vmatpush1.msra.mxu0 0.0
      %1053 = vmatprep.subr.mxu0 0.0
      %1054 = vmatpush1.msra.mxu0 0.0
      %1055 = vmatprep.subr.mxu0 0.0
      %1056 = vmatpush1.msra.mxu0 0.0
      %1057 = vmatprep.subr.mxu0 %v998
      %1058 = vmatpush1.msra.mxu0 %v997
      %1059 = vmatprep.subr.mxu0 0.0
      %1060 = vmatpush2.msra.mxu0 0.0
      %1061 = vmatprep.subr.mxu0 0.0
      %1062 = vmatpush2.msra.mxu0 0.0
      %1063 = vmatprep.subr.mxu0 0.0
      %1064 = vmatpush2.msra.mxu0 0.0
      %1065 = vmatprep.subr.mxu0 0.0
      %1066 = vmatpush2.msra.mxu0 0.0
      %1067 = vmatprep.subr.mxu0 0.0
      %1068 = vmatpush2.msra.mxu0 0.0
      %1069 = vmatprep.subr.mxu0 0.0
      %1070 = vmatpush2.msra.mxu0 0.0
      %1071 = vmatprep.subr.mxu0 0.0
      %1072 = vmatpush2.msra.mxu0 0.0
      %1073 = vmatprep.subr.mxu0 0.0
      %1074 = vmatpush2.msra.mxu0 0.0
      %1075 = vmatprep.subr.mxu0 0.0
      %1076 = vmatpush2.msra.mxu0 0.0
      %1077 = vmatprep.subr.mxu0 0.0
      %1078 = vmatpush2.msra.mxu0 0.0
      %1079 = vmatprep.subr.mxu0 0.0
      %1080 = vmatpush2.msra.mxu0 0.0
      %1081 = vmatprep.subr.mxu0 0.0
      %1082 = vmatpush2.msra.mxu0 0.0
      %1083 = vmatprep.subr.mxu0 0.0
      %1084 = vmatpush2.msra.mxu0 0.0
      %1085 = vmatprep.subr.mxu0 0.0
      %1086 = vmatpush2.msra.mxu0 0.0
      %1087 = vmatprep.subr.mxu0 0.0
      %1088 = vmatpush2.msra.mxu0 0.0
      %1089 = vmatprep.subr.mxu0 0.0
      %1090 = vmatpush2.msra.mxu0 0.0
      %1091 = vmatprep.mubr.f32.mxu0 0.0
      %1092 = vmatmul.mubr.f32.gmra.mxu0 %v1004
      %v1093 = vpop.f32.mrf.mxu0
      %v1094 = vadd.f32 0.0, %v1093
      %v1095 = vpop.f32.mrf.mxu0
      %v1096 = vadd.f32 0.0, %v1095
      %1097 = vmatprep.mubr.f32.mxu0 0.0
      %1098 = vmatmul.mubr.f32.gmra.mxu0 %v1007
      %v1099 = vpop.f32.mrf.mxu0
      %v1100 = vadd.f32 0.0, %v1099
      %v1101 = vpop.f32.mrf.mxu0
      %v1102 = vadd.f32 0.0, %v1101
      %1103 = vmatprep.mubr.f32.mxu0 0.0
      %1104 = vmatmul.mubr.f32.gmra.mxu0 %v1010
      %v1105 = vpop.f32.mrf.mxu0
      %v1106 = vadd.f32 0.0, %v1105
      %v1107 = vpop.f32.mrf.mxu0
      %v1108 = vadd.f32 0.0, %v1107
      %1109 = vmatprep.mubr.f32.mxu0 0.0
      %1110 = vmatmul.mubr.f32.gmra.mxu0 %v1013
      %v1111 = vpop.f32.mrf.mxu0
      %v1112 = vadd.f32 0.0, %v1111
      %v1113 = vpop.f32.mrf.mxu0
      %v1114 = vadd.f32 0.0, %v1113
      %1115 = vmatprep.mubr.f32.mxu0 0.0
      %1116 = vmatmul.mubr.f32.gmra.mxu0 %v1016
      %v1117 = vpop.f32.mrf.mxu0
      %v1118 = vadd.f32 0.0, %v1117
      %v1119 = vpop.f32.mrf.mxu0
      %v1120 = vadd.f32 0.0, %v1119
      %1121 = vmatprep.mubr.f32.mxu0 0.0
      %1122 = vmatmul.mubr.f32.gmra.mxu0 %v1019
      %v1123 = vpop.f32.mrf.mxu0
      %v1124 = vadd.f32 0.0, %v1123
      %v1125 = vpop.f32.mrf.mxu0
      %v1126 = vadd.f32 0.0, %v1125
      %1127 = vmatprep.mubr.f32.mxu0 0.0
      %1128 = vmatmul.mubr.f32.gmra.mxu0 %v1022
      %v1129 = vpop.f32.mrf.mxu0
      %v1130 = vadd.f32 0.0, %v1129
      %v1131 = vpop.f32.mrf.mxu0
      %v1132 = vadd.f32 0.0, %v1131
      %1133 = vmatprep.mubr.f32.mxu0 0.0
      %1134 = vmatmul.mubr.f32.gmra.mxu0 %v1025
      %v1135 = vpop.f32.mrf.mxu0
      %v1136 = vadd.f32 0.0, %v1135
      %v1137 = vpop.f32.mrf.mxu0
      %v1138 = vadd.f32 0.0, %v1137
      %1139 = vdwg.mxu0
      %1140 = vmatprep.subr.mxu0 0.0
      %1141 = vmatpush1.msra.mxu0 0.0
      %1142 = vmatprep.subr.mxu0 0.0
      %1143 = vmatpush1.msra.mxu0 0.0
      %1144 = vmatprep.subr.mxu0 0.0
      %1145 = vmatpush1.msra.mxu0 0.0
      %1146 = vmatprep.subr.mxu0 0.0
      %1147 = vmatpush1.msra.mxu0 0.0
      %1148 = vmatprep.subr.mxu0 0.0
      %1149 = vmatpush1.msra.mxu0 0.0
      %1150 = vmatprep.subr.mxu0 0.0
      %1151 = vmatpush1.msra.mxu0 0.0
      %1152 = vmatprep.subr.mxu0 0.0
      %1153 = vmatpush1.msra.mxu0 0.0
      %1154 = vmatprep.subr.mxu0 0.0
      %1155 = vmatpush1.msra.mxu0 0.0
      %1156 = vmatprep.subr.mxu0 0.0
      %1157 = vmatpush1.msra.mxu0 0.0
      %1158 = vmatprep.subr.mxu0 0.0
      %1159 = vmatpush1.msra.mxu0 0.0
      %1160 = vmatprep.subr.mxu0 0.0
      %1161 = vmatpush1.msra.mxu0 0.0
      %1162 = vmatprep.subr.mxu0 0.0
      %1163 = vmatpush1.msra.mxu0 0.0
      %1164 = vmatprep.subr.mxu0 0.0
      %1165 = vmatpush1.msra.mxu0 0.0
      %1166 = vmatprep.subr.mxu0 0.0
      %1167 = vmatpush1.msra.mxu0 0.0
      %1168 = vmatprep.subr.mxu0 0.0
      %1169 = vmatpush1.msra.mxu0 0.0
      %1170 = vmatprep.subr.mxu0 %v1000
      %1171 = vmatpush1.msra.mxu0 %v999
      %1172 = vmatprep.subr.mxu0 0.0
      %1173 = vmatpush2.msra.mxu0 0.0
      %1174 = vmatprep.subr.mxu0 0.0
      %1175 = vmatpush2.msra.mxu0 0.0
      %1176 = vmatprep.subr.mxu0 0.0
      %1177 = vmatpush2.msra.mxu0 0.0
      %1178 = vmatprep.subr.mxu0 0.0
      %1179 = vmatpush2.msra.mxu0 0.0
      %1180 = vmatprep.subr.mxu0 0.0
      %1181 = vmatpush2.msra.mxu0 0.0
      %1182 = vmatprep.subr.mxu0 0.0
      %1183 = vmatpush2.msra.mxu0 0.0
      %1184 = vmatprep.subr.mxu0 0.0
      %1185 = vmatpush2.msra.mxu0 0.0
      %1186 = vmatprep.subr.mxu0 0.0
      %1187 = vmatpush2.msra.mxu0 0.0
      %1188 = vmatprep.subr.mxu0 0.0
      %1189 = vmatpush2.msra.mxu0 0.0
      %1190 = vmatprep.subr.mxu0 0.0
      %1191 = vmatpush2.msra.mxu0 0.0
      %1192 = vmatprep.subr.mxu0 0.0
      %1193 = vmatpush2.msra.mxu0 0.0
      %1194 = vmatprep.subr.mxu0 0.0
      %1195 = vmatpush2.msra.mxu0 0.0
      %1196 = vmatprep.subr.mxu0 0.0
      %1197 = vmatpush2.msra.mxu0 0.0
      %1198 = vmatprep.subr.mxu0 0.0
      %1199 = vmatpush2.msra.mxu0 0.0
      %1200 = vmatprep.subr.mxu0 0.0
      %1201 = vmatpush2.msra.mxu0 0.0
      %1202 = vmatprep.subr.mxu0 0.0
      %1203 = vmatpush2.msra.mxu0 0.0
      %1204 = vmatprep.mubr.f32.mxu0 0.0
      %1205 = vmatmul.mubr.f32.gmra.mxu0 %v1004
      %v1206 = vpop.f32.mrf.mxu0
      %v1207 = vadd.f32 0.0, %v1206
      %v1208 = vpop.f32.mrf.mxu0
      %v1209 = vadd.f32 0.0, %v1208
      %1210 = vmatprep.mubr.f32.mxu0 0.0
      %1211 = vmatmul.mubr.f32.gmra.mxu0 %v1007
      %v1212 = vpop.f32.mrf.mxu0
      %v1213 = vadd.f32 0.0, %v1212
      %v1214 = vpop.f32.mrf.mxu0
      %v1215 = vadd.f32 0.0, %v1214
      %1216 = vmatprep.mubr.f32.mxu0 0.0
      %1217 = vmatmul.mubr.f32.gmra.mxu0 %v1010
      %v1218 = vpop.f32.mrf.mxu0
      %v1219 = vadd.f32 0.0, %v1218
      %v1220 = vpop.f32.mrf.mxu0
      %v1221 = vadd.f32 0.0, %v1220
      %1222 = vmatprep.mubr.f32.mxu0 0.0
      %1223 = vmatmul.mubr.f32.gmra.mxu0 %v1013
      %v1224 = vpop.f32.mrf.mxu0
      %v1225 = vadd.f32 0.0, %v1224
      %v1226 = vpop.f32.mrf.mxu0
      %v1227 = vadd.f32 0.0, %v1226
      %1228 = vmatprep.mubr.f32.mxu0 0.0
      %1229 = vmatmul.mubr.f32.gmra.mxu0 %v1016
      %v1230 = vpop.f32.mrf.mxu0
      %v1231 = vadd.f32 0.0, %v1230
      %v1232 = vpop.f32.mrf.mxu0
      %v1233 = vadd.f32 0.0, %v1232
      %1234 = vmatprep.mubr.f32.mxu0 0.0
      %1235 = vmatmul.mubr.f32.gmra.mxu0 %v1019
      %v1236 = vpop.f32.mrf.mxu0
      %v1237 = vadd.f32 0.0, %v1236
      %v1238 = vpop.f32.mrf.mxu0
      %v1239 = vadd.f32 0.0, %v1238
      %1240 = vmatprep.mubr.f32.mxu0 0.0
      %1241 = vmatmul.mubr.f32.gmra.mxu0 %v1022
      %v1242 = vpop.f32.mrf.mxu0
      %v1243 = vadd.f32 0.0, %v1242
      %v1244 = vpop.f32.mrf.mxu0
      %v1245 = vadd.f32 0.0, %v1244
      %1246 = vmatprep.mubr.f32.mxu0 0.0
      %1247 = vmatmul.mubr.f32.gmra.mxu0 %v1025
      %v1248 = vpop.f32.mrf.mxu0
      %v1249 = vadd.f32 0.0, %v1248
      %v1250 = vpop.f32.mrf.mxu0
      %v1251 = vadd.f32 0.0, %v1250
      %1252 = vdwg.mxu0
      %1253 = vmatprep.subr.mxu0 0.0
      %1254 = vmatpush1.msra.mxu0 0.0
      %1255 = vmatprep.subr.mxu0 0.0
      %1256 = vmatpush1.msra.mxu0 0.0
      %1257 = vmatprep.subr.mxu0 0.0
      %1258 = vmatpush1.msra.mxu0 0.0
      %1259 = vmatprep.subr.mxu0 0.0
      %1260 = vmatpush1.msra.mxu0 0.0
      %1261 = vmatprep.subr.mxu0 0.0
      %1262 = vmatpush1.msra.mxu0 0.0
      %1263 = vmatprep.subr.mxu0 0.0
      %1264 = vmatpush1.msra.mxu0 0.0
      %1265 = vmatprep.subr.mxu0 0.0
      %1266 = vmatpush1.msra.mxu0 0.0
      %1267 = vmatprep.subr.mxu0 0.0
      %1268 = vmatpush1.msra.mxu0 0.0
      %1269 = vmatprep.subr.mxu0 0.0
      %1270 = vmatpush1.msra.mxu0 0.0
      %1271 = vmatprep.subr.mxu0 0.0
      %1272 = vmatpush1.msra.mxu0 0.0
      %1273 = vmatprep.subr.mxu0 0.0
      %1274 = vmatpush1.msra.mxu0 0.0
      %1275 = vmatprep.subr.mxu0 0.0
      %1276 = vmatpush1.msra.mxu0 0.0
      %1277 = vmatprep.subr.mxu0 0.0
      %1278 = vmatpush1.msra.mxu0 0.0
      %1279 = vmatprep.subr.mxu0 0.0
      %1280 = vmatpush1.msra.mxu0 0.0
      %1281 = vmatprep.subr.mxu0 0.0
      %1282 = vmatpush1.msra.mxu0 0.0
      %1283 = vmatprep.subr.mxu0 0.0
      %1284 = vmatpush1.msra.mxu0 %v1001
      %1285 = vmatprep.subr.mxu0 0.0
      %1286 = vmatpush2.msra.mxu0 0.0
      %1287 = vmatprep.subr.mxu0 0.0
      %1288 = vmatpush2.msra.mxu0 0.0
      %1289 = vmatprep.subr.mxu0 0.0
      %1290 = vmatpush2.msra.mxu0 0.0
      %1291 = vmatprep.subr.mxu0 0.0
      %1292 = vmatpush2.msra.mxu0 0.0
      %1293 = vmatprep.subr.mxu0 0.0
      %1294 = vmatpush2.msra.mxu0 0.0
      %1295 = vmatprep.subr.mxu0 0.0
      %1296 = vmatpush2.msra.mxu0 0.0
      %1297 = vmatprep.subr.mxu0 0.0
      %1298 = vmatpush2.msra.mxu0 0.0
      %1299 = vmatprep.subr.mxu0 0.0
      %1300 = vmatpush2.msra.mxu0 0.0
      %1301 = vmatprep.subr.mxu0 0.0
      %1302 = vmatpush2.msra.mxu0 0.0
      %1303 = vmatprep.subr.mxu0 0.0
      %1304 = vmatpush2.msra.mxu0 0.0
      %1305 = vmatprep.subr.mxu0 0.0
      %1306 = vmatpush2.msra.mxu0 0.0
      %1307 = vmatprep.subr.mxu0 0.0
      %1308 = vmatpush2.msra.mxu0 0.0
      %1309 = vmatprep.subr.mxu0 0.0
      %1310 = vmatpush2.msra.mxu0 0.0
      %1311 = vmatprep.subr.mxu0 0.0
      %1312 = vmatpush2.msra.mxu0 0.0
      %1313 = vmatprep.subr.mxu0 0.0
      %1314 = vmatpush2.msra.mxu0 0.0
      %1315 = vmatprep.subr.mxu0 0.0
      %1316 = vmatpush2.msra.mxu0 0.0
      %1317 = vmatprep.mubr.f32.mxu0 0.0
      %1318 = vmatmul.mubr.f32.gmra.mxu0 %v1004
      %v1319 = vpop.f32.mrf.mxu0
      %v1320 = vadd.f32 0.0, %v1319
      %v1321 = vpop.f32.mrf.mxu0
      %1322 = vmatprep.mubr.f32.mxu0 0.0
      %1323 = vmatmul.mubr.f32.gmra.mxu0 %v1007
      %v1324 = vpop.f32.mrf.mxu0
      %v1325 = vadd.f32 0.0, %v1324
      %v1326 = vpop.f32.mrf.mxu0
      %1327 = vmatprep.mubr.f32.mxu0 0.0
      %1328 = vmatmul.mubr.f32.gmra.mxu0 %v1010
      %v1329 = vpop.f32.mrf.mxu0
      %v1330 = vadd.f32 0.0, %v1329
      %v1331 = vpop.f32.mrf.mxu0
      %1332 = vmatprep.mubr.f32.mxu0 0.0
      %1333 = vmatmul.mubr.f32.gmra.mxu0 %v1013
      %v1334 = vpop.f32.mrf.mxu0
      %v1335 = vadd.f32 0.0, %v1334
      %v1336 = vpop.f32.mrf.mxu0
      %1337 = vmatprep.mubr.f32.mxu0 0.0
      %1338 = vmatmul.mubr.f32.gmra.mxu0 %v1016
      %v1339 = vpop.f32.mrf.mxu0
      %v1340 = vadd.f32 0.0, %v1339
      %v1341 = vpop.f32.mrf.mxu0
      %1342 = vmatprep.mubr.f32.mxu0 0.0
      %1343 = vmatmul.mubr.f32.gmra.mxu0 %v1019
      %v1344 = vpop.f32.mrf.mxu0
      %v1345 = vadd.f32 0.0, %v1344
      %v1346 = vpop.f32.mrf.mxu0
      %1347 = vmatprep.mubr.f32.mxu0 0.0
      %1348 = vmatmul.mubr.f32.gmra.mxu0 %v1022
      %v1349 = vpop.f32.mrf.mxu0
      %v1350 = vadd.f32 0.0, %v1349
      %v1351 = vpop.f32.mrf.mxu0
      %1352 = vmatprep.mubr.f32.mxu0 0.0
      %1353 = vmatmul.mubr.f32.gmra.mxu0 %v1025
      %v1354 = vpop.f32.mrf.mxu0
      %v1355 = vadd.f32 0.0, %v1354
      %v1356 = vpop.f32.mrf.mxu0
      %1357 = vdwg.mxu0
      %v1358 = vmul.f32 %v1094, %v537
      %v1359 = vmul.f32 %v1096, %v539
      %v1360 = vmul.f32 %v1207, %v650
      %v1361 = vmul.f32 %v1209, %v652
      %v1362 = vmul.f32 %v1320, %v763
      %v1363 = vmul.f32 %v1100, %v543
      %v1364 = vmul.f32 %v1102, %v545
      %v1365 = vmul.f32 %v1213, %v656
      %v1366 = vmul.f32 %v1215, %v658
      %v1367 = vmul.f32 %v1325, %v768
      %v1368 = vmul.f32 %v1106, %v549
      %v1369 = vmul.f32 %v1108, %v551
      %v1370 = vmul.f32 %v1219, %v662
      %v1371 = vmul.f32 %v1221, %v664
      %v1372 = vmul.f32 %v1330, %v773
      %v1373 = vmul.f32 %v1112, %v555
      %v1374 = vmul.f32 %v1114, %v557
      %v1375 = vmul.f32 %v1225, %v668
      %v1376 = vmul.f32 %v1227, %v670
      %v1377 = vmul.f32 %v1335, %v778
      %v1378 = vmul.f32 %v1118, %v561
      %v1379 = vmul.f32 %v1120, %v563
      %v1380 = vmul.f32 %v1231, %v674
      %v1381 = vmul.f32 %v1233, %v676
      %v1382 = vmul.f32 %v1340, %v783
      %v1383 = vmul.f32 %v1124, %v567
      %v1384 = vmul.f32 %v1126, %v569
      %v1385 = vmul.f32 %v1237, %v680
      %v1386 = vmul.f32 %v1239, %v682
      %v1387 = vmul.f32 %v1345, %v788
      %v1388 = vmul.f32 %v1130, %v573
      %v1389 = vmul.f32 %v1132, %v575
      %v1390 = vmul.f32 %v1243, %v686
      %v1391 = vmul.f32 %v1245, %v688
      %v1392 = vmul.f32 %v1350, %v793
      %v1393 = vmul.f32 %v1136, %v579
      %v1394 = vmul.f32 %v1138, %v581
      %v1395 = vmul.f32 %v1249, %v692
      %v1396 = vmul.f32 %v1251, %v694
      %v1397 = vmul.f32 %v1355, %v798
      %v1399 = vsel %vm979, %v1362, 0
      %v1402 = vsel %vm979, %v1367, 0
      %v1405 = vsel %vm979, %v1372, 0
      %v1408 = vsel %vm979, %v1377, 0
      %v1411 = vsel %vm979, %v1382, 0
      %v1414 = vsel %vm979, %v1387, 0
      %v1417 = vsel %vm979, %v1392, 0
      %v1420 = vsel %vm979, %v1397, 0
      %1422 = vmatprep.subr.mxu0 0.0
      %1423 = vmatpush1.msra.mxu0 %v372
      %1424 = vmatprep.subr.mxu0 0.0
      %1425 = vmatpush1.msra.mxu0 %v371
      %1426 = vmatprep.subr.mxu0 0.0
      %1427 = vmatpush1.msra.mxu0 %v370
      %1428 = vmatprep.subr.mxu0 0.0
      %1429 = vmatpush1.msra.mxu0 %v369
      %1430 = vmatprep.subr.mxu0 0.0
      %1431 = vmatpush1.msra.mxu0 %v368
      %1432 = vmatprep.subr.mxu0 0.0
      %1433 = vmatpush1.msra.mxu0 %v367
      %1434 = vmatprep.subr.mxu0 0.0
      %1435 = vmatpush1.msra.mxu0 %v366
      %1436 = vmatprep.subr.mxu0 0.0
      %1437 = vmatpush1.msra.mxu0 %v365
      %1438 = vmatprep.subr.mxu0 0.0
      %1439 = vmatpush1.msra.mxu0 %v364
      %1440 = vmatprep.subr.mxu0 0.0
      %1441 = vmatpush1.msra.mxu0 %v363
      %1442 = vmatprep.subr.mxu0 0.0
      %1443 = vmatpush1.msra.mxu0 %v362
      %1444 = vmatprep.subr.mxu0 0.0
      %1445 = vmatpush1.msra.mxu0 %v361
      %1446 = vmatprep.subr.mxu0 0.0
      %1447 = vmatpush1.msra.mxu0 %v360
      %1448 = vmatprep.subr.mxu0 0.0
      %1449 = vmatpush1.msra.mxu0 %v359
      %1450 = vmatprep.subr.mxu0 0.0
      %1451 = vmatpush1.msra.mxu0 %v358
      %1452 = vmatprep.subr.mxu0 0.0
      %1453 = vmatpush1.msra.mxu0 %v357
      %1454 = vmatprep.subr.mxu0 0.0
      %1455 = vmatpush2.msra.mxu0 %v388
      %1456 = vmatprep.subr.mxu0 0.0
      %1457 = vmatpush2.msra.mxu0 %v387
      %1458 = vmatprep.subr.mxu0 0.0
      %1459 = vmatpush2.msra.mxu0 %v386
      %1460 = vmatprep.subr.mxu0 0.0
      %1461 = vmatpush2.msra.mxu0 %v385
      %1462 = vmatprep.subr.mxu0 0.0
      %1463 = vmatpush2.msra.mxu0 %v384
      %1464 = vmatprep.subr.mxu0 0.0
      %1465 = vmatpush2.msra.mxu0 %v383
      %1466 = vmatprep.subr.mxu0 0.0
      %1467 = vmatpush2.msra.mxu0 %v382
      %1468 = vmatprep.subr.mxu0 0.0
      %1469 = vmatpush2.msra.mxu0 %v381
      %1470 = vmatprep.subr.mxu0 0.0
      %1471 = vmatpush2.msra.mxu0 %v380
      %1472 = vmatprep.subr.mxu0 0.0
      %1473 = vmatpush2.msra.mxu0 %v379
      %1474 = vmatprep.subr.mxu0 0.0
      %1475 = vmatpush2.msra.mxu0 %v378
      %1476 = vmatprep.subr.mxu0 0.0
      %1477 = vmatpush2.msra.mxu0 %v377
      %1478 = vmatprep.subr.mxu0 0.0
      %1479 = vmatpush2.msra.mxu0 %v376
      %1480 = vmatprep.subr.mxu0 0.0
      %1481 = vmatpush2.msra.mxu0 %v375
      %1482 = vmatprep.subr.mxu0 0.0
      %1483 = vmatpush2.msra.mxu0 %v374
      %1484 = vmatprep.subr.mxu0 0.0
      %1485 = vmatpush2.msra.mxu0 %v373
      %1486 = vmatprep.mubr.f32.mxu0 %v1359
      %1487 = vmatmul.mubr.f32.gmra.mxu0 %v1358
      %v1488 = vpop.f32.mrf.mxu0
      %v1489 = vadd.f32 0.0, %v1488
      %v1490 = vpop.f32.mrf.mxu0
      %1491 = vmatprep.mubr.f32.mxu0 %v1364
      %1492 = vmatmul.mubr.f32.gmra.mxu0 %v1363
      %v1493 = vpop.f32.mrf.mxu0
      %v1494 = vadd.f32 0.0, %v1493
      %v1495 = vpop.f32.mrf.mxu0
      %1496 = vmatprep.mubr.f32.mxu0 %v1369
      %1497 = vmatmul.mubr.f32.gmra.mxu0 %v1368
      %v1498 = vpop.f32.mrf.mxu0
      %v1499 = vadd.f32 0.0, %v1498
      %v1500 = vpop.f32.mrf.mxu0
      %1501 = vmatprep.mubr.f32.mxu0 %v1374
      %1502 = vmatmul.mubr.f32.gmra.mxu0 %v1373
      %v1503 = vpop.f32.mrf.mxu0
      %v1504 = vadd.f32 0.0, %v1503
      %v1505 = vpop.f32.mrf.mxu0
      %1506 = vmatprep.mubr.f32.mxu0 %v1379
      %1507 = vmatmul.mubr.f32.gmra.mxu0 %v1378
      %v1508 = vpop.f32.mrf.mxu0
      %v1509 = vadd.f32 0.0, %v1508
      %v1510 = vpop.f32.mrf.mxu0
      %1511 = vmatprep.mubr.f32.mxu0 %v1384
      %1512 = vmatmul.mubr.f32.gmra.mxu0 %v1383
      %v1513 = vpop.f32.mrf.mxu0
      %v1514 = vadd.f32 0.0, %v1513
      %v1515 = vpop.f32.mrf.mxu0
      %1516 = vmatprep.mubr.f32.mxu0 %v1389
      %1517 = vmatmul.mubr.f32.gmra.mxu0 %v1388
      %v1518 = vpop.f32.mrf.mxu0
      %v1519 = vadd.f32 0.0, %v1518
      %v1520 = vpop.f32.mrf.mxu0
      %1521 = vmatprep.mubr.f32.mxu0 %v1394
      %1522 = vmatmul.mubr.f32.gmra.mxu0 %v1393
      %v1523 = vpop.f32.mrf.mxu0
      %v1524 = vadd.f32 0.0, %v1523
      %v1525 = vpop.f32.mrf.mxu0
      %1526 = vdwg.mxu0
      %1527 = vmatprep.subr.mxu0 0.0
      %1528 = vmatpush1.msra.mxu0 %v404
      %1529 = vmatprep.subr.mxu0 0.0
      %1530 = vmatpush1.msra.mxu0 %v403
      %1531 = vmatprep.subr.mxu0 0.0
      %1532 = vmatpush1.msra.mxu0 %v402
      %1533 = vmatprep.subr.mxu0 0.0
      %1534 = vmatpush1.msra.mxu0 %v401
      %1535 = vmatprep.subr.mxu0 0.0
      %1536 = vmatpush1.msra.mxu0 %v400
      %1537 = vmatprep.subr.mxu0 0.0
      %1538 = vmatpush1.msra.mxu0 %v399
      %1539 = vmatprep.subr.mxu0 0.0
      %1540 = vmatpush1.msra.mxu0 %v398
      %1541 = vmatprep.subr.mxu0 0.0
      %1542 = vmatpush1.msra.mxu0 %v397
      %1543 = vmatprep.subr.mxu0 0.0
      %1544 = vmatpush1.msra.mxu0 %v396
      %1545 = vmatprep.subr.mxu0 0.0
      %1546 = vmatpush1.msra.mxu0 %v395
      %1547 = vmatprep.subr.mxu0 0.0
      %1548 = vmatpush1.msra.mxu0 %v394
      %1549 = vmatprep.subr.mxu0 0.0
      %1550 = vmatpush1.msra.mxu0 %v393
      %1551 = vmatprep.subr.mxu0 0.0
      %1552 = vmatpush1.msra.mxu0 %v392
      %1553 = vmatprep.subr.mxu0 0.0
      %1554 = vmatpush1.msra.mxu0 %v391
      %1555 = vmatprep.subr.mxu0 0.0
      %1556 = vmatpush1.msra.mxu0 %v390
      %1557 = vmatprep.subr.mxu0 0.0
      %1558 = vmatpush1.msra.mxu0 %v389
      %1559 = vmatprep.subr.mxu0 0.0
      %1560 = vmatpush2.msra.mxu0 %v420
      %1561 = vmatprep.subr.mxu0 0.0
      %1562 = vmatpush2.msra.mxu0 %v419
      %1563 = vmatprep.subr.mxu0 0.0
      %1564 = vmatpush2.msra.mxu0 %v418
      %1565 = vmatprep.subr.mxu0 0.0
      %1566 = vmatpush2.msra.mxu0 %v417
      %1567 = vmatprep.subr.mxu0 0.0
      %1568 = vmatpush2.msra.mxu0 %v416
      %1569 = vmatprep.subr.mxu0 0.0
      %1570 = vmatpush2.msra.mxu0 %v415
      %1571 = vmatprep.subr.mxu0 0.0
      %1572 = vmatpush2.msra.mxu0 %v414
      %1573 = vmatprep.subr.mxu0 0.0
      %1574 = vmatpush2.msra.mxu0 %v413
      %1575 = vmatprep.subr.mxu0 0.0
      %1576 = vmatpush2.msra.mxu0 %v412
      %1577 = vmatprep.subr.mxu0 0.0
      %1578 = vmatpush2.msra.mxu0 %v411
      %1579 = vmatprep.subr.mxu0 0.0
      %1580 = vmatpush2.msra.mxu0 %v410
      %1581 = vmatprep.subr.mxu0 0.0
      %1582 = vmatpush2.msra.mxu0 %v409
      %1583 = vmatprep.subr.mxu0 0.0
      %1584 = vmatpush2.msra.mxu0 %v408
      %1585 = vmatprep.subr.mxu0 0.0
      %1586 = vmatpush2.msra.mxu0 %v407
      %1587 = vmatprep.subr.mxu0 0.0
      %1588 = vmatpush2.msra.mxu0 %v406
      %1589 = vmatprep.subr.mxu0 0.0
      %1590 = vmatpush2.msra.mxu0 %v405
      %1591 = vmatprep.mubr.f32.mxu0 %v1361
      %1592 = vmatmul.mubr.f32.gmra.mxu0 %v1360
      %v1593 = vpop.f32.mrf.mxu0
      %v1594 = vadd.f32 %v1489, %v1593
      %v1595 = vpop.f32.mrf.mxu0
      %1596 = vmatprep.mubr.f32.mxu0 %v1366
      %1597 = vmatmul.mubr.f32.gmra.mxu0 %v1365
      %v1598 = vpop.f32.mrf.mxu0
      %v1599 = vadd.f32 %v1494, %v1598
      %v1600 = vpop.f32.mrf.mxu0
      %1601 = vmatprep.mubr.f32.mxu0 %v1371
      %1602 = vmatmul.mubr.f32.gmra.mxu0 %v1370
      %v1603 = vpop.f32.mrf.mxu0
      %v1604 = vadd.f32 %v1499, %v1603
      %v1605 = vpop.f32.mrf.mxu0
      %1606 = vmatprep.mubr.f32.mxu0 %v1376
      %1607 = vmatmul.mubr.f32.gmra.mxu0 %v1375
      %v1608 = vpop.f32.mrf.mxu0
      %v1609 = vadd.f32 %v1504, %v1608
      %v1610 = vpop.f32.mrf.mxu0
      %1611 = vmatprep.mubr.f32.mxu0 %v1381
      %1612 = vmatmul.mubr.f32.gmra.mxu0 %v1380
      %v1613 = vpop.f32.mrf.mxu0
      %v1614 = vadd.f32 %v1509, %v1613
      %v1615 = vpop.f32.mrf.mxu0
      %1616 = vmatprep.mubr.f32.mxu0 %v1386
      %1617 = vmatmul.mubr.f32.gmra.mxu0 %v1385
      %v1618 = vpop.f32.mrf.mxu0
      %v1619 = vadd.f32 %v1514, %v1618
      %v1620 = vpop.f32.mrf.mxu0
      %1621 = vmatprep.mubr.f32.mxu0 %v1391
      %1622 = vmatmul.mubr.f32.gmra.mxu0 %v1390
      %v1623 = vpop.f32.mrf.mxu0
      %v1624 = vadd.f32 %v1519, %v1623
      %v1625 = vpop.f32.mrf.mxu0
      %1626 = vmatprep.mubr.f32.mxu0 %v1396
      %1627 = vmatmul.mubr.f32.gmra.mxu0 %v1395
      %v1628 = vpop.f32.mrf.mxu0
      %v1629 = vadd.f32 %v1524, %v1628
      %v1630 = vpop.f32.mrf.mxu0
      %1631 = vdwg.mxu0
      %1632 = vmatprep.subr.mxu0 0.0
      %1633 = vmatpush1.msra.mxu0 0.0
      %1634 = vmatprep.subr.mxu0 0.0
      %1635 = vmatpush1.msra.mxu0 0.0
      %1636 = vmatprep.subr.mxu0 0.0
      %1637 = vmatpush1.msra.mxu0 0.0
      %1638 = vmatprep.subr.mxu0 0.0
      %1639 = vmatpush1.msra.mxu0 0.0
      %1640 = vmatprep.subr.mxu0 0.0
      %1641 = vmatpush1.msra.mxu0 0.0
      %1642 = vmatprep.subr.mxu0 0.0
      %1643 = vmatpush1.msra.mxu0 0.0
      %1644 = vmatprep.subr.mxu0 0.0
      %1645 = vmatpush1.msra.mxu0 0.0
      %1646 = vmatprep.subr.mxu0 0.0
      %1647 = vmatpush1.msra.mxu0 0.0
      %1648 = vmatprep.subr.mxu0 0.0
      %1649 = vmatpush1.msra.mxu0 %v428
      %1650 = vmatprep.subr.mxu0 0.0
      %1651 = vmatpush1.msra.mxu0 %v427
      %1652 = vmatprep.subr.mxu0 0.0
      %1653 = vmatpush1.msra.mxu0 %v426
      %1654 = vmatprep.subr.mxu0 0.0
      %1655 = vmatpush1.msra.mxu0 %v425
      %1656 = vmatprep.subr.mxu0 0.0
      %1657 = vmatpush1.msra.mxu0 %v424
      %1658 = vmatprep.subr.mxu0 0.0
      %1659 = vmatpush1.msra.mxu0 %v423
      %1660 = vmatprep.subr.mxu0 0.0
      %1661 = vmatpush1.msra.mxu0 %v422
      %1662 = vmatprep.subr.mxu0 0.0
      %1663 = vmatpush1.msra.mxu0 %v421
      %1664 = vmatprep.subr.mxu0 0.0
      %1665 = vmatpush2.msra.mxu0 0.0
      %1666 = vmatprep.subr.mxu0 0.0
      %1667 = vmatpush2.msra.mxu0 0.0
      %1668 = vmatprep.subr.mxu0 0.0
      %1669 = vmatpush2.msra.mxu0 0.0
      %1670 = vmatprep.subr.mxu0 0.0
      %1671 = vmatpush2.msra.mxu0 0.0
      %1672 = vmatprep.subr.mxu0 0.0
      %1673 = vmatpush2.msra.mxu0 0.0
      %1674 = vmatprep.subr.mxu0 0.0
      %1675 = vmatpush2.msra.mxu0 0.0
      %1676 = vmatprep.subr.mxu0 0.0
      %1677 = vmatpush2.msra.mxu0 0.0
      %1678 = vmatprep.subr.mxu0 0.0
      %1679 = vmatpush2.msra.mxu0 0.0
      %1680 = vmatprep.subr.mxu0 0.0
      %1681 = vmatpush2.msra.mxu0 0.0
      %1682 = vmatprep.subr.mxu0 0.0
      %1683 = vmatpush2.msra.mxu0 0.0
      %1684 = vmatprep.subr.mxu0 0.0
      %1685 = vmatpush2.msra.mxu0 0.0
      %1686 = vmatprep.subr.mxu0 0.0
      %1687 = vmatpush2.msra.mxu0 0.0
      %1688 = vmatprep.subr.mxu0 0.0
      %1689 = vmatpush2.msra.mxu0 0.0
      %1690 = vmatprep.subr.mxu0 0.0
      %1691 = vmatpush2.msra.mxu0 0.0
      %1692 = vmatprep.subr.mxu0 0.0
      %1693 = vmatpush2.msra.mxu0 0.0
      %1694 = vmatprep.subr.mxu0 0.0
      %1695 = vmatpush2.msra.mxu0 0.0
      %1696 = vmatprep.mubr.f32.mxu0 0.0
      %1697 = vmatmul.mubr.f32.gmra.mxu0 %v1399
      %v1698 = vpop.f32.mrf.mxu0
      %v1699 = vadd.f32 %v1594, %v1698
      %v1700 = vpop.f32.mrf.mxu0
      %1701 = vmatprep.mubr.f32.mxu0 0.0
      %1702 = vmatmul.mubr.f32.gmra.mxu0 %v1402
      %v1703 = vpop.f32.mrf.mxu0
      %v1704 = vadd.f32 %v1599, %v1703
      %v1705 = vpop.f32.mrf.mxu0
      %1706 = vmatprep.mubr.f32.mxu0 0.0
      %1707 = vmatmul.mubr.f32.gmra.mxu0 %v1405
      %v1708 = vpop.f32.mrf.mxu0
      %v1709 = vadd.f32 %v1604, %v1708
      %v1710 = vpop.f32.mrf.mxu0
      %1711 = vmatprep.mubr.f32.mxu0 0.0
      %1712 = vmatmul.mubr.f32.gmra.mxu0 %v1408
      %v1713 = vpop.f32.mrf.mxu0
      %v1714 = vadd.f32 %v1609, %v1713
      %v1715 = vpop.f32.mrf.mxu0
      %1716 = vmatprep.mubr.f32.mxu0 0.0
      %1717 = vmatmul.mubr.f32.gmra.mxu0 %v1411
      %v1718 = vpop.f32.mrf.mxu0
      %v1719 = vadd.f32 %v1614, %v1718
      %v1720 = vpop.f32.mrf.mxu0
      %1721 = vmatprep.mubr.f32.mxu0 0.0
      %1722 = vmatmul.mubr.f32.gmra.mxu0 %v1414
      %v1723 = vpop.f32.mrf.mxu0
      %v1724 = vadd.f32 %v1619, %v1723
      %v1725 = vpop.f32.mrf.mxu0
      %1726 = vmatprep.mubr.f32.mxu0 0.0
      %1727 = vmatmul.mubr.f32.gmra.mxu0 %v1417
      %v1728 = vpop.f32.mrf.mxu0
      %v1729 = vadd.f32 %v1624, %v1728
      %v1730 = vpop.f32.mrf.mxu0
      %1731 = vmatprep.mubr.f32.mxu0 0.0
      %1732 = vmatmul.mubr.f32.gmra.mxu0 %v1420
      %v1733 = vpop.f32.mrf.mxu0
      %v1734 = vadd.f32 %v1629, %v1733
      %v1735 = vpop.f32.mrf.mxu0
      %1736 = vdwg.mxu0
      %v1737 = vmax.f32 %v1699, 0.0
      %v1738 = vmax.f32 %v1704, 0.0
      %v1739 = vmax.f32 %v1709, 0.0
      %v1740 = vmax.f32 %v1714, 0.0
      %v1741 = vmax.f32 %v1719, 0.0
      %v1742 = vmax.f32 %v1724, 0.0
      %v1743 = vmax.f32 %v1729, 0.0
      %v1744 = vmax.f32 %v1734, 0.0
      %1745 = vst.msk [vmem:[%s312] sm:$0xff] %vm429, %v1737
      %1746 = vst.msk [vmem:[%s312 + $0x8] sm:$0xff] %vm429, %v1738
      %1747 = vst.msk [vmem:[%s312 + $0x10] sm:$0xff] %vm429, %v1739
      %1748 = vst.msk [vmem:[%s312 + $0x18] sm:$0xff] %vm429, %v1740
      %1749 = vst.msk [vmem:[%s312 + $0x20] sm:$0xff] %vm429, %v1741
      %1750 = vst.msk [vmem:[%s312 + $0x28] sm:$0xff] %vm429, %v1742
      %1751 = vst.msk [vmem:[%s312 + $0x30] sm:$0xff] %vm429, %v1743
      %1752 = vst.msk [vmem:[%s312 + $0x38] sm:$0xff] %vm429, %v1744
      %p1753 = scmp.lt.s32.totalorder %s18, 1
      %s1754 = scalar_select %p1753, %s18, 1
      %s1755 = smul.addr %s1754, 8
      %s1756 = smul.addr %s1755, 8
      %s1757 = scalar_lea.vmem %s7, %s1756
      // Predicated region
      $region49: #{model_forward.4} parent=47 // pred_check
        %p1758 = pneg %p198
      $region50: #{model_forward.4} parent=47 // pred_check_branch
        %1760 = sbr.rel (%p1758) target = $region52
      $region51: #{model_forward.4} parent=47 // pred_region
        _
      $region52: #{model_forward.4} parent=47 // pred_fallthru
        _
    $region48: #{model_forward.4} parent=5 // pred_fallthru
      _
    %p1761 = scmp.le.s32.totalorder 2, %s13
    // Predicated region
    $region53: #{model_forward.4} parent=5 // pred_check
      %p1762 = pneg %p1761
    $region54: #{model_forward.4} parent=5 // pred_check_branch
      %1764 = sbr.rel (%p1762) target = $region56
    $region55: #{model_forward.4} parent=5 // pred_region
      %s1765 = ssub.s32 %s13, 2
      // Predicated region
      $region57: #{model_forward.4} parent=55 // pred_check
        %p1766 = pneg %p204
      $region58: #{model_forward.4} parent=55 // pred_check_branch
        %1768 = sbr.rel (%p1766) target = $region60
      $region59: #{model_forward.4} parent=55 // pred_region
        %p1769 = scmp.lt.s32.totalorder %s19, 1
        %s1770 = scalar_select %p1769, %s19, 1
        %s1771 = smul.addr %s1770, 8
        %s1772 = smul.addr %s1771, 8
        %s1773 = scalar_lea.vmem %s7, %s1772
      $region60: #{model_forward.4} parent=55 // pred_fallthru
        _
    $region56: #{model_forward.4} parent=5 // pred_fallthru
      _
  $region6: #{model_forward.4} parent=0 // loop_footer
    %s17 = sadd.s32 1, %s13
  $region7: #{model_forward.4} parent=0 // loop_footer_branch
    %12 = sbr.rel target = $region3
  $region8: #{model_forward.4} parent=0 // loop_exit
    _

// kernel: model_forward.5
$region0: #{model_forward.5}
  #allocation0 [shape = 'u32[]', space=smem, size = 0x4, offset = 0x4, fixed_abs, tag = 'smem constant byte address 0x4 - core index']
  #allocation1 [shape = 'u32[144,128]{1,0:T(1,128)}', space=vmem, size = 0x12000, scoped, tag = 'internal scratch']
  %s0 = inlined_call_operand.vmem [shape: f32[2,64,576], index: 0, kind: input, shape index: {}]
  %s1 = inlined_call_operand.vmem [shape: f32[2,1,576], index: 1, kind: input, shape index: {}]
  %s2 = inlined_call_operand.vmem [shape: f32[2,1,576], index: 2, kind: input, shape index: {}]
  %s3 = inlined_call_operand.vmem [shape: f32[2,32,1], index: 3, kind: input, shape index: {}]
  %s4 = inlined_call_operand.vmem [shape: f32[8,4], index: 4, kind: input, shape index: {}]
  %s5 = inlined_call_operand.vmem [shape: f32[32,64], index: 5, kind: input, shape index: {}]
  %s6 = inlined_call_operand.vmem [shape: f32[32,8], index: 6, kind: input, shape index: {}]
  %s7 = inlined_call_operand.vmem [shape: f32[576,36], index: 7, kind: input, shape index: {}]
  %s8 = inlined_call_operand.vmem [shape: f32[16,32], index: 8, kind: input, shape index: {}]
  %s9 = inlined_call_operand.vmem [shape: f32[16,1], index: 9, kind: input, shape index: {}]
  %s10 = inlined_call_operand.vmem [shape: f32[16,16], index: 10, kind: input, shape index: {}]
  %s11 = inlined_call_operand.vmem [shape: f32[16,1], index: 11, kind: input, shape index: {}]
  %s12 = inlined_call_operand.vmem [shape: f32[2,16,1], index: 12, kind: output, shape index: {}]
  %s13 = sld [smem:[#allocation0]]
  $region81: #{model_forward.5} parent=0
    _
  %s15 = ssub.s32 1, %s13
  %s16 = scalar_select 0, %s15, %s13
  loop: start=0, step=1, limit=4
  $region2: #{model_forward.5} parent=0 // loop_pre_header
    _
  $region3: #{model_forward.5} parent=0 // loop_header
    %s18 = sphi 0, %s22
    %p19 = scmp.ge.s32.totalorder %s18, 4
    %s28 = sphi 0, %s30
    %s31 = sphi 0, %s28
    %s32 = sphi 0, %s31
    %s48 = sphi 0, %s32
    %s54 = sphi 0, %s56
    %s57 = sphi 0, %s54
    %s58 = sphi 0, %s57
    %s74 = sphi 0, %s58
    %s80 = sphi 0, %s82
    %s83 = sphi 0, %s80
    %s84 = sphi 0, %s83
    %s100 = sphi 0, %s84
    %s106 = sphi 0, %s108
    %s109 = sphi 0, %s106
    %s110 = sphi 0, %s109
    %s126 = sphi 0, %s110
    %s130 = sphi 0, %s130
    %s132 = sphi 0, %s130
    %s133 = sphi 0, %s132
    %s147 = sphi 0, %s133
    %s151 = sphi 0, %s151
    %s153 = sphi 0, %s151
    %s154 = sphi 0, %s153
    %s168 = sphi 0, %s154
    %s172 = sphi 0, %s172
    %s174 = sphi 0, %s172
    %s175 = sphi 0, %s174
    %s189 = sphi 0, %s175
    %s193 = sphi 0, %s193
    %s195 = sphi 0, %s193
    %s196 = sphi 0, %s195
    %s210 = sphi 0, %s196
    %s214 = sphi 0, %s214
    %s216 = sphi 0, %s214
    %s217 = sphi 0, %s216
    %s231 = sphi 0, %s217
    %s235 = sphi 0, %s235
    %s237 = sphi 0, %s235
    %s238 = sphi 0, %s237
    %s252 = sphi 0, %s238
    %s256 = sphi 0, %s256
    %s258 = sphi 0, %s256
    %s259 = sphi 0, %s258
    %s273 = sphi 0, %s259
    %s277 = sphi 0, %s277
    %s279 = sphi 0, %s277
    %s280 = sphi 0, %s279
    %s294 = sphi 0, %s280
    %s300 = sphi 0, %s302
    %s303 = sphi 0, %s300
    %s304 = sphi 0, %s303
    %s320 = sphi 0, %s304
  $region4: #{model_forward.5} parent=0 // loop_header_branch
    %21 = sbr.rel (%p19) target = $region8
  $region5: #{model_forward.5} parent=0 // loop_body
    %s23 = ssub.s32 %s18, 1
    %s24 = ssub.s32 %s18, 2
    %s25 = sadd.s32 %s18, 1
    %s26 = ssub.s32 %s18, %s25
    %p27 = scmp.eq.s32.totalorder %s26, 0
    %s29 = sadd.s32 %s28, 1
    %s30 = scalar_select %p27, %s28, %s29
    %p33 = pneg %p27
    %p34 = scmp.eq.s32.totalorder %s18, 1
    %p35 = por %p33, %p34
    %p36 = scmp.ne.s32.totalorder %s28, %s31
    %p37 = scmp.eq.s32.totalorder %s18, 0
    %p38 = por %p36, %p37
    %p39 = scmp.ne.s32.totalorder %s28, %s31
    %p40 = scmp.eq.s32.totalorder %s23, 1
    %p41 = por %p39, %p40
    %p42 = scmp.ne.s32.totalorder %s31, %s32
    %p43 = scmp.eq.s32.totalorder %s23, 0
    %p44 = por %p42, %p43
    %p45 = scmp.ne.s32.totalorder %s31, %s32
    %p46 = scmp.eq.s32.totalorder %s24, 1
    %p47 = por %p45, %p46
    %p49 = scmp.ne.s32.totalorder %s32, %s48
    %p50 = scmp.eq.s32.totalorder %s24, 0
    %p51 = por %p49, %p50
    %s52 = ssub.s32 %s18, %s25
    %p53 = scmp.eq.s32.totalorder %s52, 0
    %s55 = sadd.s32 %s54, 1
    %s56 = scalar_select %p53, %s54, %s55
    %p59 = pneg %p53
    %p60 = scmp.eq.s32.totalorder %s18, 1
    %p61 = por %p59, %p60
    %p62 = scmp.ne.s32.totalorder %s54, %s57
    %p63 = scmp.eq.s32.totalorder %s18, 0
    %p64 = por %p62, %p63
    %p65 = scmp.ne.s32.totalorder %s54, %s57
    %p66 = scmp.eq.s32.totalorder %s23, 1
    %p67 = por %p65, %p66
    %p68 = scmp.ne.s32.totalorder %s57, %s58
    %p69 = scmp.eq.s32.totalorder %s23, 0
    %p70 = por %p68, %p69
    %p71 = scmp.ne.s32.totalorder %s57, %s58
    %p72 = scmp.eq.s32.totalorder %s24, 1
    %p73 = por %p71, %p72
    %p75 = scmp.ne.s32.totalorder %s58, %s74
    %p76 = scmp.eq.s32.totalorder %s24, 0
    %p77 = por %p75, %p76
    %s78 = ssub.s32 %s18, %s25
    %p79 = scmp.eq.s32.totalorder %s78, 0
    %s81 = sadd.s32 %s80, 1
    %s82 = scalar_select %p79, %s80, %s81
    %p85 = pneg %p79
    %p86 = scmp.eq.s32.totalorder %s18, 1
    %p87 = por %p85, %p86
    %p88 = scmp.ne.s32.totalorder %s80, %s83
    %p89 = scmp.eq.s32.totalorder %s18, 0
    %p90 = por %p88, %p89
    %p91 = scmp.ne.s32.totalorder %s80, %s83
    %p92 = scmp.eq.s32.totalorder %s23, 1
    %p93 = por %p91, %p92
    %p94 = scmp.ne.s32.totalorder %s83, %s84
    %p95 = scmp.eq.s32.totalorder %s23, 0
    %p96 = por %p94, %p95
    %p97 = scmp.ne.s32.totalorder %s83, %s84
    %p98 = scmp.eq.s32.totalorder %s24, 1
    %p99 = por %p97, %p98
    %p101 = scmp.ne.s32.totalorder %s84, %s100
    %p102 = scmp.eq.s32.totalorder %s24, 0
    %p103 = por %p101, %p102
    %s104 = ssub.s32 %s18, %s25
    %p105 = scmp.eq.s32.totalorder %s104, 0
    %s107 = sadd.s32 %s106, 1
    %s108 = scalar_select %p105, %s106, %s107
    %p111 = pneg %p105
    %p112 = scmp.eq.s32.totalorder %s18, 1
    %p113 = por %p111, %p112
    %p114 = scmp.ne.s32.totalorder %s106, %s109
    %p115 = scmp.eq.s32.totalorder %s18, 0
    %p116 = por %p114, %p115
    %p117 = scmp.ne.s32.totalorder %s106, %s109
    %p118 = scmp.eq.s32.totalorder %s23, 1
    %p119 = por %p117, %p118
    %p120 = scmp.ne.s32.totalorder %s109, %s110
    %p121 = scmp.eq.s32.totalorder %s23, 0
    %p122 = por %p120, %p121
    %p123 = scmp.ne.s32.totalorder %s109, %s110
    %p124 = scmp.eq.s32.totalorder %s24, 1
    %p125 = por %p123, %p124
    %p127 = scmp.ne.s32.totalorder %s110, %s126
    %p128 = scmp.eq.s32.totalorder %s24, 0
    %p129 = por %p127, %p128
    %s131 = sadd.s32 %s130, 1
    %p134 = scmp.eq.s32.totalorder %s18, 1
    %p135 = scmp.ne.s32.totalorder %s130, %s132
    %p136 = scmp.eq.s32.totalorder %s18, 0
    %p137 = por %p135, %p136
    %p138 = scmp.ne.s32.totalorder %s130, %s132
    %p139 = scmp.eq.s32.totalorder %s23, 1
    %p140 = por %p138, %p139
    %p141 = scmp.ne.s32.totalorder %s132, %s133
    %p142 = scmp.eq.s32.totalorder %s23, 0
    %p143 = por %p141, %p142
    %p144 = scmp.ne.s32.totalorder %s132, %s133
    %p145 = scmp.eq.s32.totalorder %s24, 1
    %p146 = por %p144, %p145
    %p148 = scmp.ne.s32.totalorder %s133, %s147
    %p149 = scmp.eq.s32.totalorder %s24, 0
    %p150 = por %p148, %p149
    %s152 = sadd.s32 %s151, 1
    %p155 = scmp.eq.s32.totalorder %s18, 1
    %p156 = scmp.ne.s32.totalorder %s151, %s153
    %p157 = scmp.eq.s32.totalorder %s18, 0
    %p158 = por %p156, %p157
    %p159 = scmp.ne.s32.totalorder %s151, %s153
    %p160 = scmp.eq.s32.totalorder %s23, 1
    %p161 = por %p159, %p160
    %p162 = scmp.ne.s32.totalorder %s153, %s154
    %p163 = scmp.eq.s32.totalorder %s23, 0
    %p164 = por %p162, %p163
    %p165 = scmp.ne.s32.totalorder %s153, %s154
    %p166 = scmp.eq.s32.totalorder %s24, 1
    %p167 = por %p165, %p166
    %p169 = scmp.ne.s32.totalorder %s154, %s168
    %p170 = scmp.eq.s32.totalorder %s24, 0
    %p171 = por %p169, %p170
    %s173 = sadd.s32 %s172, 1
    %p176 = scmp.eq.s32.totalorder %s18, 1
    %p177 = scmp.ne.s32.totalorder %s172, %s174
    %p178 = scmp.eq.s32.totalorder %s18, 0
    %p179 = por %p177, %p178
    %p180 = scmp.ne.s32.totalorder %s172, %s174
    %p181 = scmp.eq.s32.totalorder %s23, 1
    %p182 = por %p180, %p181
    %p183 = scmp.ne.s32.totalorder %s174, %s175
    %p184 = scmp.eq.s32.totalorder %s23, 0
    %p185 = por %p183, %p184
    %p186 = scmp.ne.s32.totalorder %s174, %s175
    %p187 = scmp.eq.s32.totalorder %s24, 1
    %p188 = por %p186, %p187
    %p190 = scmp.ne.s32.totalorder %s175, %s189
    %p191 = scmp.eq.s32.totalorder %s24, 0
    %p192 = por %p190, %p191
    %s194 = sadd.s32 %s193, 1
    %p197 = scmp.eq.s32.totalorder %s18, 1
    %p198 = scmp.ne.s32.totalorder %s193, %s195
    %p199 = scmp.eq.s32.totalorder %s18, 0
    %p200 = por %p198, %p199
    %p201 = scmp.ne.s32.totalorder %s193, %s195
    %p202 = scmp.eq.s32.totalorder %s23, 1
    %p203 = por %p201, %p202
    %p204 = scmp.ne.s32.totalorder %s195, %s196
    %p205 = scmp.eq.s32.totalorder %s23, 0
    %p206 = por %p204, %p205
    %p207 = scmp.ne.s32.totalorder %s195, %s196
    %p208 = scmp.eq.s32.totalorder %s24, 1
    %p209 = por %p207, %p208
    %p211 = scmp.ne.s32.totalorder %s196, %s210
    %p212 = scmp.eq.s32.totalorder %s24, 0
    %p213 = por %p211, %p212
    %s215 = sadd.s32 %s214, 1
    %p218 = scmp.eq.s32.totalorder %s18, 1
    %p219 = scmp.ne.s32.totalorder %s214, %s216
    %p220 = scmp.eq.s32.totalorder %s18, 0
    %p221 = por %p219, %p220
    %p222 = scmp.ne.s32.totalorder %s214, %s216
    %p223 = scmp.eq.s32.totalorder %s23, 1
    %p224 = por %p222, %p223
    %p225 = scmp.ne.s32.totalorder %s216, %s217
    %p226 = scmp.eq.s32.totalorder %s23, 0
    %p227 = por %p225, %p226
    %p228 = scmp.ne.s32.totalorder %s216, %s217
    %p229 = scmp.eq.s32.totalorder %s24, 1
    %p230 = por %p228, %p229
    %p232 = scmp.ne.s32.totalorder %s217, %s231
    %p233 = scmp.eq.s32.totalorder %s24, 0
    %p234 = por %p232, %p233
    %s236 = sadd.s32 %s235, 1
    %p239 = scmp.eq.s32.totalorder %s18, 1
    %p240 = scmp.ne.s32.totalorder %s235, %s237
    %p241 = scmp.eq.s32.totalorder %s18, 0
    %p242 = por %p240, %p241
    %p243 = scmp.ne.s32.totalorder %s235, %s237
    %p244 = scmp.eq.s32.totalorder %s23, 1
    %p245 = por %p243, %p244
    %p246 = scmp.ne.s32.totalorder %s237, %s238
    %p247 = scmp.eq.s32.totalorder %s23, 0
    %p248 = por %p246, %p247
    %p249 = scmp.ne.s32.totalorder %s237, %s238
    %p250 = scmp.eq.s32.totalorder %s24, 1
    %p251 = por %p249, %p250
    %p253 = scmp.ne.s32.totalorder %s238, %s252
    %p254 = scmp.eq.s32.totalorder %s24, 0
    %p255 = por %p253, %p254
    %s257 = sadd.s32 %s256, 1
    %p260 = scmp.eq.s32.totalorder %s18, 1
    %p261 = scmp.ne.s32.totalorder %s256, %s258
    %p262 = scmp.eq.s32.totalorder %s18, 0
    %p263 = por %p261, %p262
    %p264 = scmp.ne.s32.totalorder %s256, %s258
    %p265 = scmp.eq.s32.totalorder %s23, 1
    %p266 = por %p264, %p265
    %p267 = scmp.ne.s32.totalorder %s258, %s259
    %p268 = scmp.eq.s32.totalorder %s23, 0
    %p269 = por %p267, %p268
    %p270 = scmp.ne.s32.totalorder %s258, %s259
    %p271 = scmp.eq.s32.totalorder %s24, 1
    %p272 = por %p270, %p271
    %p274 = scmp.ne.s32.totalorder %s259, %s273
    %p275 = scmp.eq.s32.totalorder %s24, 0
    %p276 = por %p274, %p275
    %s278 = sadd.s32 %s277, 1
    %p281 = scmp.eq.s32.totalorder %s18, 1
    %p282 = scmp.ne.s32.totalorder %s277, %s279
    %p283 = scmp.eq.s32.totalorder %s18, 0
    %p284 = por %p282, %p283
    %p285 = scmp.ne.s32.totalorder %s277, %s279
    %p286 = scmp.eq.s32.totalorder %s23, 1
    %p287 = por %p285, %p286
    %p288 = scmp.ne.s32.totalorder %s279, %s280
    %p289 = scmp.eq.s32.totalorder %s23, 0
    %p290 = por %p288, %p289
    %p291 = scmp.ne.s32.totalorder %s279, %s280
    %p292 = scmp.eq.s32.totalorder %s24, 1
    %p293 = por %p291, %p292
    %p295 = scmp.ne.s32.totalorder %s280, %s294
    %p296 = scmp.eq.s32.totalorder %s24, 0
    %p297 = por %p295, %p296
    %s298 = ssub.s32 %s18, %s25
    %p299 = scmp.eq.s32.totalorder %s298, 0
    %s301 = sadd.s32 %s300, 1
    %s302 = scalar_select %p299, %s300, %s301
    %p305 = pneg %p299
    %p306 = scmp.eq.s32.totalorder %s18, 1
    %p307 = por %p305, %p306
    %p308 = scmp.ne.s32.totalorder %s300, %s303
    %p309 = scmp.eq.s32.totalorder %s18, 0
    %p310 = por %p308, %p309
    %p311 = scmp.ne.s32.totalorder %s300, %s303
    %p312 = scmp.eq.s32.totalorder %s23, 1
    %p313 = por %p311, %p312
    %p314 = scmp.ne.s32.totalorder %s303, %s304
    %p315 = scmp.eq.s32.totalorder %s23, 0
    %p316 = por %p314, %p315
    %p317 = scmp.ne.s32.totalorder %s303, %s304
    %p318 = scmp.eq.s32.totalorder %s24, 1
    %p319 = por %p317, %p318
    %p321 = scmp.ne.s32.totalorder %s304, %s320
    %p322 = scmp.eq.s32.totalorder %s24, 0
    %p323 = por %p321, %p322
    %p324 = scmp.le.s32.totalorder 1, %s18
    %p325 = scmp.lt.s32.totalorder %s18, 3
    %p326 = pnand %p324, %p325
    %p327 = pneg %p326
    // Predicated region
    $region9: #{model_forward.5} parent=5 // pred_check
      _
    $region10: #{model_forward.5} parent=5 // pred_check_branch
      %329 = sbr.rel (%p326) target = $region12
    $region11: #{model_forward.5} parent=5 // pred_region
      %s330 = ssub.s32 %s18, 1
      // Predicated region
      $region13: #{model_forward.5} parent=11 // pred_check
        %p331 = pneg %p143
      $region14: #{model_forward.5} parent=11 // pred_check_branch
        %333 = sbr.rel (%p331) target = $region16
      $region15: #{model_forward.5} parent=11 // pred_region
        _
      $region16: #{model_forward.5} parent=11 // pred_fallthru
        _
      // Predicated region
      $region17: #{model_forward.5} parent=11 // pred_check
        %p334 = pneg %p164
      $region18: #{model_forward.5} parent=11 // pred_check_branch
        %336 = sbr.rel (%p334) target = $region20
      $region19: #{model_forward.5} parent=11 // pred_region
        _
      $region20: #{model_forward.5} parent=11 // pred_fallthru
        _
      // Predicated region
      $region21: #{model_forward.5} parent=11 // pred_check
        %p337 = pneg %p185
      $region22: #{model_forward.5} parent=11 // pred_check_branch
        %339 = sbr.rel (%p337) target = $region24
      $region23: #{model_forward.5} parent=11 // pred_region
        _
      $region24: #{model_forward.5} parent=11 // pred_fallthru
        _
      // Predicated region
      $region25: #{model_forward.5} parent=11 // pred_check
        %p340 = pneg %p206
      $region26: #{model_forward.5} parent=11 // pred_check_branch
        %342 = sbr.rel (%p340) target = $region28
      $region27: #{model_forward.5} parent=11 // pred_region
        _
      $region28: #{model_forward.5} parent=11 // pred_fallthru
        _
      // Predicated region
      $region29: #{model_forward.5} parent=11 // pred_check
        %p343 = pneg %p227
      $region30: #{model_forward.5} parent=11 // pred_check_branch
        %345 = sbr.rel (%p343) target = $region32
      $region31: #{model_forward.5} parent=11 // pred_region
        _
      $region32: #{model_forward.5} parent=11 // pred_fallthru
        _
      // Predicated region
      $region33: #{model_forward.5} parent=11 // pred_check
        %p346 = pneg %p248
      $region34: #{model_forward.5} parent=11 // pred_check_branch
        %348 = sbr.rel (%p346) target = $region36
      $region35: #{model_forward.5} parent=11 // pred_region
        _
      $region36: #{model_forward.5} parent=11 // pred_fallthru
        _
      // Predicated region
      $region37: #{model_forward.5} parent=11 // pred_check
        %p349 = pneg %p269
      $region38: #{model_forward.5} parent=11 // pred_check_branch
        %351 = sbr.rel (%p349) target = $region40
      $region39: #{model_forward.5} parent=11 // pred_region
        _
      $region40: #{model_forward.5} parent=11 // pred_fallthru
        _
      // Predicated region
      $region41: #{model_forward.5} parent=11 // pred_check
        %p352 = pneg %p290
      $region42: #{model_forward.5} parent=11 // pred_check_branch
        %354 = sbr.rel (%p352) target = $region44
      $region43: #{model_forward.5} parent=11 // pred_region
        _
      $region44: #{model_forward.5} parent=11 // pred_fallthru
        _
    $region12: #{model_forward.5} parent=5 // pred_fallthru
      _
    %p355 = scmp.lt.s32.totalorder %s18, 2
    // Predicated region
    $region45: #{model_forward.5} parent=5 // pred_check
      %p356 = pneg %p355
    $region46: #{model_forward.5} parent=5 // pred_check_branch
      %358 = sbr.rel (%p356) target = $region48
    $region47: #{model_forward.5} parent=5 // pred_region
      // Predicated region
      $region49: #{model_forward.5} parent=47 // pred_check
        %p359 = pneg %p38
      $region50: #{model_forward.5} parent=47 // pred_check_branch
        %361 = sbr.rel (%p359) target = $region52
      $region51: #{model_forward.5} parent=47 // pred_region
        %p362 = scmp.lt.s32.totalorder %s18, 1
        %s363 = scalar_select %p362, %s18, 1
        %s364 = smul.addr %s363, 40
        %s365 = smul.addr %s364, 8
        %s366 = scalar_lea.vmem %s0, %s365
      $region52: #{model_forward.5} parent=47 // pred_fallthru
        _
      // Predicated region
      $region53: #{model_forward.5} parent=47 // pred_check
        %p367 = pneg %p64
      $region54: #{model_forward.5} parent=47 // pred_check_branch
        %369 = sbr.rel (%p367) target = $region56
      $region55: #{model_forward.5} parent=47 // pred_region
        %p370 = scmp.lt.s32.totalorder %s18, 1
        %s371 = scalar_select %p370, %s18, 1
        %s372 = smul.addr %s371, 5
        %s373 = scalar_lea.vmem %s1, %s372
      $region56: #{model_forward.5} parent=47 // pred_fallthru
        _
      // Predicated region
      $region57: #{model_forward.5} parent=47 // pred_check
        %p374 = pneg %p90
      $region58: #{model_forward.5} parent=47 // pred_check_branch
        %376 = sbr.rel (%p374) target = $region60
      $region59: #{model_forward.5} parent=47 // pred_region
        %p377 = scmp.lt.s32.totalorder %s18, 1
        %s378 = scalar_select %p377, %s18, 1
        %s379 = smul.addr %s378, 5
        %s380 = scalar_lea.vmem %s2, %s379
      $region60: #{model_forward.5} parent=47 // pred_fallthru
        _
      // Predicated region
      $region61: #{model_forward.5} parent=47 // pred_check
        %p381 = pneg %p116
      $region62: #{model_forward.5} parent=47 // pred_check_branch
        %383 = sbr.rel (%p381) target = $region64
      $region63: #{model_forward.5} parent=47 // pred_region
        %p384 = scmp.lt.s32.totalorder %s18, 1
        %s385 = scalar_select %p384, %s18, 1
        %s386 = smul.addr %s385, 4
        %s387 = smul.addr %s386, 8
        %s388 = scalar_lea.vmem %s3, %s387
      $region64: #{model_forward.5} parent=47 // pred_fallthru
        _
    $region48: #{model_forward.5} parent=5 // pred_fallthru
      _
    %p389 = scmp.le.s32.totalorder 1, %s18
    %p390 = scmp.lt.s32.totalorder %s18, 3
    %p391 = pnand %p389, %p390
    %p392 = pneg %p391
    // Predicated region
    $region65: #{model_forward.5} parent=5 // pred_check
      _
    $region66: #{model_forward.5} parent=5 // pred_check_branch
      %394 = sbr.rel (%p391) target = $region68
    $region67: #{model_forward.5} parent=5 // pred_region
      %s395 = ssub.s32 %s18, 1
      %p396 = scmp.lt.s32.totalorder %s23, 1
      %s397 = scalar_select %p396, %s23, 1
      %s398 = smul.addr %s397, 40
      %s399 = smul.addr %s398, 8
      %s400 = scalar_lea.vmem %s0, %s399
      %p401 = pneg %p44
      %p402 = pneg %p41
      %p403 = scmp.lt.s32.totalorder %s23, 1
      %s404 = scalar_select %p403, %s23, 1
      %s405 = smul.addr %s404, 5
      %s406 = scalar_lea.vmem %s1, %s405
      %p407 = pneg %p70
      %p408 = pneg %p67
      %p409 = scmp.lt.s32.totalorder %s23, 1
      %s410 = scalar_select %p409, %s23, 1
      %s411 = smul.addr %s410, 5
      %s412 = scalar_lea.vmem %s2, %s411
      %p413 = pneg %p96
      %p414 = pneg %p93
      %p415 = scmp.lt.s32.totalorder %s23, 1
      %s416 = scalar_select %p415, %s23, 1
      %s417 = smul.addr %s416, 4
      %s418 = smul.addr %s417, 8
      %s419 = scalar_lea.vmem %s3, %s418
      %p420 = pneg %p122
      %p421 = pneg %p119
      %p422 = pneg %p143
      %p423 = pneg %p140
      %p424 = pneg %p164
      %p425 = pneg %p161
      %p426 = pneg %p185
      %p427 = pneg %p182
      %p428 = pneg %p206
      %p429 = pneg %p203
      %p430 = pneg %p227
      %p431 = pneg %p224
      %p432 = pneg %p248
      %p433 = pneg %p245
      %p434 = pneg %p269
      %p435 = pneg %p266
      %p436 = pneg %p290
      %p437 = pneg %p287
      %p438 = pneg %p316
      %p439 = pneg %p313
      %p440 = scmp.lt.s32.totalorder %s23, 1
      %s441 = scalar_select %p440, %s23, 1
      %s442 = smul.addr %s441, 2
      %s443 = smul.addr %s442, 8
      %s444 = scalar_lea.vmem %s12, %s443
      %p445 = scmp.lt.s32.totalorder %s23, 1
      %s446 = scalar_select %p445, %s23, 1
      %s447 = smul.addr %s446, 40
      %s448 = smul.addr %s447, 8
      %s449 = scalar_lea.vmem %s0, %s448
      %p450 = scmp.lt.s32.totalorder %s23, 1
      %s451 = scalar_select %p450, %s23, 1
      %s452 = smul.addr %s451, 5
      %s453 = scalar_lea.vmem %s1, %s452
      %p454 = scmp.lt.s32.totalorder %s23, 1
      %s455 = scalar_select %p454, %s23, 1
      %s456 = smul.addr %s455, 5
      %s457 = scalar_lea.vmem %s2, %s456
      %p458 = scmp.lt.s32.totalorder %s23, 1
      %s459 = scalar_select %p458, %s23, 1
      %s460 = smul.addr %s459, 4
      %s461 = smul.addr %s460, 8
      %s462 = scalar_lea.vmem %s3, %s461
      %p463 = scmp.lt.s32.totalorder %s23, 1
      %s464 = scalar_select %p463, %s23, 1
      %s465 = smul.addr %s464, 2
      %s466 = smul.addr %s465, 8
      %s467 = scalar_lea.vmem %s12, %s466
      %v468 = vld [vmem:[%s449] sm:$0xff]
      %v469 = vld [vmem:[%s449 + $0x8] sm:$0xff]
      %v470 = vld [vmem:[%s449 + $0x10] sm:$0xff]
      %v471 = vld [vmem:[%s449 + $0x18] sm:$0xff]
      %v472 = vld [vmem:[%s449 + $0x20] sm:$0xff]
      %v473 = vld [vmem:[%s449 + $0x28] sm:$0xff]
      %v474 = vld [vmem:[%s449 + $0x30] sm:$0xff]
      %v475 = vld [vmem:[%s449 + $0x38] sm:$0xff]
      %v476 = vld [vmem:[%s449 + $0x40] sm:$0xff]
      %v477 = vld [vmem:[%s449 + $0x48] sm:$0xff]
      %v478 = vld [vmem:[%s449 + $0x50] sm:$0xff]
      %v479 = vld [vmem:[%s449 + $0x58] sm:$0xff]
      %v480 = vld [vmem:[%s449 + $0x60] sm:$0xff]
      %v481 = vld [vmem:[%s449 + $0x68] sm:$0xff]
      %v482 = vld [vmem:[%s449 + $0x70] sm:$0xff]
      %v483 = vld [vmem:[%s449 + $0x78] sm:$0xff]
      %v484 = vld [vmem:[%s449 + $0x80] sm:$0xff]
      %v485 = vld [vmem:[%s449 + $0x88] sm:$0xff]
      %v486 = vld [vmem:[%s449 + $0x90] sm:$0xff]
      %v487 = vld [vmem:[%s449 + $0x98] sm:$0xff]
      %v488 = vld [vmem:[%s449 + $0xa0] sm:$0xff]
      %v489 = vld [vmem:[%s449 + $0xa8] sm:$0xff]
      %v490 = vld [vmem:[%s449 + $0xb0] sm:$0xff]
      %v491 = vld [vmem:[%s449 + $0xb8] sm:$0xff]
      %v492 = vld [vmem:[%s449 + $0xc0] sm:$0xff]
      %v493 = vld [vmem:[%s449 + $0xc8] sm:$0xff]
      %v494 = vld [vmem:[%s449 + $0xd0] sm:$0xff]
      %v495 = vld [vmem:[%s449 + $0xd8] sm:$0xff]
      %v496 = vld [vmem:[%s449 + $0xe0] sm:$0xff]
      %v497 = vld [vmem:[%s449 + $0xe8] sm:$0xff]
      %v498 = vld [vmem:[%s449 + $0xf0] sm:$0xff]
      %v499 = vld [vmem:[%s449 + $0xf8] sm:$0xff]
      %v500 = vld [vmem:[%s449 + $0x100] sm:$0xff]
      %v501 = vld [vmem:[%s449 + $0x108] sm:$0xff]
      %v502 = vld [vmem:[%s449 + $0x110] sm:$0xff]
      %v503 = vld [vmem:[%s449 + $0x118] sm:$0xff]
      %v504 = vld [vmem:[%s449 + $0x120] sm:$0xff]
      %v505 = vld [vmem:[%s449 + $0x128] sm:$0xff]
      %v506 = vld [vmem:[%s449 + $0x130] sm:$0xff]
      %v507 = vld [vmem:[%s449 + $0x138] sm:$0xff]
      %v508 = vld [vmem:[%s453] sm:$0x1f]
      %v509 = vld [vmem:[%s457] sm:$0x1f]
      %v510 = vld [vmem:[%s4] sm:$0xff]
      %v511 = vld [vmem:[%s5] sm:$0xff]
      %v512 = vld [vmem:[%s5 + $0x8] sm:$0xff]
      %v513 = vld [vmem:[%s5 + $0x10] sm:$0xff]
      %v514 = vld [vmem:[%s5 + $0x18] sm:$0xff]
      %v515 = vld [vmem:[%s6] sm:$0xff]
      %v516 = vld [vmem:[%s6 + $0x8] sm:$0xff]
      %v517 = vld [vmem:[%s6 + $0x10] sm:$0xff]
      %v518 = vld [vmem:[%s6 + $0x18] sm:$0xff]
      %v519 = vld [vmem:[%s7] sm:$0xff]
      %v520 = vld [vmem:[%s7 + $0x8] sm:$0xff]
      %v521 = vld [vmem:[%s7 + $0x10] sm:$0xff]
      %v522 = vld [vmem:[%s7 + $0x18] sm:$0xff]
      %v523 = vld [vmem:[%s7 + $0x20] sm:$0xff]
      %v524 = vld [vmem:[%s7 + $0x28] sm:$0xff]
      %v525 = vld [vmem:[%s7 + $0x30] sm:$0xff]
      %v526 = vld [vmem:[%s7 + $0x38] sm:$0xff]
      %v527 = vld [vmem:[%s7 + $0x40] sm:$0xff]
      %v528 = vld [vmem:[%s7 + $0x48] sm:$0xff]
      %v529 = vld [vmem:[%s7 + $0x50] sm:$0xff]
      %v530 = vld [vmem:[%s7 + $0x58] sm:$0xff]
      %v531 = vld [vmem:[%s7 + $0x60] sm:$0xff]
      %v532 = vld [vmem:[%s7 + $0x68] sm:$0xff]
      %v533 = vld [vmem:[%s7 + $0x70] sm:$0xff]
      %v534 = vld [vmem:[%s7 + $0x78] sm:$0xff]
      %v535 = vld [vmem:[%s7 + $0x80] sm:$0xff]
      %v536 = vld [vmem:[%s7 + $0x88] sm:$0xff]
      %v537 = vld [vmem:[%s7 + $0x90] sm:$0xff]
      %v538 = vld [vmem:[%s7 + $0x98] sm:$0xff]
      %v539 = vld [vmem:[%s7 + $0xa0] sm:$0xff]
      %v540 = vld [vmem:[%s7 + $0xa8] sm:$0xff]
      %v541 = vld [vmem:[%s7 + $0xb0] sm:$0xff]
      %v542 = vld [vmem:[%s7 + $0xb8] sm:$0xff]
      %v543 = vld [vmem:[%s7 + $0xc0] sm:$0xff]
      %v544 = vld [vmem:[%s7 + $0xc8] sm:$0xff]
      %v545 = vld [vmem:[%s7 + $0xd0] sm:$0xff]
      %v546 = vld [vmem:[%s7 + $0xd8] sm:$0xff]
      %v547 = vld [vmem:[%s7 + $0xe0] sm:$0xff]
      %v548 = vld [vmem:[%s7 + $0xe8] sm:$0xff]
      %v549 = vld [vmem:[%s7 + $0xf0] sm:$0xff]
      %v550 = vld [vmem:[%s7 + $0xf8] sm:$0xff]
      %v551 = vld [vmem:[%s7 + $0x100] sm:$0xff]
      %v552 = vld [vmem:[%s7 + $0x108] sm:$0xff]
      %v553 = vld [vmem:[%s7 + $0x110] sm:$0xff]
      %v554 = vld [vmem:[%s7 + $0x118] sm:$0xff]
      %v555 = vld [vmem:[%s7 + $0x120] sm:$0xff]
      %v556 = vld [vmem:[%s7 + $0x128] sm:$0xff]
      %v557 = vld [vmem:[%s7 + $0x130] sm:$0xff]
      %v558 = vld [vmem:[%s7 + $0x138] sm:$0xff]
      %v559 = vld [vmem:[%s7 + $0x140] sm:$0xff]
      %v560 = vld [vmem:[%s7 + $0x148] sm:$0xff]
      %v561 = vld [vmem:[%s7 + $0x150] sm:$0xff]
      %v562 = vld [vmem:[%s7 + $0x158] sm:$0xff]
      %v563 = vld [vmem:[%s7 + $0x160] sm:$0xff]
      %v564 = vld [vmem:[%s7 + $0x168] sm:$0xff]
      %v565 = vld [vmem:[%s7 + $0x170] sm:$0xff]
      %v566 = vld [vmem:[%s7 + $0x178] sm:$0xff]
      %v567 = vld [vmem:[%s7 + $0x180] sm:$0xff]
      %v568 = vld [vmem:[%s7 + $0x188] sm:$0xff]
      %v569 = vld [vmem:[%s7 + $0x190] sm:$0xff]
      %v570 = vld [vmem:[%s7 + $0x198] sm:$0xff]
      %v571 = vld [vmem:[%s7 + $0x1a0] sm:$0xff]
      %v572 = vld [vmem:[%s7 + $0x1a8] sm:$0xff]
      %v573 = vld [vmem:[%s7 + $0x1b0] sm:$0xff]
      %v574 = vld [vmem:[%s7 + $0x1b8] sm:$0xff]
      %v575 = vld [vmem:[%s7 + $0x1c0] sm:$0xff]
      %v576 = vld [vmem:[%s7 + $0x1c8] sm:$0xff]
      %v577 = vld [vmem:[%s7 + $0x1d0] sm:$0xff]
      %v578 = vld [vmem:[%s7 + $0x1d8] sm:$0xff]
      %v579 = vld [vmem:[%s7 + $0x1e0] sm:$0xff]
      %v580 = vld [vmem:[%s7 + $0x1e8] sm:$0xff]
      %v581 = vld [vmem:[%s7 + $0x1f0] sm:$0xff]
      %v582 = vld [vmem:[%s7 + $0x1f8] sm:$0xff]
      %v583 = vld [vmem:[%s7 + $0x200] sm:$0xff]
      %v584 = vld [vmem:[%s7 + $0x208] sm:$0xff]
      %v585 = vld [vmem:[%s7 + $0x210] sm:$0xff]
      %v586 = vld [vmem:[%s7 + $0x218] sm:$0xff]
      %v587 = vld [vmem:[%s7 + $0x220] sm:$0xff]
      %v588 = vld [vmem:[%s7 + $0x228] sm:$0xff]
      %v589 = vld [vmem:[%s7 + $0x230] sm:$0xff]
      %v590 = vld [vmem:[%s7 + $0x238] sm:$0xff]
      %vm591 = vcmask 523264
      %v593 = vsel %vm591, %v511, 0
      %v596 = vsel %vm591, %v512, 0
      %v599 = vsel %vm591, %v513, 0
      %v602 = vsel %vm591, %v514, 0
      %604 = vmatprep.subr.mxu0 0.0
      %605 = vmatpush1.msra.mxu0 0.0
      %606 = vmatprep.subr.mxu0 0.0
      %607 = vmatpush1.msra.mxu0 0.0
      %608 = vmatprep.subr.mxu0 0.0
      %609 = vmatpush1.msra.mxu0 0.0
      %610 = vmatprep.subr.mxu0 0.0
      %611 = vmatpush1.msra.mxu0 0.0
      %612 = vmatprep.subr.mxu0 0.0
      %613 = vmatpush1.msra.mxu0 0.0
      %614 = vmatprep.subr.mxu0 0.0
      %615 = vmatpush1.msra.mxu0 0.0
      %616 = vmatprep.subr.mxu0 0.0
      %617 = vmatpush1.msra.mxu0 0.0
      %618 = vmatprep.subr.mxu0 0.0
      %619 = vmatpush1.msra.mxu0 0.0
      %620 = vmatprep.subr.mxu0 %v504
      %621 = vmatpush1.msra.mxu0 %v503
      %622 = vmatprep.subr.mxu0 %v499
      %623 = vmatpush1.msra.mxu0 %v498
      %624 = vmatprep.subr.mxu0 %v494
      %625 = vmatpush1.msra.mxu0 %v493
      %626 = vmatprep.subr.mxu0 %v489
      %627 = vmatpush1.msra.mxu0 %v488
      %628 = vmatprep.subr.mxu0 %v484
      %629 = vmatpush1.msra.mxu0 %v483
      %630 = vmatprep.subr.mxu0 %v479
      %631 = vmatpush1.msra.mxu0 %v478
      %632 = vmatprep.subr.mxu0 %v474
      %633 = vmatpush1.msra.mxu0 %v473
      %634 = vmatprep.subr.mxu0 %v469
      %635 = vmatpush1.msra.mxu0 %v468
      %636 = vmatprep.subr.mxu0 0.0
      %637 = vmatpush2.msra.mxu0 0.0
      %638 = vmatprep.subr.mxu0 0.0
      %639 = vmatpush2.msra.mxu0 0.0
      %640 = vmatprep.subr.mxu0 0.0
      %641 = vmatpush2.msra.mxu0 0.0
      %642 = vmatprep.subr.mxu0 0.0
      %643 = vmatpush2.msra.mxu0 0.0
      %644 = vmatprep.subr.mxu0 0.0
      %645 = vmatpush2.msra.mxu0 0.0
      %646 = vmatprep.subr.mxu0 0.0
      %647 = vmatpush2.msra.mxu0 0.0
      %648 = vmatprep.subr.mxu0 0.0
      %649 = vmatpush2.msra.mxu0 0.0
      %650 = vmatprep.subr.mxu0 0.0
      %651 = vmatpush2.msra.mxu0 0.0
      %652 = vmatprep.subr.mxu0 0.0
      %653 = vmatpush2.msra.mxu0 0.0
      %654 = vmatprep.subr.mxu0 0.0
      %655 = vmatpush2.msra.mxu0 0.0
      %656 = vmatprep.subr.mxu0 0.0
      %657 = vmatpush2.msra.mxu0 0.0
      %658 = vmatprep.subr.mxu0 0.0
      %659 = vmatpush2.msra.mxu0 0.0
      %660 = vmatprep.subr.mxu0 0.0
      %661 = vmatpush2.msra.mxu0 0.0
      %662 = vmatprep.subr.mxu0 0.0
      %663 = vmatpush2.msra.mxu0 0.0
      %664 = vmatprep.subr.mxu0 0.0
      %665 = vmatpush2.msra.mxu0 0.0
      %666 = vmatprep.subr.mxu0 0.0
      %667 = vmatpush2.msra.mxu0 0.0
      %668 = vmatprep.mubr.f32.mxu0 0.0
      %669 = vmatmul.mubr.f32.gmra.mxu0 %v593
      %v670 = vpop.f32.mrf.mxu0
      %v671 = vadd.f32 0.0, %v670
      %v672 = vpop.f32.mrf.mxu0
      %v673 = vadd.f32 0.0, %v672
      %674 = vmatprep.mubr.f32.mxu0 0.0
      %675 = vmatmul.mubr.f32.gmra.mxu0 %v596
      %v676 = vpop.f32.mrf.mxu0
      %v677 = vadd.f32 0.0, %v676
      %v678 = vpop.f32.mrf.mxu0
      %v679 = vadd.f32 0.0, %v678
      %680 = vmatprep.mubr.f32.mxu0 0.0
      %681 = vmatmul.mubr.f32.gmra.mxu0 %v599
      %v682 = vpop.f32.mrf.mxu0
      %v683 = vadd.f32 0.0, %v682
      %v684 = vpop.f32.mrf.mxu0
      %v685 = vadd.f32 0.0, %v684
      %686 = vmatprep.mubr.f32.mxu0 0.0
      %687 = vmatmul.mubr.f32.gmra.mxu0 %v602
      %v688 = vpop.f32.mrf.mxu0
      %v689 = vadd.f32 0.0, %v688
      %v690 = vpop.f32.mrf.mxu0
      %v691 = vadd.f32 0.0, %v690
      %692 = vdwg.mxu0
      %693 = vmatprep.subr.mxu0 0.0
      %694 = vmatpush1.msra.mxu0 0.0
      %695 = vmatprep.subr.mxu0 0.0
      %696 = vmatpush1.msra.mxu0 0.0
      %697 = vmatprep.subr.mxu0 0.0
      %698 = vmatpush1.msra.mxu0 0.0
      %699 = vmatprep.subr.mxu0 0.0
      %700 = vmatpush1.msra.mxu0 0.0
      %701 = vmatprep.subr.mxu0 0.0
      %702 = vmatpush1.msra.mxu0 0.0
      %703 = vmatprep.subr.mxu0 0.0
      %704 = vmatpush1.msra.mxu0 0.0
      %705 = vmatprep.subr.mxu0 0.0
      %706 = vmatpush1.msra.mxu0 0.0
      %707 = vmatprep.subr.mxu0 0.0
      %708 = vmatpush1.msra.mxu0 0.0
      %709 = vmatprep.subr.mxu0 %v506
      %710 = vmatpush1.msra.mxu0 %v505
      %711 = vmatprep.subr.mxu0 %v501
      %712 = vmatpush1.msra.mxu0 %v500
      %713 = vmatprep.subr.mxu0 %v496
      %714 = vmatpush1.msra.mxu0 %v495
      %715 = vmatprep.subr.mxu0 %v491
      %716 = vmatpush1.msra.mxu0 %v490
      %717 = vmatprep.subr.mxu0 %v486
      %718 = vmatpush1.msra.mxu0 %v485
      %719 = vmatprep.subr.mxu0 %v481
      %720 = vmatpush1.msra.mxu0 %v480
      %721 = vmatprep.subr.mxu0 %v476
      %722 = vmatpush1.msra.mxu0 %v475
      %723 = vmatprep.subr.mxu0 %v471
      %724 = vmatpush1.msra.mxu0 %v470
      %725 = vmatprep.subr.mxu0 0.0
      %726 = vmatpush2.msra.mxu0 0.0
      %727 = vmatprep.subr.mxu0 0.0
      %728 = vmatpush2.msra.mxu0 0.0
      %729 = vmatprep.subr.mxu0 0.0
      %730 = vmatpush2.msra.mxu0 0.0
      %731 = vmatprep.subr.mxu0 0.0
      %732 = vmatpush2.msra.mxu0 0.0
      %733 = vmatprep.subr.mxu0 0.0
      %734 = vmatpush2.msra.mxu0 0.0
      %735 = vmatprep.subr.mxu0 0.0
      %736 = vmatpush2.msra.mxu0 0.0
      %737 = vmatprep.subr.mxu0 0.0
      %738 = vmatpush2.msra.mxu0 0.0
      %739 = vmatprep.subr.mxu0 0.0
      %740 = vmatpush2.msra.mxu0 0.0
      %741 = vmatprep.subr.mxu0 0.0
      %742 = vmatpush2.msra.mxu0 0.0
      %743 = vmatprep.subr.mxu0 0.0
      %744 = vmatpush2.msra.mxu0 0.0
      %745 = vmatprep.subr.mxu0 0.0
      %746 = vmatpush2.msra.mxu0 0.0
      %747 = vmatprep.subr.mxu0 0.0
      %748 = vmatpush2.msra.mxu0 0.0
      %749 = vmatprep.subr.mxu0 0.0
      %750 = vmatpush2.msra.mxu0 0.0
      %751 = vmatprep.subr.mxu0 0.0
      %752 = vmatpush2.msra.mxu0 0.0
      %753 = vmatprep.subr.mxu0 0.0
      %754 = vmatpush2.msra.mxu0 0.0
      %755 = vmatprep.subr.mxu0 0.0
      %756 = vmatpush2.msra.mxu0 0.0
      %757 = vmatprep.mubr.f32.mxu0 0.0
      %758 = vmatmul.mubr.f32.gmra.mxu0 %v593
      %v759 = vpop.f32.mrf.mxu0
      %v760 = vadd.f32 0.0, %v759
      %v761 = vpop.f32.mrf.mxu0
      %v762 = vadd.f32 0.0, %v761
      %763 = vmatprep.mubr.f32.mxu0 0.0
      %764 = vmatmul.mubr.f32.gmra.mxu0 %v596
      %v765 = vpop.f32.mrf.mxu0
      %v766 = vadd.f32 0.0, %v765
      %v767 = vpop.f32.mrf.mxu0
      %v768 = vadd.f32 0.0, %v767
      %769 = vmatprep.mubr.f32.mxu0 0.0
      %770 = vmatmul.mubr.f32.gmra.mxu0 %v599
      %v771 = vpop.f32.mrf.mxu0
      %v772 = vadd.f32 0.0, %v771
      %v773 = vpop.f32.mrf.mxu0
      %v774 = vadd.f32 0.0, %v773
      %775 = vmatprep.mubr.f32.mxu0 0.0
      %776 = vmatmul.mubr.f32.gmra.mxu0 %v602
      %v777 = vpop.f32.mrf.mxu0
      %v778 = vadd.f32 0.0, %v777
      %v779 = vpop.f32.mrf.mxu0
      %v780 = vadd.f32 0.0, %v779
      %781 = vdwg.mxu0
      %782 = vmatprep.subr.mxu0 0.0
      %783 = vmatpush1.msra.mxu0 0.0
      %784 = vmatprep.subr.mxu0 0.0
      %785 = vmatpush1.msra.mxu0 0.0
      %786 = vmatprep.subr.mxu0 0.0
      %787 = vmatpush1.msra.mxu0 0.0
      %788 = vmatprep.subr.mxu0 0.0
      %789 = vmatpush1.msra.mxu0 0.0
      %790 = vmatprep.subr.mxu0 0.0
      %791 = vmatpush1.msra.mxu0 0.0
      %792 = vmatprep.subr.mxu0 0.0
      %793 = vmatpush1.msra.mxu0 0.0
      %794 = vmatprep.subr.mxu0 0.0
      %795 = vmatpush1.msra.mxu0 0.0
      %796 = vmatprep.subr.mxu0 0.0
      %797 = vmatpush1.msra.mxu0 0.0
      %798 = vmatprep.subr.mxu0 0.0
      %799 = vmatpush1.msra.mxu0 %v507
      %800 = vmatprep.subr.mxu0 0.0
      %801 = vmatpush1.msra.mxu0 %v502
      %802 = vmatprep.subr.mxu0 0.0
      %803 = vmatpush1.msra.mxu0 %v497
      %804 = vmatprep.subr.mxu0 0.0
      %805 = vmatpush1.msra.mxu0 %v492
      %806 = vmatprep.subr.mxu0 0.0
      %807 = vmatpush1.msra.mxu0 %v487
      %808 = vmatprep.subr.mxu0 0.0
      %809 = vmatpush1.msra.mxu0 %v482
      %810 = vmatprep.subr.mxu0 0.0
      %811 = vmatpush1.msra.mxu0 %v477
      %812 = vmatprep.subr.mxu0 0.0
      %813 = vmatpush1.msra.mxu0 %v472
      %814 = vmatprep.subr.mxu0 0.0
      %815 = vmatpush2.msra.mxu0 0.0
      %816 = vmatprep.subr.mxu0 0.0
      %817 = vmatpush2.msra.mxu0 0.0
      %818 = vmatprep.subr.mxu0 0.0
      %819 = vmatpush2.msra.mxu0 0.0
      %820 = vmatprep.subr.mxu0 0.0
      %821 = vmatpush2.msra.mxu0 0.0
      %822 = vmatprep.subr.mxu0 0.0
      %823 = vmatpush2.msra.mxu0 0.0
      %824 = vmatprep.subr.mxu0 0.0
      %825 = vmatpush2.msra.mxu0 0.0
      %826 = vmatprep.subr.mxu0 0.0
      %827 = vmatpush2.msra.mxu0 0.0
      %828 = vmatprep.subr.mxu0 0.0
      %829 = vmatpush2.msra.mxu0 0.0
      %830 = vmatprep.subr.mxu0 0.0
      %831 = vmatpush2.msra.mxu0 0.0
      %832 = vmatprep.subr.mxu0 0.0
      %833 = vmatpush2.msra.mxu0 0.0
      %834 = vmatprep.subr.mxu0 0.0
      %835 = vmatpush2.msra.mxu0 0.0
      %836 = vmatprep.subr.mxu0 0.0
      %837 = vmatpush2.msra.mxu0 0.0
      %838 = vmatprep.subr.mxu0 0.0
      %839 = vmatpush2.msra.mxu0 0.0
      %840 = vmatprep.subr.mxu0 0.0
      %841 = vmatpush2.msra.mxu0 0.0
      %842 = vmatprep.subr.mxu0 0.0
      %843 = vmatpush2.msra.mxu0 0.0
      %844 = vmatprep.subr.mxu0 0.0
      %845 = vmatpush2.msra.mxu0 0.0
      %846 = vmatprep.mubr.f32.mxu0 0.0
      %847 = vmatmul.mubr.f32.gmra.mxu0 %v593
      %v848 = vpop.f32.mrf.mxu0
      %v849 = vadd.f32 0.0, %v848
      %v850 = vpop.f32.mrf.mxu0
      %851 = vmatprep.mubr.f32.mxu0 0.0
      %852 = vmatmul.mubr.f32.gmra.mxu0 %v596
      %v853 = vpop.f32.mrf.mxu0
      %v854 = vadd.f32 0.0, %v853
      %v855 = vpop.f32.mrf.mxu0
      %856 = vmatprep.mubr.f32.mxu0 0.0
      %857 = vmatmul.mubr.f32.gmra.mxu0 %v599
      %v858 = vpop.f32.mrf.mxu0
      %v859 = vadd.f32 0.0, %v858
      %v860 = vpop.f32.mrf.mxu0
      %861 = vmatprep.mubr.f32.mxu0 0.0
      %862 = vmatmul.mubr.f32.gmra.mxu0 %v602
      %v863 = vpop.f32.mrf.mxu0
      %v864 = vadd.f32 0.0, %v863
      %v865 = vpop.f32.mrf.mxu0
      %866 = vdwg.mxu0
      %v868 = vlaneseq
      %v869 = vshrl.u32 %v868, 7
      %v870 = vsub.s32 0, %v869
      %v871 = vrot.slane %v508, %v870
      %v872 = vlaneseq
      %v873 = vshrl.u32 %v872, 7
      %v874 = vsub.s32 1, %v873
      %v875 = vrot.slane %v508, %v874
      %v876 = vlaneseq
      %v877 = vshrl.u32 %v876, 7
      %v878 = vsub.s32 2, %v877
      %v879 = vrot.slane %v508, %v878
      %v880 = vlaneseq
      %v881 = vshrl.u32 %v880, 7
      %v882 = vsub.s32 3, %v881
      %v883 = vrot.slane %v508, %v882
      %v884 = vlaneseq
      %v885 = vshrl.u32 %v884, 7
      %v886 = vsub.s32 4, %v885
      %v887 = vrot.slane %v508, %v886
      %894 = vset.pattern.permute.xlu0 0
      %895 = vperm.xlu0 %894, %v510
      %v896 = vpop.permute.xlu0 %895
      %v898 = vsub.f32 %v871, %v896
      %v899 = vsub.f32 %v875, %v896
      %v900 = vsub.f32 %v879, %v896
      %v901 = vsub.f32 %v883, %v896
      %v902 = vsub.f32 %v887, %v896
      %v903 = vmul.f32 %v898, -0.5
      %v904 = vmul.f32 %v899, -0.5
      %v905 = vmul.f32 %v900, -0.5
      %v906 = vmul.f32 %v901, -0.5
      %v907 = vmul.f32 %v902, -0.5
      %v908 = vmul.f32 %v903, %v898
      %v909 = vmul.f32 %v904, %v899
      %v910 = vmul.f32 %v905, %v900
      %v911 = vmul.f32 %v906, %v901
      %v912 = vmul.f32 %v907, %v902
      %913 = vset.pattern.permute.xlu0 2
      %914 = vperm.xlu0 %913, %v510
      %v915 = vpop.permute.xlu0 %914
      %v917 = vmul.f32 %v908, %v915
      %v918 = vmul.f32 %v909, %v915
      %v919 = vmul.f32 %v910, %v915
      %v920 = vmul.f32 %v911, %v915
      %v921 = vmul.f32 %v912, %v915
      %v922 = vmul.f32 %v917, 1.442695
      %v923 = vpow.pop %v922
      %v924 = vmul.f32 %v918, 1.442695
      %v925 = vpow.pop %v924
      %v926 = vmul.f32 %v919, 1.442695
      %v927 = vpow.pop %v926
      %v928 = vmul.f32 %v920, 1.442695
      %v929 = vpow.pop %v928
      %v930 = vmul.f32 %v921, 1.442695
      %v931 = vpow.pop %v930
      %v933 = vlaneseq
      %v934 = vshrl.u32 %v933, 7
      %v935 = vsub.s32 0, %v934
      %v936 = vrot.slane %v509, %v935
      %v937 = vlaneseq
      %v938 = vshrl.u32 %v937, 7
      %v939 = vsub.s32 1, %v938
      %v940 = vrot.slane %v509, %v939
      %v941 = vlaneseq
      %v942 = vshrl.u32 %v941, 7
      %v943 = vsub.s32 2, %v942
      %v944 = vrot.slane %v509, %v943
      %v945 = vlaneseq
      %v946 = vshrl.u32 %v945, 7
      %v947 = vsub.s32 3, %v946
      %v948 = vrot.slane %v509, %v947
      %v949 = vlaneseq
      %v950 = vshrl.u32 %v949, 7
      %v951 = vsub.s32 4, %v950
      %v952 = vrot.slane %v509, %v951
      %958 = vset.pattern.permute.xlu0 1
      %959 = vperm.xlu0 %958, %v510
      %v960 = vpop.permute.xlu0 %959
      %v962 = vsub.f32 %v936, %v960
      %v963 = vsub.f32 %v940, %v960
      %v964 = vsub.f32 %v944, %v960
      %v965 = vsub.f32 %v948, %v960
      %v966 = vsub.f32 %v952, %v960
      %v967 = vand.u32 2147483647, %v962
      %v968 = vand.u32 2147483647, %v963
      %v969 = vand.u32 2147483647, %v964
      %v970 = vand.u32 2147483647, %v965
      %v971 = vand.u32 2147483647, %v966
      %v972 = vsub.f32 6.2831855, %v967
      %v973 = vsub.f32 6.2831855, %v968
      %v974 = vsub.f32 6.2831855, %v969
      %v975 = vsub.f32 6.2831855, %v970
      %v976 = vsub.f32 6.2831855, %v971
      %v977 = vand.u32 2147483647, %v972
      %v978 = vand.u32 2147483647, %v973
      %v979 = vand.u32 2147483647, %v974
      %v980 = vand.u32 2147483647, %v975
      %v981 = vand.u32 2147483647, %v976
      %v982 = vmin.f32 %v967, %v977
      %v983 = vmin.f32 %v968, %v978
      %v984 = vmin.f32 %v969, %v979
      %v985 = vmin.f32 %v970, %v980
      %v986 = vmin.f32 %v971, %v981
      %v987 = vmul.f32 %v982, -0.5
      %v988 = vmul.f32 %v983, -0.5
      %v989 = vmul.f32 %v984, -0.5
      %v990 = vmul.f32 %v985, -0.5
      %v991 = vmul.f32 %v986, -0.5
      %v992 = vmul.f32 %v987, %v982
      %v993 = vmul.f32 %v988, %v983
      %v994 = vmul.f32 %v989, %v984
      %v995 = vmul.f32 %v990, %v985
      %v996 = vmul.f32 %v991, %v986
      %997 = vset.pattern.permute.xlu0 3
      %998 = vperm.xlu0 %997, %v510
      %v999 = vpop.permute.xlu0 %998
      %v1001 = vmul.f32 %v992, %v999
      %v1002 = vmul.f32 %v993, %v999
      %v1003 = vmul.f32 %v994, %v999
      %v1004 = vmul.f32 %v995, %v999
      %v1005 = vmul.f32 %v996, %v999
      %v1006 = vmul.f32 %v1001, 1.442695
      %v1007 = vpow.pop %v1006
      %v1008 = vmul.f32 %v1002, 1.442695
      %v1009 = vpow.pop %v1008
      %v1010 = vmul.f32 %v1003, 1.442695
      %v1011 = vpow.pop %v1010
      %v1012 = vmul.f32 %v1004, 1.442695
      %v1013 = vpow.pop %v1012
      %v1014 = vmul.f32 %v1005, 1.442695
      %v1015 = vpow.pop %v1014
      %v1016 = vmul.f32 %v923, %v1007
      %v1017 = vmul.f32 %v925, %v1009
      %v1018 = vmul.f32 %v927, %v1011
      %v1019 = vmul.f32 %v929, %v1013
      %v1020 = vmul.f32 %v931, %v1015
      %v1021 = vrot.slane %v1016, 4
      %v1022 = vadd.f32 %v1016, %v1021
      %v1023 = vrot.slane %v1022, 2
      %v1024 = vadd.f32 %v1022, %v1023
      %v1025 = vrot.slane %v1024, 1
      %v1026 = vadd.f32 %v1024, %v1025
      %v1027 = vrot.slane %v1017, 4
      %v1028 = vadd.f32 %v1017, %v1027
      %v1029 = vrot.slane %v1028, 2
      %v1030 = vadd.f32 %v1028, %v1029
      %v1031 = vrot.slane %v1030, 1
      %v1032 = vadd.f32 %v1030, %v1031
      %v1033 = vrot.slane %v1018, 4
      %v1034 = vadd.f32 %v1018, %v1033
      %v1035 = vrot.slane %v1034, 2
      %v1036 = vadd.f32 %v1034, %v1035
      %v1037 = vrot.slane %v1036, 1
      %v1038 = vadd.f32 %v1036, %v1037
      %v1039 = vrot.slane %v1019, 4
      %v1040 = vadd.f32 %v1019, %v1039
      %v1041 = vrot.slane %v1040, 2
      %v1042 = vadd.f32 %v1040, %v1041
      %v1043 = vrot.slane %v1042, 1
      %v1044 = vadd.f32 %v1042, %v1043
      %v1045 = vsel %vm591, %v1020, 0.0
      %v1046 = vrot.slane %v1045, 4
      %v1047 = vadd.f32 %v1045, %v1046
      %v1048 = vrot.slane %v1047, 2
      %v1049 = vadd.f32 %v1047, %v1048
      %v1050 = vrot.slane %v1049, 1
      %v1051 = vadd.f32 %v1049, %v1050
      %v1052 = vadd.f32 %v1026, 1e-20
      %v1053 = vadd.f32 %v1032, 1e-20
      %v1054 = vadd.f32 %v1038, 1e-20
      %v1055 = vadd.f32 %v1044, 1e-20
      %v1056 = vadd.f32 %v1051, 1e-20
      %v1057 = vrcp.pop %v1052
      %v1058 = vrcp.pop %v1053
      %v1059 = vrcp.pop %v1054
      %v1060 = vrcp.pop %v1055
      %v1061 = vrcp.pop %v1056
      %v1062 = vmul.f32 %v1016, %v1057
      %v1063 = vmul.f32 %v1017, %v1058
      %v1064 = vmul.f32 %v1018, %v1059
      %v1065 = vmul.f32 %v1019, %v1060
      %v1066 = vmul.f32 %v1020, %v1061
      %vm1067 = vcmask 64512
      %v1069 = vsel %vm1067, %v515, 0
      %v1072 = vsel %vm1067, %v516, 0
      %v1075 = vsel %vm1067, %v517, 0
      %v1078 = vsel %vm1067, %v518, 0
      %1080 = vmatprep.subr.mxu0 0.0
      %1081 = vmatpush1.msra.mxu0 0.0
      %1082 = vmatprep.subr.mxu0 0.0
      %1083 = vmatpush1.msra.mxu0 0.0
      %1084 = vmatprep.subr.mxu0 0.0
      %1085 = vmatpush1.msra.mxu0 0.0
      %1086 = vmatprep.subr.mxu0 0.0
      %1087 = vmatpush1.msra.mxu0 0.0
      %1088 = vmatprep.subr.mxu0 0.0
      %1089 = vmatpush1.msra.mxu0 0.0
      %1090 = vmatprep.subr.mxu0 0.0
      %1091 = vmatpush1.msra.mxu0 0.0
      %1092 = vmatprep.subr.mxu0 0.0
      %1093 = vmatpush1.msra.mxu0 0.0
      %1094 = vmatprep.subr.mxu0 0.0
      %1095 = vmatpush1.msra.mxu0 0.0
      %1096 = vmatprep.subr.mxu0 0.0
      %1097 = vmatpush1.msra.mxu0 0.0
      %1098 = vmatprep.subr.mxu0 0.0
      %1099 = vmatpush1.msra.mxu0 0.0
      %1100 = vmatprep.subr.mxu0 0.0
      %1101 = vmatpush1.msra.mxu0 0.0
      %1102 = vmatprep.subr.mxu0 0.0
      %1103 = vmatpush1.msra.mxu0 0.0
      %1104 = vmatprep.subr.mxu0 0.0
      %1105 = vmatpush1.msra.mxu0 0.0
      %1106 = vmatprep.subr.mxu0 0.0
      %1107 = vmatpush1.msra.mxu0 0.0
      %1108 = vmatprep.subr.mxu0 0.0
      %1109 = vmatpush1.msra.mxu0 0.0
      %1110 = vmatprep.subr.mxu0 %v1063
      %1111 = vmatpush1.msra.mxu0 %v1062
      %1112 = vmatprep.subr.mxu0 0.0
      %1113 = vmatpush2.msra.mxu0 0.0
      %1114 = vmatprep.subr.mxu0 0.0
      %1115 = vmatpush2.msra.mxu0 0.0
      %1116 = vmatprep.subr.mxu0 0.0
      %1117 = vmatpush2.msra.mxu0 0.0
      %1118 = vmatprep.subr.mxu0 0.0
      %1119 = vmatpush2.msra.mxu0 0.0
      %1120 = vmatprep.subr.mxu0 0.0
      %1121 = vmatpush2.msra.mxu0 0.0
      %1122 = vmatprep.subr.mxu0 0.0
      %1123 = vmatpush2.msra.mxu0 0.0
      %1124 = vmatprep.subr.mxu0 0.0
      %1125 = vmatpush2.msra.mxu0 0.0
      %1126 = vmatprep.subr.mxu0 0.0
      %1127 = vmatpush2.msra.mxu0 0.0
      %1128 = vmatprep.subr.mxu0 0.0
      %1129 = vmatpush2.msra.mxu0 0.0
      %1130 = vmatprep.subr.mxu0 0.0
      %1131 = vmatpush2.msra.mxu0 0.0
      %1132 = vmatprep.subr.mxu0 0.0
      %1133 = vmatpush2.msra.mxu0 0.0
      %1134 = vmatprep.subr.mxu0 0.0
      %1135 = vmatpush2.msra.mxu0 0.0
      %1136 = vmatprep.subr.mxu0 0.0
      %1137 = vmatpush2.msra.mxu0 0.0
      %1138 = vmatprep.subr.mxu0 0.0
      %1139 = vmatpush2.msra.mxu0 0.0
      %1140 = vmatprep.subr.mxu0 0.0
      %1141 = vmatpush2.msra.mxu0 0.0
      %1142 = vmatprep.subr.mxu0 0.0
      %1143 = vmatpush2.msra.mxu0 0.0
      %1144 = vmatprep.mubr.f32.mxu0 0.0
      %1145 = vmatmul.mubr.f32.gmra.mxu0 %v1069
      %v1146 = vpop.f32.mrf.mxu0
      %v1147 = vadd.f32 0.0, %v1146
      %v1148 = vpop.f32.mrf.mxu0
      %v1149 = vadd.f32 0.0, %v1148
      %1150 = vmatprep.mubr.f32.mxu0 0.0
      %1151 = vmatmul.mubr.f32.gmra.mxu0 %v1072
      %v1152 = vpop.f32.mrf.mxu0
      %v1153 = vadd.f32 0.0, %v1152
      %v1154 = vpop.f32.mrf.mxu0
      %v1155 = vadd.f32 0.0, %v1154
      %1156 = vmatprep.mubr.f32.mxu0 0.0
      %1157 = vmatmul.mubr.f32.gmra.mxu0 %v1075
      %v1158 = vpop.f32.mrf.mxu0
      %v1159 = vadd.f32 0.0, %v1158
      %v1160 = vpop.f32.mrf.mxu0
      %v1161 = vadd.f32 0.0, %v1160
      %1162 = vmatprep.mubr.f32.mxu0 0.0
      %1163 = vmatmul.mubr.f32.gmra.mxu0 %v1078
      %v1164 = vpop.f32.mrf.mxu0
      %v1165 = vadd.f32 0.0, %v1164
      %v1166 = vpop.f32.mrf.mxu0
      %v1167 = vadd.f32 0.0, %v1166
      %1168 = vdwg.mxu0
      %1169 = vmatprep.subr.mxu0 0.0
      %1170 = vmatpush1.msra.mxu0 0.0
      %1171 = vmatprep.subr.mxu0 0.0
      %1172 = vmatpush1.msra.mxu0 0.0
      %1173 = vmatprep.subr.mxu0 0.0
      %1174 = vmatpush1.msra.mxu0 0.0
      %1175 = vmatprep.subr.mxu0 0.0
      %1176 = vmatpush1.msra.mxu0 0.0
      %1177 = vmatprep.subr.mxu0 0.0
      %1178 = vmatpush1.msra.mxu0 0.0
      %1179 = vmatprep.subr.mxu0 0.0
      %1180 = vmatpush1.msra.mxu0 0.0
      %1181 = vmatprep.subr.mxu0 0.0
      %1182 = vmatpush1.msra.mxu0 0.0
      %1183 = vmatprep.subr.mxu0 0.0
      %1184 = vmatpush1.msra.mxu0 0.0
      %1185 = vmatprep.subr.mxu0 0.0
      %1186 = vmatpush1.msra.mxu0 0.0
      %1187 = vmatprep.subr.mxu0 0.0
      %1188 = vmatpush1.msra.mxu0 0.0
      %1189 = vmatprep.subr.mxu0 0.0
      %1190 = vmatpush1.msra.mxu0 0.0
      %1191 = vmatprep.subr.mxu0 0.0
      %1192 = vmatpush1.msra.mxu0 0.0
      %1193 = vmatprep.subr.mxu0 0.0
      %1194 = vmatpush1.msra.mxu0 0.0
      %1195 = vmatprep.subr.mxu0 0.0
      %1196 = vmatpush1.msra.mxu0 0.0
      %1197 = vmatprep.subr.mxu0 0.0
      %1198 = vmatpush1.msra.mxu0 0.0
      %1199 = vmatprep.subr.mxu0 %v1065
      %1200 = vmatpush1.msra.mxu0 %v1064
      %1201 = vmatprep.subr.mxu0 0.0
      %1202 = vmatpush2.msra.mxu0 0.0
      %1203 = vmatprep.subr.mxu0 0.0
      %1204 = vmatpush2.msra.mxu0 0.0
      %1205 = vmatprep.subr.mxu0 0.0
      %1206 = vmatpush2.msra.mxu0 0.0
      %1207 = vmatprep.subr.mxu0 0.0
      %1208 = vmatpush2.msra.mxu0 0.0
      %1209 = vmatprep.subr.mxu0 0.0
      %1210 = vmatpush2.msra.mxu0 0.0
      %1211 = vmatprep.subr.mxu0 0.0
      %1212 = vmatpush2.msra.mxu0 0.0
      %1213 = vmatprep.subr.mxu0 0.0
      %1214 = vmatpush2.msra.mxu0 0.0
      %1215 = vmatprep.subr.mxu0 0.0
      %1216 = vmatpush2.msra.mxu0 0.0
      %1217 = vmatprep.subr.mxu0 0.0
      %1218 = vmatpush2.msra.mxu0 0.0
      %1219 = vmatprep.subr.mxu0 0.0
      %1220 = vmatpush2.msra.mxu0 0.0
      %1221 = vmatprep.subr.mxu0 0.0
      %1222 = vmatpush2.msra.mxu0 0.0
      %1223 = vmatprep.subr.mxu0 0.0
      %1224 = vmatpush2.msra.mxu0 0.0
      %1225 = vmatprep.subr.mxu0 0.0
      %1226 = vmatpush2.msra.mxu0 0.0
      %1227 = vmatprep.subr.mxu0 0.0
      %1228 = vmatpush2.msra.mxu0 0.0
      %1229 = vmatprep.subr.mxu0 0.0
      %1230 = vmatpush2.msra.mxu0 0.0
      %1231 = vmatprep.subr.mxu0 0.0
      %1232 = vmatpush2.msra.mxu0 0.0
      %1233 = vmatprep.mubr.f32.mxu0 0.0
      %1234 = vmatmul.mubr.f32.gmra.mxu0 %v1069
      %v1235 = vpop.f32.mrf.mxu0
      %v1236 = vadd.f32 0.0, %v1235
      %v1237 = vpop.f32.mrf.mxu0
      %v1238 = vadd.f32 0.0, %v1237
      %1239 = vmatprep.mubr.f32.mxu0 0.0
      %1240 = vmatmul.mubr.f32.gmra.mxu0 %v1072
      %v1241 = vpop.f32.mrf.mxu0
      %v1242 = vadd.f32 0.0, %v1241
      %v1243 = vpop.f32.mrf.mxu0
      %v1244 = vadd.f32 0.0, %v1243
      %1245 = vmatprep.mubr.f32.mxu0 0.0
      %1246 = vmatmul.mubr.f32.gmra.mxu0 %v1075
      %v1247 = vpop.f32.mrf.mxu0
      %v1248 = vadd.f32 0.0, %v1247
      %v1249 = vpop.f32.mrf.mxu0
      %v1250 = vadd.f32 0.0, %v1249
      %1251 = vmatprep.mubr.f32.mxu0 0.0
      %1252 = vmatmul.mubr.f32.gmra.mxu0 %v1078
      %v1253 = vpop.f32.mrf.mxu0
      %v1254 = vadd.f32 0.0, %v1253
      %v1255 = vpop.f32.mrf.mxu0
      %v1256 = vadd.f32 0.0, %v1255
      %1257 = vdwg.mxu0
      %1258 = vmatprep.subr.mxu0 0.0
      %1259 = vmatpush1.msra.mxu0 0.0
      %1260 = vmatprep.subr.mxu0 0.0
      %1261 = vmatpush1.msra.mxu0 0.0
      %1262 = vmatprep.subr.mxu0 0.0
      %1263 = vmatpush1.msra.mxu0 0.0
      %1264 = vmatprep.subr.mxu0 0.0
      %1265 = vmatpush1.msra.mxu0 0.0
      %1266 = vmatprep.subr.mxu0 0.0
      %1267 = vmatpush1.msra.mxu0 0.0
      %1268 = vmatprep.subr.mxu0 0.0
      %1269 = vmatpush1.msra.mxu0 0.0
      %1270 = vmatprep.subr.mxu0 0.0
      %1271 = vmatpush1.msra.mxu0 0.0
      %1272 = vmatprep.subr.mxu0 0.0
      %1273 = vmatpush1.msra.mxu0 0.0
      %1274 = vmatprep.subr.mxu0 0.0
      %1275 = vmatpush1.msra.mxu0 0.0
      %1276 = vmatprep.subr.mxu0 0.0
      %1277 = vmatpush1.msra.mxu0 0.0
      %1278 = vmatprep.subr.mxu0 0.0
      %1279 = vmatpush1.msra.mxu0 0.0
      %1280 = vmatprep.subr.mxu0 0.0
      %1281 = vmatpush1.msra.mxu0 0.0
      %1282 = vmatprep.subr.mxu0 0.0
      %1283 = vmatpush1.msra.mxu0 0.0
      %1284 = vmatprep.subr.mxu0 0.0
      %1285 = vmatpush1.msra.mxu0 0.0
      %1286 = vmatprep.subr.mxu0 0.0
      %1287 = vmatpush1.msra.mxu0 0.0
      %1288 = vmatprep.subr.mxu0 0.0
      %1289 = vmatpush1.msra.mxu0 %v1066
      %1290 = vmatprep.subr.mxu0 0.0
      %1291 = vmatpush2.msra.mxu0 0.0
      %1292 = vmatprep.subr.mxu0 0.0
      %1293 = vmatpush2.msra.mxu0 0.0
      %1294 = vmatprep.subr.mxu0 0.0
      %1295 = vmatpush2.msra.mxu0 0.0
      %1296 = vmatprep.subr.mxu0 0.0
      %1297 = vmatpush2.msra.mxu0 0.0
      %1298 = vmatprep.subr.mxu0 0.0
      %1299 = vmatpush2.msra.mxu0 0.0
      %1300 = vmatprep.subr.mxu0 0.0
      %1301 = vmatpush2.msra.mxu0 0.0
      %1302 = vmatprep.subr.mxu0 0.0
      %1303 = vmatpush2.msra.mxu0 0.0
      %1304 = vmatprep.subr.mxu0 0.0
      %1305 = vmatpush2.msra.mxu0 0.0
      %1306 = vmatprep.subr.mxu0 0.0
      %1307 = vmatpush2.msra.mxu0 0.0
      %1308 = vmatprep.subr.mxu0 0.0
      %1309 = vmatpush2.msra.mxu0 0.0
      %1310 = vmatprep.subr.mxu0 0.0
      %1311 = vmatpush2.msra.mxu0 0.0
      %1312 = vmatprep.subr.mxu0 0.0
      %1313 = vmatpush2.msra.mxu0 0.0
      %1314 = vmatprep.subr.mxu0 0.0
      %1315 = vmatpush2.msra.mxu0 0.0
      %1316 = vmatprep.subr.mxu0 0.0
      %1317 = vmatpush2.msra.mxu0 0.0
      %1318 = vmatprep.subr.mxu0 0.0
      %1319 = vmatpush2.msra.mxu0 0.0
      %1320 = vmatprep.subr.mxu0 0.0
      %1321 = vmatpush2.msra.mxu0 0.0
      %1322 = vmatprep.mubr.f32.mxu0 0.0
      %1323 = vmatmul.mubr.f32.gmra.mxu0 %v1069
      %v1324 = vpop.f32.mrf.mxu0
      %v1325 = vadd.f32 0.0, %v1324
      %v1326 = vpop.f32.mrf.mxu0
      %1327 = vmatprep.mubr.f32.mxu0 0.0
      %1328 = vmatmul.mubr.f32.gmra.mxu0 %v1072
      %v1329 = vpop.f32.mrf.mxu0
      %v1330 = vadd.f32 0.0, %v1329
      %v1331 = vpop.f32.mrf.mxu0
      %1332 = vmatprep.mubr.f32.mxu0 0.0
      %1333 = vmatmul.mubr.f32.gmra.mxu0 %v1075
      %v1334 = vpop.f32.mrf.mxu0
      %v1335 = vadd.f32 0.0, %v1334
      %v1336 = vpop.f32.mrf.mxu0
      %1337 = vmatprep.mubr.f32.mxu0 0.0
      %1338 = vmatmul.mubr.f32.gmra.mxu0 %v1078
      %v1339 = vpop.f32.mrf.mxu0
      %v1340 = vadd.f32 0.0, %v1339
      %v1341 = vpop.f32.mrf.mxu0
      %1342 = vdwg.mxu0
      %v1343 = vmul.f32 %v1147, %v671
      %v1344 = vmul.f32 %v1149, %v673
      %v1345 = vmul.f32 %v1236, %v760
      %v1346 = vmul.f32 %v1238, %v762
      %v1347 = vmul.f32 %v1325, %v849
      %v1348 = vmul.f32 %v1153, %v677
      %v1349 = vmul.f32 %v1155, %v679
      %v1350 = vmul.f32 %v1242, %v766
      %v1351 = vmul.f32 %v1244, %v768
      %v1352 = vmul.f32 %v1330, %v854
      %v1353 = vmul.f32 %v1159, %v683
      %v1354 = vmul.f32 %v1161, %v685
      %v1355 = vmul.f32 %v1248, %v772
      %v1356 = vmul.f32 %v1250, %v774
      %v1357 = vmul.f32 %v1335, %v859
      %v1358 = vmul.f32 %v1165, %v689
      %v1359 = vmul.f32 %v1167, %v691
      %v1360 = vmul.f32 %v1254, %v778
      %v1361 = vmul.f32 %v1256, %v780
      %v1362 = vmul.f32 %v1340, %v864
      %v1364 = vsel %vm591, %v1347, 0
      %v1367 = vsel %vm591, %v1352, 0
      %v1370 = vsel %vm591, %v1357, 0
      %v1373 = vsel %vm591, %v1362, 0
      %1375 = vmatprep.subr.mxu0 0.0
      %1376 = vmatpush1.msra.mxu0 %v534
      %1377 = vmatprep.subr.mxu0 0.0
      %1378 = vmatpush1.msra.mxu0 %v533
      %1379 = vmatprep.subr.mxu0 0.0
      %1380 = vmatpush1.msra.mxu0 %v532
      %1381 = vmatprep.subr.mxu0 0.0
      %1382 = vmatpush1.msra.mxu0 %v531
      %1383 = vmatprep.subr.mxu0 0.0
      %1384 = vmatpush1.msra.mxu0 %v530
      %1385 = vmatprep.subr.mxu0 0.0
      %1386 = vmatpush1.msra.mxu0 %v529
      %1387 = vmatprep.subr.mxu0 0.0
      %1388 = vmatpush1.msra.mxu0 %v528
      %1389 = vmatprep.subr.mxu0 0.0
      %1390 = vmatpush1.msra.mxu0 %v527
      %1391 = vmatprep.subr.mxu0 0.0
      %1392 = vmatpush1.msra.mxu0 %v526
      %1393 = vmatprep.subr.mxu0 0.0
      %1394 = vmatpush1.msra.mxu0 %v525
      %1395 = vmatprep.subr.mxu0 0.0
      %1396 = vmatpush1.msra.mxu0 %v524
      %1397 = vmatprep.subr.mxu0 0.0
      %1398 = vmatpush1.msra.mxu0 %v523
      %1399 = vmatprep.subr.mxu0 0.0
      %1400 = vmatpush1.msra.mxu0 %v522
      %1401 = vmatprep.subr.mxu0 0.0
      %1402 = vmatpush1.msra.mxu0 %v521
      %1403 = vmatprep.subr.mxu0 0.0
      %1404 = vmatpush1.msra.mxu0 %v520
      %1405 = vmatprep.subr.mxu0 0.0
      %1406 = vmatpush1.msra.mxu0 %v519
      %1407 = vmatprep.subr.mxu0 0.0
      %1408 = vmatpush2.msra.mxu0 %v550
      %1409 = vmatprep.subr.mxu0 0.0
      %1410 = vmatpush2.msra.mxu0 %v549
      %1411 = vmatprep.subr.mxu0 0.0
      %1412 = vmatpush2.msra.mxu0 %v548
      %1413 = vmatprep.subr.mxu0 0.0
      %1414 = vmatpush2.msra.mxu0 %v547
      %1415 = vmatprep.subr.mxu0 0.0
      %1416 = vmatpush2.msra.mxu0 %v546
      %1417 = vmatprep.subr.mxu0 0.0
      %1418 = vmatpush2.msra.mxu0 %v545
      %1419 = vmatprep.subr.mxu0 0.0
      %1420 = vmatpush2.msra.mxu0 %v544
      %1421 = vmatprep.subr.mxu0 0.0
      %1422 = vmatpush2.msra.mxu0 %v543
      %1423 = vmatprep.subr.mxu0 0.0
      %1424 = vmatpush2.msra.mxu0 %v542
      %1425 = vmatprep.subr.mxu0 0.0
      %1426 = vmatpush2.msra.mxu0 %v541
      %1427 = vmatprep.subr.mxu0 0.0
      %1428 = vmatpush2.msra.mxu0 %v540
      %1429 = vmatprep.subr.mxu0 0.0
      %1430 = vmatpush2.msra.mxu0 %v539
      %1431 = vmatprep.subr.mxu0 0.0
      %1432 = vmatpush2.msra.mxu0 %v538
      %1433 = vmatprep.subr.mxu0 0.0
      %1434 = vmatpush2.msra.mxu0 %v537
      %1435 = vmatprep.subr.mxu0 0.0
      %1436 = vmatpush2.msra.mxu0 %v536
      %1437 = vmatprep.subr.mxu0 0.0
      %1438 = vmatpush2.msra.mxu0 %v535
      %1439 = vmatprep.mubr.f32.mxu0 %v1344
      %1440 = vmatmul.mubr.f32.gmra.mxu0 %v1343
      %v1441 = vpop.f32.mrf.mxu0
      %v1442 = vadd.f32 0.0, %v1441
      %v1443 = vpop.f32.mrf.mxu0
      %1444 = vmatprep.mubr.f32.mxu0 %v1349
      %1445 = vmatmul.mubr.f32.gmra.mxu0 %v1348
      %v1446 = vpop.f32.mrf.mxu0
      %v1447 = vadd.f32 0.0, %v1446
      %v1448 = vpop.f32.mrf.mxu0
      %1449 = vmatprep.mubr.f32.mxu0 %v1354
      %1450 = vmatmul.mubr.f32.gmra.mxu0 %v1353
      %v1451 = vpop.f32.mrf.mxu0
      %v1452 = vadd.f32 0.0, %v1451
      %v1453 = vpop.f32.mrf.mxu0
      %1454 = vmatprep.mubr.f32.mxu0 %v1359
      %1455 = vmatmul.mubr.f32.gmra.mxu0 %v1358
      %v1456 = vpop.f32.mrf.mxu0
      %v1457 = vadd.f32 0.0, %v1456
      %v1458 = vpop.f32.mrf.mxu0
      %1459 = vdwg.mxu0
      %1460 = vmatprep.subr.mxu0 0.0
      %1461 = vmatpush1.msra.mxu0 %v566
      %1462 = vmatprep.subr.mxu0 0.0
      %1463 = vmatpush1.msra.mxu0 %v565
      %1464 = vmatprep.subr.mxu0 0.0
      %1465 = vmatpush1.msra.mxu0 %v564
      %1466 = vmatprep.subr.mxu0 0.0
      %1467 = vmatpush1.msra.mxu0 %v563
      %1468 = vmatprep.subr.mxu0 0.0
      %1469 = vmatpush1.msra.mxu0 %v562
      %1470 = vmatprep.subr.mxu0 0.0
      %1471 = vmatpush1.msra.mxu0 %v561
      %1472 = vmatprep.subr.mxu0 0.0
      %1473 = vmatpush1.msra.mxu0 %v560
      %1474 = vmatprep.subr.mxu0 0.0
      %1475 = vmatpush1.msra.mxu0 %v559
      %1476 = vmatprep.subr.mxu0 0.0
      %1477 = vmatpush1.msra.mxu0 %v558
      %1478 = vmatprep.subr.mxu0 0.0
      %1479 = vmatpush1.msra.mxu0 %v557
      %1480 = vmatprep.subr.mxu0 0.0
      %1481 = vmatpush1.msra.mxu0 %v556
      %1482 = vmatprep.subr.mxu0 0.0
      %1483 = vmatpush1.msra.mxu0 %v555
      %1484 = vmatprep.subr.mxu0 0.0
      %1485 = vmatpush1.msra.mxu0 %v554
      %1486 = vmatprep.subr.mxu0 0.0
      %1487 = vmatpush1.msra.mxu0 %v553
      %1488 = vmatprep.subr.mxu0 0.0
      %1489 = vmatpush1.msra.mxu0 %v552
      %1490 = vmatprep.subr.mxu0 0.0
      %1491 = vmatpush1.msra.mxu0 %v551
      %1492 = vmatprep.subr.mxu0 0.0
      %1493 = vmatpush2.msra.mxu0 %v582
      %1494 = vmatprep.subr.mxu0 0.0
      %1495 = vmatpush2.msra.mxu0 %v581
      %1496 = vmatprep.subr.mxu0 0.0
      %1497 = vmatpush2.msra.mxu0 %v580
      %1498 = vmatprep.subr.mxu0 0.0
      %1499 = vmatpush2.msra.mxu0 %v579
      %1500 = vmatprep.subr.mxu0 0.0
      %1501 = vmatpush2.msra.mxu0 %v578
      %1502 = vmatprep.subr.mxu0 0.0
      %1503 = vmatpush2.msra.mxu0 %v577
      %1504 = vmatprep.subr.mxu0 0.0
      %1505 = vmatpush2.msra.mxu0 %v576
      %1506 = vmatprep.subr.mxu0 0.0
      %1507 = vmatpush2.msra.mxu0 %v575
      %1508 = vmatprep.subr.mxu0 0.0
      %1509 = vmatpush2.msra.mxu0 %v574
      %1510 = vmatprep.subr.mxu0 0.0
      %1511 = vmatpush2.msra.mxu0 %v573
      %1512 = vmatprep.subr.mxu0 0.0
      %1513 = vmatpush2.msra.mxu0 %v572
      %1514 = vmatprep.subr.mxu0 0.0
      %1515 = vmatpush2.msra.mxu0 %v571
      %1516 = vmatprep.subr.mxu0 0.0
      %1517 = vmatpush2.msra.mxu0 %v570
      %1518 = vmatprep.subr.mxu0 0.0
      %1519 = vmatpush2.msra.mxu0 %v569
      %1520 = vmatprep.subr.mxu0 0.0
      %1521 = vmatpush2.msra.mxu0 %v568
      %1522 = vmatprep.subr.mxu0 0.0
      %1523 = vmatpush2.msra.mxu0 %v567
      %1524 = vmatprep.mubr.f32.mxu0 %v1346
      %1525 = vmatmul.mubr.f32.gmra.mxu0 %v1345
      %v1526 = vpop.f32.mrf.mxu0
      %v1527 = vadd.f32 %v1442, %v1526
      %v1528 = vpop.f32.mrf.mxu0
      %1529 = vmatprep.mubr.f32.mxu0 %v1351
      %1530 = vmatmul.mubr.f32.gmra.mxu0 %v1350
      %v1531 = vpop.f32.mrf.mxu0
      %v1532 = vadd.f32 %v1447, %v1531
      %v1533 = vpop.f32.mrf.mxu0
      %1534 = vmatprep.mubr.f32.mxu0 %v1356
      %1535 = vmatmul.mubr.f32.gmra.mxu0 %v1355
      %v1536 = vpop.f32.mrf.mxu0
      %v1537 = vadd.f32 %v1452, %v1536
      %v1538 = vpop.f32.mrf.mxu0
      %1539 = vmatprep.mubr.f32.mxu0 %v1361
      %1540 = vmatmul.mubr.f32.gmra.mxu0 %v1360
      %v1541 = vpop.f32.mrf.mxu0
      %v1542 = vadd.f32 %v1457, %v1541
      %v1543 = vpop.f32.mrf.mxu0
      %1544 = vdwg.mxu0
      %1545 = vmatprep.subr.mxu0 0.0
      %1546 = vmatpush1.msra.mxu0 0.0
      %1547 = vmatprep.subr.mxu0 0.0
      %1548 = vmatpush1.msra.mxu0 0.0
      %1549 = vmatprep.subr.mxu0 0.0
      %1550 = vmatpush1.msra.mxu0 0.0
      %1551 = vmatprep.subr.mxu0 0.0
      %1552 = vmatpush1.msra.mxu0 0.0
      %1553 = vmatprep.subr.mxu0 0.0
      %1554 = vmatpush1.msra.mxu0 0.0
      %1555 = vmatprep.subr.mxu0 0.0
      %1556 = vmatpush1.msra.mxu0 0.0
      %1557 = vmatprep.subr.mxu0 0.0
      %1558 = vmatpush1.msra.mxu0 0.0
      %1559 = vmatprep.subr.mxu0 0.0
      %1560 = vmatpush1.msra.mxu0 0.0
      %1561 = vmatprep.subr.mxu0 0.0
      %1562 = vmatpush1.msra.mxu0 %v590
      %1563 = vmatprep.subr.mxu0 0.0
      %1564 = vmatpush1.msra.mxu0 %v589
      %1565 = vmatprep.subr.mxu0 0.0
      %1566 = vmatpush1.msra.mxu0 %v588
      %1567 = vmatprep.subr.mxu0 0.0
      %1568 = vmatpush1.msra.mxu0 %v587
      %1569 = vmatprep.subr.mxu0 0.0
      %1570 = vmatpush1.msra.mxu0 %v586
      %1571 = vmatprep.subr.mxu0 0.0
      %1572 = vmatpush1.msra.mxu0 %v585
      %1573 = vmatprep.subr.mxu0 0.0
      %1574 = vmatpush1.msra.mxu0 %v584
      %1575 = vmatprep.subr.mxu0 0.0
      %1576 = vmatpush1.msra.mxu0 %v583
      %1577 = vmatprep.subr.mxu0 0.0
      %1578 = vmatpush2.msra.mxu0 0.0
      %1579 = vmatprep.subr.mxu0 0.0
      %1580 = vmatpush2.msra.mxu0 0.0
      %1581 = vmatprep.subr.mxu0 0.0
      %1582 = vmatpush2.msra.mxu0 0.0
      %1583 = vmatprep.subr.mxu0 0.0
      %1584 = vmatpush2.msra.mxu0 0.0
      %1585 = vmatprep.subr.mxu0 0.0
      %1586 = vmatpush2.msra.mxu0 0.0
      %1587 = vmatprep.subr.mxu0 0.0
      %1588 = vmatpush2.msra.mxu0 0.0
      %1589 = vmatprep.subr.mxu0 0.0
      %1590 = vmatpush2.msra.mxu0 0.0
      %1591 = vmatprep.subr.mxu0 0.0
      %1592 = vmatpush2.msra.mxu0 0.0
      %1593 = vmatprep.subr.mxu0 0.0
      %1594 = vmatpush2.msra.mxu0 0.0
      %1595 = vmatprep.subr.mxu0 0.0
      %1596 = vmatpush2.msra.mxu0 0.0
      %1597 = vmatprep.subr.mxu0 0.0
      %1598 = vmatpush2.msra.mxu0 0.0
      %1599 = vmatprep.subr.mxu0 0.0
      %1600 = vmatpush2.msra.mxu0 0.0
      %1601 = vmatprep.subr.mxu0 0.0
      %1602 = vmatpush2.msra.mxu0 0.0
      %1603 = vmatprep.subr.mxu0 0.0
      %1604 = vmatpush2.msra.mxu0 0.0
      %1605 = vmatprep.subr.mxu0 0.0
      %1606 = vmatpush2.msra.mxu0 0.0
      %1607 = vmatprep.subr.mxu0 0.0
      %1608 = vmatpush2.msra.mxu0 0.0
      %1609 = vmatprep.mubr.f32.mxu0 0.0
      %1610 = vmatmul.mubr.f32.gmra.mxu0 %v1364
      %v1611 = vpop.f32.mrf.mxu0
      %v1612 = vadd.f32 %v1527, %v1611
      %v1613 = vpop.f32.mrf.mxu0
      %1614 = vmatprep.mubr.f32.mxu0 0.0
      %1615 = vmatmul.mubr.f32.gmra.mxu0 %v1367
      %v1616 = vpop.f32.mrf.mxu0
      %v1617 = vadd.f32 %v1532, %v1616
      %v1618 = vpop.f32.mrf.mxu0
      %1619 = vmatprep.mubr.f32.mxu0 0.0
      %1620 = vmatmul.mubr.f32.gmra.mxu0 %v1370
      %v1621 = vpop.f32.mrf.mxu0
      %v1622 = vadd.f32 %v1537, %v1621
      %v1623 = vpop.f32.mrf.mxu0
      %1624 = vmatprep.mubr.f32.mxu0 0.0
      %1625 = vmatmul.mubr.f32.gmra.mxu0 %v1373
      %v1626 = vpop.f32.mrf.mxu0
      %v1627 = vadd.f32 %v1542, %v1626
      %v1628 = vpop.f32.mrf.mxu0
      %1629 = vdwg.mxu0
      %v1630 = vmax.f32 %v1612, 0.0
      %v1631 = vmax.f32 %v1617, 0.0
      %v1632 = vmax.f32 %v1622, 0.0
      %v1633 = vmax.f32 %v1627, 0.0
      %vm1634 = vcmask 293888
      %v1635 = vsel %vm1634, %v1630, -inf
      %1636 = vmax.xlane.f32.xlu0 %v1635
      %v1637 = vpop.xlane.xlu0 %1636
      %v1638 = vsel %vm1634, %v1631, -inf
      %1639 = vmax.xlane.f32.xlu0 %v1638
      %v1640 = vpop.xlane.xlu0 %1639
      %v1641 = vsel %vm1634, %v1632, -inf
      %1642 = vmax.xlane.f32.xlu0 %v1641
      %v1643 = vpop.xlane.xlu0 %1642
      %v1644 = vsel %vm1634, %v1633, -inf
      %1645 = vmax.xlane.f32.xlu0 %v1644
      %v1646 = vpop.xlane.xlu0 %1645
      %v1647 = vld [vmem:[%s462] sm:$0xff]
      %v1648 = vld [vmem:[%s462 + $0x8] sm:$0xff]
      %v1649 = vld [vmem:[%s462 + $0x10] sm:$0xff]
      %v1650 = vld [vmem:[%s462 + $0x18] sm:$0xff]
      %v1651 = vmax.f32 %v1647, 0.0
      %v1652 = vmax.f32 %v1648, 0.0
      %v1653 = vmax.f32 %v1649, 0.0
      %v1654 = vmax.f32 %v1650, 0.0
      %v1655 = vmul.f32 %v1651, %v1637
      %v1656 = vmul.f32 %v1652, %v1640
      %v1657 = vmul.f32 %v1653, %v1643
      %v1658 = vmul.f32 %v1654, %v1646
      %v1659 = vld [vmem:[%s8] sm:$0xff]
      %v1660 = vld [vmem:[%s8 + $0x8] sm:$0xff]
      %v1661 = vld [vmem:[%s9] sm:$0xff]
      %v1662 = vld [vmem:[%s9 + $0x8] sm:$0xff]
      %vm1663 = vcmask 261120
      %v1665 = vsel %vm1663, %v1659, 0
      %v1668 = vsel %vm1663, %v1660, 0
      %1670 = vmatprep.subr.mxu0 0.0
      %1671 = vmatpush1.msra.mxu0 0.0
      %1672 = vmatprep.subr.mxu0 0.0
      %1673 = vmatpush1.msra.mxu0 0.0
      %1674 = vmatprep.subr.mxu0 0.0
      %1675 = vmatpush1.msra.mxu0 0.0
      %1676 = vmatprep.subr.mxu0 0.0
      %1677 = vmatpush1.msra.mxu0 0.0
      %1678 = vmatprep.subr.mxu0 0.0
      %1679 = vmatpush1.msra.mxu0 0.0
      %1680 = vmatprep.subr.mxu0 0.0
      %1681 = vmatpush1.msra.mxu0 0.0
      %1682 = vmatprep.subr.mxu0 0.0
      %1683 = vmatpush1.msra.mxu0 0.0
      %1684 = vmatprep.subr.mxu0 0.0
      %1685 = vmatpush1.msra.mxu0 0.0
      %1686 = vmatprep.subr.mxu0 0.0
      %1687 = vmatpush1.msra.mxu0 0.0
      %1688 = vmatprep.subr.mxu0 0.0
      %1689 = vmatpush1.msra.mxu0 0.0
      %1690 = vmatprep.subr.mxu0 0.0
      %1691 = vmatpush1.msra.mxu0 0.0
      %1692 = vmatprep.subr.mxu0 0.0
      %1693 = vmatpush1.msra.mxu0 0.0
      %1694 = vmatprep.subr.mxu0 0.0
      %1695 = vmatpush1.msra.mxu0 %v1658
      %1696 = vmatprep.subr.mxu0 0.0
      %1697 = vmatpush1.msra.mxu0 %v1657
      %1698 = vmatprep.subr.mxu0 0.0
      %1699 = vmatpush1.msra.mxu0 %v1656
      %1700 = vmatprep.subr.mxu0 0.0
      %1701 = vmatpush1.msra.mxu0 %v1655
      %1702 = vmatprep.subr.mxu0 0.0
      %1703 = vmatpush2.msra.mxu0 0.0
      %1704 = vmatprep.subr.mxu0 0.0
      %1705 = vmatpush2.msra.mxu0 0.0
      %1706 = vmatprep.subr.mxu0 0.0
      %1707 = vmatpush2.msra.mxu0 0.0
      %1708 = vmatprep.subr.mxu0 0.0
      %1709 = vmatpush2.msra.mxu0 0.0
      %1710 = vmatprep.subr.mxu0 0.0
      %1711 = vmatpush2.msra.mxu0 0.0
      %1712 = vmatprep.subr.mxu0 0.0
      %1713 = vmatpush2.msra.mxu0 0.0
      %1714 = vmatprep.subr.mxu0 0.0
      %1715 = vmatpush2.msra.mxu0 0.0
      %1716 = vmatprep.subr.mxu0 0.0
      %1717 = vmatpush2.msra.mxu0 0.0
      %1718 = vmatprep.subr.mxu0 0.0
      %1719 = vmatpush2.msra.mxu0 0.0
      %1720 = vmatprep.subr.mxu0 0.0
      %1721 = vmatpush2.msra.mxu0 0.0
      %1722 = vmatprep.subr.mxu0 0.0
      %1723 = vmatpush2.msra.mxu0 0.0
      %1724 = vmatprep.subr.mxu0 0.0
      %1725 = vmatpush2.msra.mxu0 0.0
      %1726 = vmatprep.subr.mxu0 0.0
      %1727 = vmatpush2.msra.mxu0 0.0
      %1728 = vmatprep.subr.mxu0 0.0
      %1729 = vmatpush2.msra.mxu0 0.0
      %1730 = vmatprep.subr.mxu0 0.0
      %1731 = vmatpush2.msra.mxu0 0.0
      %1732 = vmatprep.subr.mxu0 0.0
      %1733 = vmatpush2.msra.mxu0 0.0
      %1734 = vmatprep.mubr.f32.mxu0 0.0
      %1735 = vmatmul.mubr.f32.gmra.mxu0 %v1665
      %v1736 = vpop.f32.mrf.mxu0
      %v1737 = vadd.f32 %v1661, %v1736
      %v1738 = vpop.f32.mrf.mxu0
      %1739 = vmatprep.mubr.f32.mxu0 0.0
      %1740 = vmatmul.mubr.f32.gmra.mxu0 %v1668
      %v1741 = vpop.f32.mrf.mxu0
      %v1742 = vadd.f32 %v1662, %v1741
      %v1743 = vpop.f32.mrf.mxu0
      %1744 = vdwg.mxu0
      %v1745 = vmax.f32 %v1737, 0.0
      %v1746 = vmax.f32 %v1742, 0.0
      %v1747 = vld [vmem:[%s10] sm:$0xff]
      %v1748 = vld [vmem:[%s10 + $0x8] sm:$0xff]
      %v1749 = vld [vmem:[%s11] sm:$0xff]
      %v1750 = vld [vmem:[%s11 + $0x8] sm:$0xff]
      %vm1751 = vcmask 130048
      %v1753 = vsel %vm1751, %v1747, 0
      %v1756 = vsel %vm1751, %v1748, 0
      %1758 = vmatprep.subr.mxu0 0.0
      %1759 = vmatpush1.msra.mxu0 0.0
      %1760 = vmatprep.subr.mxu0 0.0
      %1761 = vmatpush1.msra.mxu0 0.0
      %1762 = vmatprep.subr.mxu0 0.0
      %1763 = vmatpush1.msra.mxu0 0.0
      %1764 = vmatprep.subr.mxu0 0.0
      %1765 = vmatpush1.msra.mxu0 0.0
      %1766 = vmatprep.subr.mxu0 0.0
      %1767 = vmatpush1.msra.mxu0 0.0
      %1768 = vmatprep.subr.mxu0 0.0
      %1769 = vmatpush1.msra.mxu0 0.0
      %1770 = vmatprep.subr.mxu0 0.0
      %1771 = vmatpush1.msra.mxu0 0.0
      %1772 = vmatprep.subr.mxu0 0.0
      %1773 = vmatpush1.msra.mxu0 0.0
      %1774 = vmatprep.subr.mxu0 0.0
      %1775 = vmatpush1.msra.mxu0 0.0
      %1776 = vmatprep.subr.mxu0 0.0
      %1777 = vmatpush1.msra.mxu0 0.0
      %1778 = vmatprep.subr.mxu0 0.0
      %1779 = vmatpush1.msra.mxu0 0.0
      %1780 = vmatprep.subr.mxu0 0.0
      %1781 = vmatpush1.msra.mxu0 0.0
      %1782 = vmatprep.subr.mxu0 0.0
      %1783 = vmatpush1.msra.mxu0 0.0
      %1784 = vmatprep.subr.mxu0 0.0
      %1785 = vmatpush1.msra.mxu0 0.0
      %1786 = vmatprep.subr.mxu0 0.0
      %1787 = vmatpush1.msra.mxu0 %v1746
      %1788 = vmatprep.subr.mxu0 0.0
      %1789 = vmatpush1.msra.mxu0 %v1745
      %1790 = vmatprep.subr.mxu0 0.0
      %1791 = vmatpush2.msra.mxu0 0.0
      %1792 = vmatprep.subr.mxu0 0.0
      %1793 = vmatpush2.msra.mxu0 0.0
      %1794 = vmatprep.subr.mxu0 0.0
      %1795 = vmatpush2.msra.mxu0 0.0
      %1796 = vmatprep.subr.mxu0 0.0
      %1797 = vmatpush2.msra.mxu0 0.0
      %1798 = vmatprep.subr.mxu0 0.0
      %1799 = vmatpush2.msra.mxu0 0.0
      %1800 = vmatprep.subr.mxu0 0.0
      %1801 = vmatpush2.msra.mxu0 0.0
      %1802 = vmatprep.subr.mxu0 0.0
      %1803 = vmatpush2.msra.mxu0 0.0
      %1804 = vmatprep.subr.mxu0 0.0
      %1805 = vmatpush2.msra.mxu0 0.0
      %1806 = vmatprep.subr.mxu0 0.0
      %1807 = vmatpush2.msra.mxu0 0.0
      %1808 = vmatprep.subr.mxu0 0.0
      %1809 = vmatpush2.msra.mxu0 0.0
      %1810 = vmatprep.subr.mxu0 0.0
      %1811 = vmatpush2.msra.mxu0 0.0
      %1812 = vmatprep.subr.mxu0 0.0
      %1813 = vmatpush2.msra.mxu0 0.0
      %1814 = vmatprep.subr.mxu0 0.0
      %1815 = vmatpush2.msra.mxu0 0.0
      %1816 = vmatprep.subr.mxu0 0.0
      %1817 = vmatpush2.msra.mxu0 0.0
      %1818 = vmatprep.subr.mxu0 0.0
      %1819 = vmatpush2.msra.mxu0 0.0
      %1820 = vmatprep.subr.mxu0 0.0
      %1821 = vmatpush2.msra.mxu0 0.0
      %1822 = vmatprep.mubr.f32.mxu0 0.0
      %1823 = vmatmul.mubr.f32.gmra.mxu0 %v1753
      %v1824 = vpop.f32.mrf.mxu0
      %v1825 = vadd.f32 %v1749, %v1824
      %v1826 = vpop.f32.mrf.mxu0
      %1827 = vmatprep.mubr.f32.mxu0 0.0
      %1828 = vmatmul.mubr.f32.gmra.mxu0 %v1756
      %v1829 = vpop.f32.mrf.mxu0
      %v1830 = vadd.f32 %v1750, %v1829
      %v1831 = vpop.f32.mrf.mxu0
      %1832 = vdwg.mxu0
      %vm1833 = vcmask 7168
      %1834 = vst.msk [vmem:[%s467] sm:$0xff] %vm1833, %v1825
      %1835 = vst.msk [vmem:[%s467 + $0x8] sm:$0xff] %vm1833, %v1830
      %p1836 = scmp.lt.s32.totalorder %s23, 1
      %s1837 = scalar_select %p1836, %s23, 1
      %s1838 = smul.addr %s1837, 2
      %s1839 = smul.addr %s1838, 8
      %s1840 = scalar_lea.vmem %s12, %s1839
      // Predicated region
      $region69: #{model_forward.5} parent=67 // pred_check
        %p1841 = pneg %p313
      $region70: #{model_forward.5} parent=67 // pred_check_branch
        %1843 = sbr.rel (%p1841) target = $region72
      $region71: #{model_forward.5} parent=67 // pred_region
        _
      $region72: #{model_forward.5} parent=67 // pred_fallthru
        _
    $region68: #{model_forward.5} parent=5 // pred_fallthru
      _
    %p1844 = scmp.le.s32.totalorder 2, %s18
    // Predicated region
    $region73: #{model_forward.5} parent=5 // pred_check
      %p1845 = pneg %p1844
    $region74: #{model_forward.5} parent=5 // pred_check_branch
      %1847 = sbr.rel (%p1845) target = $region76
    $region75: #{model_forward.5} parent=5 // pred_region
      %s1848 = ssub.s32 %s18, 2
      // Predicated region
      $region77: #{model_forward.5} parent=75 // pred_check
        %p1849 = pneg %p319
      $region78: #{model_forward.5} parent=75 // pred_check_branch
        %1851 = sbr.rel (%p1849) target = $region80
      $region79: #{model_forward.5} parent=75 // pred_region
        %p1852 = scmp.lt.s32.totalorder %s24, 1
        %s1853 = scalar_select %p1852, %s24, 1
        %s1854 = smul.addr %s1853, 2
        %s1855 = smul.addr %s1854, 8
        %s1856 = scalar_lea.vmem %s12, %s1855
      $region80: #{model_forward.5} parent=75 // pred_fallthru
        _
    $region76: #{model_forward.5} parent=5 // pred_fallthru
      _
  $region6: #{model_forward.5} parent=0 // loop_footer
    %s22 = sadd.s32 1, %s18
  $region7: #{model_forward.5} parent=0 // loop_footer_branch
    %17 = sbr.rel target = $region3
  $region8: #{model_forward.5} parent=0 // loop_exit
    _

</llo_original>
